<compile_context>
chip_gen: v6e
topology: v6e:2x2x1
jax: 0.10.0
libtpu: 0.0.40
codegen_flags: <defaults>
</compile_context>

<pallas_src>
import jax
import jax.numpy as jnp
from jax.experimental import pallas as pl
from jax.experimental.pallas import tpu as pltpu


# ----------------------------- wrapper + kernel ------------------------------

def residual_block(x_nchw, params):
    """x_nchw: (N, Cin, H, W) float32. Returns (N, Cout, H, W) float32."""
    N, Cin, H, W = x_nchw.shape
    HW = H * W
    Cmid = params["w1t"].shape[0]
    Cout = params["w3t"].shape[0]
    assert Cin == Cout, "shortcut path requires in_filters == out_filters"

    # channels-first flattened layout: (N, C, H*W) -- reshape only, no transpose
    x = x_nchw.reshape(N, Cin, HW).astype(jnp.float32)
    p1 = params["p1"]   # (Cmid, Cin + 1 + 9 + 1) packed: w1t | b1 | wd | bd
    p3 = params["p3"]   # (Cout, Cmid + 1)        packed: w3t | b3

    highest = jax.lax.Precision.HIGHEST

    def kernel(x_ref, p1_ref, p3_ref, o_ref):
        # --- unpack the packed parameter slabs (static lane slices, 1 vreg col)
        p1v = p1_ref[...]
        w1 = p1v[:, :Cin]                      # (Cmid, Cin)
        b1 = p1v[:, Cin:Cin + 1]               # (Cmid, 1)
        wd = p1v[:, Cin + 1:Cin + 10]          # (Cmid, 9) taps, k=(dh+1)*3+(dw+1)
        bd = p1v[:, Cin + 10:Cin + 11]         # (Cmid, 1)
        p3v = p3_ref[...]
        w3 = p3v[:, :Cmid]                     # (Cout, Cmid)
        b3 = p3v[:, Cmid:Cmid + 1]             # (Cout, 1)

        # --- boundary masks: generated once on a 1-sublane strip, broadcast at use
        lane = jax.lax.broadcasted_iota(jnp.int32, (1, HW), 1)
        if W & (W - 1) == 0:
            col = lane & (W - 1)
        else:
            col = lane % W  # TODO(synk): verify i32 remainder lowering for non-pow2 W
        m_up = lane >= W                # (h-1) in range
        m_down = lane < (H - 1) * W     # (h+1) in range
        m_left = col >= 1               # (w-1) in range
        m_right = col < (W - 1)         # (w+1) in range

        # --- single grid step: static unroll over the (tiny) batch ----------
        for n in range(N):
            xb = x_ref[n]                                        # (Cin, HW)

            # expand 1x1 conv (+ folded BN) + relu : MXU, lane-dense
            h1 = jnp.dot(w1, xb, preferred_element_type=jnp.float32,
                         precision=highest)
            h1 = jnp.maximum(h1 + b1, 0.0)                       # (Cmid, HW)

            # depthwise 3x3, stride 1, pad 1 (+ folded BN) + relu.
            # Separable-shift form: 2 column rolls (+-1), per-row weighted sums
            # (9 MACs), then 2 row rolls (+-W); zero padding via masked selects.
            c_l = jnp.where(m_left, pltpu.roll(h1, shift=1, axis=1), 0.0)        # in[., w-1]
            c_r = jnp.where(m_right, pltpu.roll(h1, shift=HW - 1, axis=1), 0.0)  # in[., w+1]
            q = [c_l * wd[:, 3 * r:3 * r + 1]
                 + h1 * wd[:, 3 * r + 1:3 * r + 2]
                 + c_r * wd[:, 3 * r + 2:3 * r + 3]
                 for r in range(3)]                              # r = dh + 1
            acc = q[1]
            acc = acc + jnp.where(m_up, pltpu.roll(q[0], shift=W, axis=1), 0.0)
            acc = acc + jnp.where(m_down, pltpu.roll(q[2], shift=HW - W, axis=1), 0.0)
            h2 = jnp.maximum(acc + bd, 0.0)                      # (Cmid, HW)

            # linear 1x1 conv (+ folded BN), no activation : MXU
            h3 = jnp.dot(w3, h2, preferred_element_type=jnp.float32,
                         precision=highest) + b3                 # (Cout, HW)

            # residual shortcut
            o_ref[n] = (h3 + xb).astype(o_ref.dtype)

    # No grid: whole problem (~35 KiB of VMEM) fits in one invocation, which
    # removes per-step overhead on single-TC v5e/v6e; on v7x the 2-TC split of
    # this tiny workload would be marginal at best.
    out = pl.pallas_call(
        kernel,
        out_shape=jax.ShapeDtypeStruct((N, Cout, HW), jnp.float32),
        in_specs=[pl.BlockSpec(memory_space=pltpu.MemorySpace.VMEM)] * 3,
        out_specs=pl.BlockSpec(memory_space=pltpu.MemorySpace.VMEM),
    )(x, p1, p3)

    return out.reshape(N, Cout, H, W)


# --------------------- deterministic parameter construction ------------------

def make_params(key, cin, cmid, cout, ks=3, eps=1e-5):
    """Builds conv weights + BN params, folds BN (inference), and packs them.

    Layouts are channels-first / matmul-ready:
      w1t: (cmid, cin)   so  h1 = w1t @ x          (x is (cin, H*W))
      wd : (cmid, ks*ks) tap index k = (dh+1)*ks + (dw+1)
      w3t: (cout, cmid)  so  h3 = w3t @ h2
      biases: (c, 1)  -> broadcast along the lane (spatial) axis
    Packed slabs for the kernel:
      p1 = [w1t | b1 | wd | bd]  -> (cmid, cin + 1 + ks*ks + 1)
      p3 = [w3t | b3]            -> (cout, cmid + 1)
    """
    k = jax.random.split(key, 6)

    def bn_fold(kk, c):
        k1, k2, k3, k4 = jax.random.split(kk, 4)
        gamma = jax.random.uniform(k1, (c,), minval=0.5, maxval=1.5)
        beta = jax.random.normal(k2, (c,)) * 0.1
        mean = jax.random.normal(k3, (c,)) * 0.1
        var = jax.random.uniform(k4, (c,), minval=0.5, maxval=1.5)
        scale = gamma / jnp.sqrt(var + eps)
        bias = beta - mean * scale
        return scale, bias

    # expand 1x1 conv: torch weight (cmid, cin, 1, 1) -> (cmid, cin)
    w1t = jax.random.normal(k[0], (cmid, cin)) * 0.1
    s1, b1 = bn_fold(k[1], cmid)
    w1t = w1t * s1[:, None]

    # depthwise conv: torch weight (cmid, 1, ks, ks) -> (cmid, ks*ks)
    wd = jax.random.normal(k[2], (cmid, ks * ks)) * 0.1
    sd, bd = bn_fold(k[3], cmid)
    wd = wd * sd[:, None]

    # linear 1x1 conv: torch weight (cout, cmid, 1, 1) -> (cout, cmid)
    w3t = jax.random.normal(k[4], (cout, cmid)) * 0.1
    s3, b3 = bn_fold(k[5], cout)
    w3t = w3t * s3[:, None]

    w1t = w1t.astype(jnp.float32)
    b1 = b1.reshape(cmid, 1).astype(jnp.float32)
    wd = wd.astype(jnp.float32)
    bd = bd.reshape(cmid, 1).astype(jnp.float32)
    w3t = w3t.astype(jnp.float32)
    b3 = b3.reshape(cout, 1).astype(jnp.float32)

    p1 = jnp.concatenate([w1t, b1, wd, bd], axis=1)   # (cmid, cin + 11)
    p3 = jnp.concatenate([w3t, b3], axis=1)           # (cout, cmid + 1)

    return dict(w1t=w1t, b1=b1, wd=wd, bd=bd, w3t=w3t, b3=b3, p1=p1, p3=p3)


# --------------------------- pure-JAX reference -------------------------------

def residual_block_ref(x_nchw, params):
    x = x_nchw.astype(jnp.float32)                               # (N, Cin, H, W)
    N, Cin, H, W = x.shape
    Cmid = params["wd"].shape[0]
    highest = jax.lax.Precision.HIGHEST

    h = jnp.maximum(jnp.einsum("mc,nchw->nmhw", params["w1t"], x, precision=highest)
                    + params["b1"][:, 0][None, :, None, None], 0.0)

    hp = jnp.pad(h, ((0, 0), (0, 0), (1, 1), (1, 1)))
    wd3 = params["wd"].reshape(Cmid, 3, 3)
    acc = jnp.zeros_like(h)
    for i in range(3):
        for j in range(3):
            acc = acc + hp[:, :, i:i + H, j:j + W] * wd3[:, i, j][None, :, None, None]
    h = jnp.maximum(acc + params["bd"][:, 0][None, :, None, None], 0.0)

    out = (jnp.einsum("om,nmhw->nohw", params["w3t"], h, precision=highest)
           + params["b3"][:, 0][None, :, None, None])
    return out + x


# ----------------------------------- main -------------------------------------

if __name__ == "__main__":
    # ResidualBlock(in_filters=8, middle_filters=32, out_filters=8,
    #               stride=1, filter_size=3, act="relu", use_se=False)
    N, Cin, Cmid, Cout, H, W = 2, 8, 32, 8, 16, 16

    key = jax.random.PRNGKey(0)
    kx, kp = jax.random.split(key)
    x = jax.random.normal(kx, (N, Cin, H, W), dtype=jnp.float32)
    params = make_params(kp, Cin, Cmid, Cout)

    out = jax.block_until_ready(residual_block(x, params))
    ref = jax.block_until_ready(residual_block_ref(x, params))

    assert out.shape == (N, Cout, H, W), out.shape
    assert jnp.allclose(out, ref, atol=1e-4, rtol=1e-4), (
        float(jnp.max(jnp.abs(out - ref))))
    print("KERNEL_OK")
</pallas_src>

<mosaic_0001>
module attributes {stable_mosaic.version = 11 : i64} {
  func.func @kernel(%arg0: memref<2x8x256xf32, #tpu.memory_space<vmem>>, %arg1: memref<32x19xf32, #tpu.memory_space<vmem>>, %arg2: memref<8x33xf32, #tpu.memory_space<vmem>>, %arg3: memref<2x8x256xf32, #tpu.memory_space<vmem>>) attributes {dimension_semantics = [], scalar_prefetch = 0 : i64, scratch_operands = 0 : i64, tpu.core_type = #tpu.core_type<tc>} {
    %c0 = arith.constant 0 : index
    %c0_0 = arith.constant 0 : index
    %0 = vector.load %arg1[%c0, %c0_0] : memref<32x19xf32, #tpu.memory_space<vmem>>, vector<32x19xf32>
    %1 = vector.extract_strided_slice %0 {offsets = [0, 0], sizes = [32, 8], strides = [1, 1]} : vector<32x19xf32> to vector<32x8xf32>
    %2 = vector.extract_strided_slice %0 {offsets = [0, 8], sizes = [32, 1], strides = [1, 1]} : vector<32x19xf32> to vector<32x1xf32>
    %3 = vector.extract_strided_slice %0 {offsets = [0, 9], sizes = [32, 9], strides = [1, 1]} : vector<32x19xf32> to vector<32x9xf32>
    %4 = vector.extract_strided_slice %0 {offsets = [0, 18], sizes = [32, 1], strides = [1, 1]} : vector<32x19xf32> to vector<32x1xf32>
    %c0_1 = arith.constant 0 : index
    %c0_2 = arith.constant 0 : index
    %5 = vector.load %arg2[%c0_1, %c0_2] : memref<8x33xf32, #tpu.memory_space<vmem>>, vector<8x33xf32>
    %6 = vector.extract_strided_slice %5 {offsets = [0, 0], sizes = [8, 32], strides = [1, 1]} : vector<8x33xf32> to vector<8x32xf32>
    %7 = vector.extract_strided_slice %5 {offsets = [0, 32], sizes = [8, 1], strides = [1, 1]} : vector<8x33xf32> to vector<8x1xf32>
    %8 = tpu.iota {dimensions = array<i32: 1>} : vector<1x256xi32>
    %c15_i32 = arith.constant 15 : i32
    %9 = vector.broadcast %c15_i32 : i32 to vector<1x256xi32>
    %10 = arith.andi %8, %9 : vector<1x256xi32>
    %c16_i32 = arith.constant 16 : i32
    %11 = vector.broadcast %c16_i32 : i32 to vector<1x256xi32>
    %12 = arith.cmpi sge, %8, %11 : vector<1x256xi32>
    %c240_i32 = arith.constant 240 : i32
    %13 = vector.broadcast %c240_i32 : i32 to vector<1x256xi32>
    %14 = arith.cmpi slt, %8, %13 : vector<1x256xi32>
    %c1_i32 = arith.constant 1 : i32
    %15 = vector.broadcast %c1_i32 : i32 to vector<1x256xi32>
    %16 = arith.cmpi sge, %10, %15 : vector<1x256xi32>
    %c15_i32_3 = arith.constant 15 : i32
    %17 = vector.broadcast %c15_i32_3 : i32 to vector<1x256xi32>
    %18 = arith.cmpi slt, %10, %17 : vector<1x256xi32>
    %c0_4 = arith.constant 0 : index
    %c0_5 = arith.constant 0 : index
    %c0_6 = arith.constant 0 : index
    %19 = vector.load %arg0[%c0_4, %c0_5, %c0_6] : memref<2x8x256xf32, #tpu.memory_space<vmem>>, vector<1x8x256xf32>
    %20 = vector.shape_cast %19 : vector<1x8x256xf32> to vector<8x256xf32>
    %cst = arith.constant dense<0.000000e+00> : vector<32x256xf32>
    %21 = tpu.matmul %1, %20, %cst {dimension_numbers = #tpu.dot_dimension_numbers<[1], [0], [0], [1], [0, 0, 1, 1], [], []>, precision = #tpu.contract_precision<fp32>} : vector<32x8xf32>, vector<8x256xf32>, vector<32x256xf32> -> vector<32x256xf32>
    %22 = vector.broadcast %2 : vector<32x1xf32> to vector<32x256xf32>
    %23 = arith.addf %21, %22 : vector<32x256xf32>
    %cst_7 = arith.constant 0.000000e+00 : f32
    %24 = vector.broadcast %cst_7 : f32 to vector<32x256xf32>
    %25 = arith.maximumf %23, %24 : vector<32x256xf32>
    %c1_i32_8 = arith.constant 1 : i32
    %26 = tpu.dynamic_rotate %25 by %c1_i32_8 dim 1 : vector<32x256xf32>, i32 -> vector<32x256xf32>
    %cst_9 = arith.constant 0.000000e+00 : f32
    %27 = vector.shape_cast %16 : vector<1x256xi1> to vector<1x256xi1>
    %28 = vector.broadcast %27 : vector<1x256xi1> to vector<32x256xi1>
    %29 = vector.broadcast %cst_9 : f32 to vector<32x256xf32>
    %30 = arith.select %28, %26, %29 : vector<32x256xi1>, vector<32x256xf32>
    %c255_i32 = arith.constant 255 : i32
    %31 = tpu.dynamic_rotate %25 by %c255_i32 dim 1 : vector<32x256xf32>, i32 -> vector<32x256xf32>
    %cst_10 = arith.constant 0.000000e+00 : f32
    %32 = vector.shape_cast %18 : vector<1x256xi1> to vector<1x256xi1>
    %33 = vector.broadcast %32 : vector<1x256xi1> to vector<32x256xi1>
    %34 = vector.broadcast %cst_10 : f32 to vector<32x256xf32>
    %35 = arith.select %33, %31, %34 : vector<32x256xi1>, vector<32x256xf32>
    %36 = vector.extract_strided_slice %3 {offsets = [0, 0], sizes = [32, 1], strides = [1, 1]} : vector<32x9xf32> to vector<32x1xf32>
    %37 = vector.broadcast %36 : vector<32x1xf32> to vector<32x256xf32>
    %38 = arith.mulf %30, %37 : vector<32x256xf32>
    %39 = vector.extract_strided_slice %3 {offsets = [0, 1], sizes = [32, 1], strides = [1, 1]} : vector<32x9xf32> to vector<32x1xf32>
    %40 = vector.broadcast %39 : vector<32x1xf32> to vector<32x256xf32>
    %41 = arith.mulf %25, %40 : vector<32x256xf32>
    %42 = arith.addf %38, %41 : vector<32x256xf32>
    %43 = vector.extract_strided_slice %3 {offsets = [0, 2], sizes = [32, 1], strides = [1, 1]} : vector<32x9xf32> to vector<32x1xf32>
    %44 = vector.broadcast %43 : vector<32x1xf32> to vector<32x256xf32>
    %45 = arith.mulf %35, %44 : vector<32x256xf32>
    %46 = arith.addf %42, %45 : vector<32x256xf32>
    %47 = vector.extract_strided_slice %3 {offsets = [0, 3], sizes = [32, 1], strides = [1, 1]} : vector<32x9xf32> to vector<32x1xf32>
    %48 = vector.broadcast %47 : vector<32x1xf32> to vector<32x256xf32>
    %49 = arith.mulf %30, %48 : vector<32x256xf32>
    %50 = vector.extract_strided_slice %3 {offsets = [0, 4], sizes = [32, 1], strides = [1, 1]} : vector<32x9xf32> to vector<32x1xf32>
    %51 = vector.broadcast %50 : vector<32x1xf32> to vector<32x256xf32>
    %52 = arith.mulf %25, %51 : vector<32x256xf32>
    %53 = arith.addf %49, %52 : vector<32x256xf32>
    %54 = vector.extract_strided_slice %3 {offsets = [0, 5], sizes = [32, 1], strides = [1, 1]} : vector<32x9xf32> to vector<32x1xf32>
    %55 = vector.broadcast %54 : vector<32x1xf32> to vector<32x256xf32>
    %56 = arith.mulf %35, %55 : vector<32x256xf32>
    %57 = arith.addf %53, %56 : vector<32x256xf32>
    %58 = vector.extract_strided_slice %3 {offsets = [0, 6], sizes = [32, 1], strides = [1, 1]} : vector<32x9xf32> to vector<32x1xf32>
    %59 = vector.broadcast %58 : vector<32x1xf32> to vector<32x256xf32>
    %60 = arith.mulf %30, %59 : vector<32x256xf32>
    %61 = vector.extract_strided_slice %3 {offsets = [0, 7], sizes = [32, 1], strides = [1, 1]} : vector<32x9xf32> to vector<32x1xf32>
    %62 = vector.broadcast %61 : vector<32x1xf32> to vector<32x256xf32>
    %63 = arith.mulf %25, %62 : vector<32x256xf32>
    %64 = arith.addf %60, %63 : vector<32x256xf32>
    %65 = vector.extract_strided_slice %3 {offsets = [0, 8], sizes = [32, 1], strides = [1, 1]} : vector<32x9xf32> to vector<32x1xf32>
    %66 = vector.broadcast %65 : vector<32x1xf32> to vector<32x256xf32>
    %67 = arith.mulf %35, %66 : vector<32x256xf32>
    %68 = arith.addf %64, %67 : vector<32x256xf32>
    %c16_i32_11 = arith.constant 16 : i32
    %69 = tpu.dynamic_rotate %46 by %c16_i32_11 dim 1 : vector<32x256xf32>, i32 -> vector<32x256xf32>
    %cst_12 = arith.constant 0.000000e+00 : f32
    %70 = vector.shape_cast %12 : vector<1x256xi1> to vector<1x256xi1>
    %71 = vector.broadcast %70 : vector<1x256xi1> to vector<32x256xi1>
    %72 = vector.broadcast %cst_12 : f32 to vector<32x256xf32>
    %73 = arith.select %71, %69, %72 : vector<32x256xi1>, vector<32x256xf32>
    %74 = arith.addf %57, %73 : vector<32x256xf32>
    %c240_i32_13 = arith.constant 240 : i32
    %75 = tpu.dynamic_rotate %68 by %c240_i32_13 dim 1 : vector<32x256xf32>, i32 -> vector<32x256xf32>
    %cst_14 = arith.constant 0.000000e+00 : f32
    %76 = vector.shape_cast %14 : vector<1x256xi1> to vector<1x256xi1>
    %77 = vector.broadcast %76 : vector<1x256xi1> to vector<32x256xi1>
    %78 = vector.broadcast %cst_14 : f32 to vector<32x256xf32>
    %79 = arith.select %77, %75, %78 : vector<32x256xi1>, vector<32x256xf32>
    %80 = arith.addf %74, %79 : vector<32x256xf32>
    %81 = vector.broadcast %4 : vector<32x1xf32> to vector<32x256xf32>
    %82 = arith.addf %80, %81 : vector<32x256xf32>
    %cst_15 = arith.constant 0.000000e+00 : f32
    %83 = vector.broadcast %cst_15 : f32 to vector<32x256xf32>
    %84 = arith.maximumf %82, %83 : vector<32x256xf32>
    %cst_16 = arith.constant dense<0.000000e+00> : vector<8x256xf32>
    %85 = tpu.matmul %6, %84, %cst_16 {dimension_numbers = #tpu.dot_dimension_numbers<[1], [0], [0], [1], [0, 0, 1, 1], [], []>, precision = #tpu.contract_precision<fp32>} : vector<8x32xf32>, vector<32x256xf32>, vector<8x256xf32> -> vector<8x256xf32>
    %86 = vector.broadcast %7 : vector<8x1xf32> to vector<8x256xf32>
    %87 = arith.addf %85, %86 : vector<8x256xf32>
    %88 = arith.addf %87, %20 : vector<8x256xf32>
    %c0_17 = arith.constant 0 : index
    %c0_18 = arith.constant 0 : index
    %c0_19 = arith.constant 0 : index
    %89 = vector.load %arg3[%c0_17, %c0_18, %c0_19] : memref<2x8x256xf32, #tpu.memory_space<vmem>>, vector<1x8x256xf32>
    %90 = vector.shape_cast %89 : vector<1x8x256xf32> to vector<8x256xf32>
    %91 = vector.shape_cast %88 : vector<8x256xf32> to vector<1x8x256xf32>
    tpu.vector_store %arg3[%c0_17, %c0_18, %c0_19], %91 {strides = array<i32>} : memref<2x8x256xf32, #tpu.memory_space<vmem>>, vector<1x8x256xf32>,
    %c1 = arith.constant 1 : index
    %c0_20 = arith.constant 0 : index
    %c0_21 = arith.constant 0 : index
    %92 = vector.load %arg0[%c1, %c0_20, %c0_21] : memref<2x8x256xf32, #tpu.memory_space<vmem>>, vector<1x8x256xf32>
    %93 = vector.shape_cast %92 : vector<1x8x256xf32> to vector<8x256xf32>
    %cst_22 = arith.constant dense<0.000000e+00> : vector<32x256xf32>
    %94 = tpu.matmul %1, %93, %cst_22 {dimension_numbers = #tpu.dot_dimension_numbers<[1], [0], [0], [1], [0, 0, 1, 1], [], []>, precision = #tpu.contract_precision<fp32>} : vector<32x8xf32>, vector<8x256xf32>, vector<32x256xf32> -> vector<32x256xf32>
    %95 = vector.broadcast %2 : vector<32x1xf32> to vector<32x256xf32>
    %96 = arith.addf %94, %95 : vector<32x256xf32>
    %cst_23 = arith.constant 0.000000e+00 : f32
    %97 = vector.broadcast %cst_23 : f32 to vector<32x256xf32>
    %98 = arith.maximumf %96, %97 : vector<32x256xf32>
    %c1_i32_24 = arith.constant 1 : i32
    %99 = tpu.dynamic_rotate %98 by %c1_i32_24 dim 1 : vector<32x256xf32>, i32 -> vector<32x256xf32>
    %cst_25 = arith.constant 0.000000e+00 : f32
    %100 = vector.shape_cast %16 : vector<1x256xi1> to vector<1x256xi1>
    %101 = vector.broadcast %100 : vector<1x256xi1> to vector<32x256xi1>
    %102 = vector.broadcast %cst_25 : f32 to vector<32x256xf32>
    %103 = arith.select %101, %99, %102 : vector<32x256xi1>, vector<32x256xf32>
    %c255_i32_26 = arith.constant 255 : i32
    %104 = tpu.dynamic_rotate %98 by %c255_i32_26 dim 1 : vector<32x256xf32>, i32 -> vector<32x256xf32>
    %cst_27 = arith.constant 0.000000e+00 : f32
    %105 = vector.shape_cast %18 : vector<1x256xi1> to vector<1x256xi1>
    %106 = vector.broadcast %105 : vector<1x256xi1> to vector<32x256xi1>
    %107 = vector.broadcast %cst_27 : f32 to vector<32x256xf32>
    %108 = arith.select %106, %104, %107 : vector<32x256xi1>, vector<32x256xf32>
    %109 = vector.extract_strided_slice %3 {offsets = [0, 0], sizes = [32, 1], strides = [1, 1]} : vector<32x9xf32> to vector<32x1xf32>
    %110 = vector.broadcast %109 : vector<32x1xf32> to vector<32x256xf32>
    %111 = arith.mulf %103, %110 : vector<32x256xf32>
    %112 = vector.extract_strided_slice %3 {offsets = [0, 1], sizes = [32, 1], strides = [1, 1]} : vector<32x9xf32> to vector<32x1xf32>
    %113 = vector.broadcast %112 : vector<32x1xf32> to vector<32x256xf32>
    %114 = arith.mulf %98, %113 : vector<32x256xf32>
    %115 = arith.addf %111, %114 : vector<32x256xf32>
    %116 = vector.extract_strided_slice %3 {offsets = [0, 2], sizes = [32, 1], strides = [1, 1]} : vector<32x9xf32> to vector<32x1xf32>
    %117 = vector.broadcast %116 : vector<32x1xf32> to vector<32x256xf32>
    %118 = arith.mulf %108, %117 : vector<32x256xf32>
    %119 = arith.addf %115, %118 : vector<32x256xf32>
    %120 = vector.extract_strided_slice %3 {offsets = [0, 3], sizes = [32, 1], strides = [1, 1]} : vector<32x9xf32> to vector<32x1xf32>
    %121 = vector.broadcast %120 : vector<32x1xf32> to vector<32x256xf32>
    %122 = arith.mulf %103, %121 : vector<32x256xf32>
    %123 = vector.extract_strided_slice %3 {offsets = [0, 4], sizes = [32, 1], strides = [1, 1]} : vector<32x9xf32> to vector<32x1xf32>
    %124 = vector.broadcast %123 : vector<32x1xf32> to vector<32x256xf32>
    %125 = arith.mulf %98, %124 : vector<32x256xf32>
    %126 = arith.addf %122, %125 : vector<32x256xf32>
    %127 = vector.extract_strided_slice %3 {offsets = [0, 5], sizes = [32, 1], strides = [1, 1]} : vector<32x9xf32> to vector<32x1xf32>
    %128 = vector.broadcast %127 : vector<32x1xf32> to vector<32x256xf32>
    %129 = arith.mulf %108, %128 : vector<32x256xf32>
    %130 = arith.addf %126, %129 : vector<32x256xf32>
    %131 = vector.extract_strided_slice %3 {offsets = [0, 6], sizes = [32, 1], strides = [1, 1]} : vector<32x9xf32> to vector<32x1xf32>
    %132 = vector.broadcast %131 : vector<32x1xf32> to vector<32x256xf32>
    %133 = arith.mulf %103, %132 : vector<32x256xf32>
    %134 = vector.extract_strided_slice %3 {offsets = [0, 7], sizes = [32, 1], strides = [1, 1]} : vector<32x9xf32> to vector<32x1xf32>
    %135 = vector.broadcast %134 : vector<32x1xf32> to vector<32x256xf32>
    %136 = arith.mulf %98, %135 : vector<32x256xf32>
    %137 = arith.addf %133, %136 : vector<32x256xf32>
    %138 = vector.extract_strided_slice %3 {offsets = [0, 8], sizes = [32, 1], strides = [1, 1]} : vector<32x9xf32> to vector<32x1xf32>
    %139 = vector.broadcast %138 : vector<32x1xf32> to vector<32x256xf32>
    %140 = arith.mulf %108, %139 : vector<32x256xf32>
    %141 = arith.addf %137, %140 : vector<32x256xf32>
    %c16_i32_28 = arith.constant 16 : i32
    %142 = tpu.dynamic_rotate %119 by %c16_i32_28 dim 1 : vector<32x256xf32>, i32 -> vector<32x256xf32>
    %cst_29 = arith.constant 0.000000e+00 : f32
    %143 = vector.shape_cast %12 : vector<1x256xi1> to vector<1x256xi1>
    %144 = vector.broadcast %143 : vector<1x256xi1> to vector<32x256xi1>
    %145 = vector.broadcast %cst_29 : f32 to vector<32x256xf32>
    %146 = arith.select %144, %142, %145 : vector<32x256xi1>, vector<32x256xf32>
    %147 = arith.addf %130, %146 : vector<32x256xf32>
    %c240_i32_30 = arith.constant 240 : i32
    %148 = tpu.dynamic_rotate %141 by %c240_i32_30 dim 1 : vector<32x256xf32>, i32 -> vector<32x256xf32>
    %cst_31 = arith.constant 0.000000e+00 : f32
    %149 = vector.shape_cast %14 : vector<1x256xi1> to vector<1x256xi1>
    %150 = vector.broadcast %149 : vector<1x256xi1> to vector<32x256xi1>
    %151 = vector.broadcast %cst_31 : f32 to vector<32x256xf32>
    %152 = arith.select %150, %148, %151 : vector<32x256xi1>, vector<32x256xf32>
    %153 = arith.addf %147, %152 : vector<32x256xf32>
    %154 = vector.broadcast %4 : vector<32x1xf32> to vector<32x256xf32>
    %155 = arith.addf %153, %154 : vector<32x256xf32>
    %cst_32 = arith.constant 0.000000e+00 : f32
    %156 = vector.broadcast %cst_32 : f32 to vector<32x256xf32>
    %157 = arith.maximumf %155, %156 : vector<32x256xf32>
    %cst_33 = arith.constant dense<0.000000e+00> : vector<8x256xf32>
    %158 = tpu.matmul %6, %157, %cst_33 {dimension_numbers = #tpu.dot_dimension_numbers<[1], [0], [0], [1], [0, 0, 1, 1], [], []>, precision = #tpu.contract_precision<fp32>} : vector<8x32xf32>, vector<32x256xf32>, vector<8x256xf32> -> vector<8x256xf32>
    %159 = vector.broadcast %7 : vector<8x1xf32> to vector<8x256xf32>
    %160 = arith.addf %158, %159 : vector<8x256xf32>
    %161 = arith.addf %160, %93 : vector<8x256xf32>
    %c1_34 = arith.constant 1 : index
    %c0_35 = arith.constant 0 : index
    %c0_36 = arith.constant 0 : index
    %162 = vector.load %arg3[%c1_34, %c0_35, %c0_36] : memref<2x8x256xf32, #tpu.memory_space<vmem>>, vector<1x8x256xf32>
    %163 = vector.shape_cast %162 : vector<1x8x256xf32> to vector<8x256xf32>
    %164 = vector.shape_cast %161 : vector<8x256xf32> to vector<1x8x256xf32>
    tpu.vector_store %arg3[%c1_34, %c0_35, %c0_36], %164 {strides = array<i32>} : memref<2x8x256xf32, #tpu.memory_space<vmem>>, vector<1x8x256xf32>,
    return
  }
}

</mosaic_0001>

<llo_original>
// kernel: tpu_custom_call.1
$region0: #{tpu_custom_call.1}
  #allocation0 [shape = 'u32[]', space=smem, size = 0x4, offset = 0x4, fixed_abs, tag = 'smem constant byte address 0x4 - core index']
  #allocation1 [shape = 'u32[144,128]{1,0:T(1,128)}', space=vmem, size = 0x12000, scoped, tag = 'internal scratch']
  %s0 = inlined_call_operand.vmem [shape: f32[2,8,256], index: 0, kind: input, shape index: {}]
  %s1 = inlined_call_operand.vmem [shape: f32[32,19], index: 1, kind: input, shape index: {}]
  %s2 = inlined_call_operand.vmem [shape: f32[8,33], index: 2, kind: input, shape index: {}]
  %s3 = inlined_call_operand.hbm [shape: f32[2,8,256], index: 3, kind: output, shape index: {}]
  %s4 = sld [smem:[#allocation0]]
  $region22: #{tpu_custom_call.1} parent=0
    _
  %s6 = ssub.s32 1, %s4
  %s7 = scalar_select 0, %s6, %s4
  $region1: #{tpu_custom_call.1} parent=0
    #allocation2 [shape = 'u8[16384]{0}', space=vmem, size = 0x4000, scoped, tag = 'output window, operand 0, single buffered']
    #allocation3 [shape = 's32[1]{0}', space=sflag, size = 0x4, scoped, tag = 'scoped memory for tpu_custom_call.1']
    %8 = vsyncpa [#allocation3], 0
    // Predicated region
    $region2: #{tpu_custom_call.1} parent=1 // pred_check
      _
    $region3: #{tpu_custom_call.1} parent=1 // pred_check_branch
      %10 = sbr.rel (0) target = $region5
    $region4: #{tpu_custom_call.1} parent=1 // pred_region
      _
    $region5: #{tpu_custom_call.1} parent=1 // pred_fallthru
      _
    // Predicated region
    $region6: #{tpu_custom_call.1} parent=1 // pred_check
      _
    $region7: #{tpu_custom_call.1} parent=1 // pred_check_branch
      %12 = sbr.rel (0) target = $region9
    $region8: #{tpu_custom_call.1} parent=1 // pred_region
      _
    $region9: #{tpu_custom_call.1} parent=1 // pred_fallthru
      _
    // Predicated region
    $region10: #{tpu_custom_call.1} parent=1 // pred_check
      _
    $region11: #{tpu_custom_call.1} parent=1 // pred_check_branch
      %14 = sbr.rel (0) target = $region13
    $region12: #{tpu_custom_call.1} parent=1 // pred_region
      _
    $region13: #{tpu_custom_call.1} parent=1 // pred_fallthru
      _
    %v15 = vld [vmem:[%s1] sm:$0xff]
    %v16 = vld [vmem:[%s1 + $0x8] sm:$0xff]
    %v17 = vld [vmem:[%s1 + $0x10] sm:$0xff]
    %v18 = vld [vmem:[%s1 + $0x18] sm:$0xff]
    %v19 = vld [vmem:[%s2] sm:$0xff]
    %v20 = vlaneseq
    %v21 = vand.u32 %v20, 127
    %v22 = vadd.s32 %v21, 128
    %v23 = vand.u32 %v21, 15
    %v24 = vand.u32 %v22, 15
    %vm25 = vcmp.ge.s32.totalorder %v21, 16
    %vm26 = vcmp.ge.s32.totalorder %v22, 16
    %vm27 = vcmp.lt.s32.totalorder %v21, 240
    %vm28 = vcmp.lt.s32.totalorder %v22, 240
    %vm29 = vcmp.ge.s32.totalorder %v23, 1
    %vm30 = vcmp.ge.s32.totalorder %v24, 1
    %vm31 = vcmp.lt.s32.totalorder %v23, 15
    %vm32 = vcmp.lt.s32.totalorder %v24, 15
    %v33 = vld [vmem:[%s0] sm:$0xff]
    %v34 = vld [vmem:[%s0 + $0x8] sm:$0xff]
    %36 = vset.pattern.permute.xlu0 8
    %37 = vperm.xlu0 %36, %v15
    %v38 = vpop.permute.xlu0 %37
    %41 = vset.pattern.permute.xlu0 8
    %42 = vperm.xlu0 %41, %v16
    %v43 = vpop.permute.xlu0 %42
    %46 = vset.pattern.permute.xlu0 8
    %47 = vperm.xlu0 %46, %v17
    %v48 = vpop.permute.xlu0 %47
    %51 = vset.pattern.permute.xlu0 8
    %52 = vperm.xlu0 %51, %v18
    %v53 = vpop.permute.xlu0 %52
    %vm55 = vcmask 64512
    %v56 = vsel %vm55, %v15, 0
    %v58 = vsel %vm55, %v16, 0
    %v60 = vsel %vm55, %v17, 0
    %v62 = vsel %vm55, %v18, 0
    %64 = vmatprep.subr.mxu0 0.0
    %65 = vmatpush1.msra.mxu0 0.0
    %66 = vmatprep.subr.mxu0 0.0
    %67 = vmatpush1.msra.mxu0 0.0
    %68 = vmatprep.subr.mxu0 0.0
    %69 = vmatpush1.msra.mxu0 0.0
    %70 = vmatprep.subr.mxu0 0.0
    %71 = vmatpush1.msra.mxu0 0.0
    %72 = vmatprep.subr.mxu0 0.0
    %73 = vmatpush1.msra.mxu0 0.0
    %74 = vmatprep.subr.mxu0 0.0
    %75 = vmatpush1.msra.mxu0 0.0
    %76 = vmatprep.subr.mxu0 0.0
    %77 = vmatpush1.msra.mxu0 0.0
    %78 = vmatprep.subr.mxu0 0.0
    %79 = vmatpush1.msra.mxu0 0.0
    %80 = vmatprep.subr.mxu0 0.0
    %81 = vmatpush1.msra.mxu0 0.0
    %82 = vmatprep.subr.mxu0 0.0
    %83 = vmatpush1.msra.mxu0 0.0
    %84 = vmatprep.subr.mxu0 0.0
    %85 = vmatpush1.msra.mxu0 0.0
    %86 = vmatprep.subr.mxu0 0.0
    %87 = vmatpush1.msra.mxu0 0.0
    %88 = vmatprep.subr.mxu0 0.0
    %89 = vmatpush1.msra.mxu0 0.0
    %90 = vmatprep.subr.mxu0 0.0
    %91 = vmatpush1.msra.mxu0 0.0
    %92 = vmatprep.subr.mxu0 0.0
    %93 = vmatpush1.msra.mxu0 0.0
    %v94 = vand.u32 %v34, 4294901760
    %95 = vmatprep.subr.mxu0 %v94
    %v96 = vand.u32 %v33, 4294901760
    %97 = vmatpush1.msra.mxu0 %v96
    %98 = vmatprep.subr.mxu0 0.0
    %99 = vmatpush2.msra.mxu0 0.0
    %100 = vmatprep.subr.mxu0 0.0
    %101 = vmatpush2.msra.mxu0 0.0
    %102 = vmatprep.subr.mxu0 0.0
    %103 = vmatpush2.msra.mxu0 0.0
    %104 = vmatprep.subr.mxu0 0.0
    %105 = vmatpush2.msra.mxu0 0.0
    %106 = vmatprep.subr.mxu0 0.0
    %107 = vmatpush2.msra.mxu0 0.0
    %108 = vmatprep.subr.mxu0 0.0
    %109 = vmatpush2.msra.mxu0 0.0
    %110 = vmatprep.subr.mxu0 0.0
    %111 = vmatpush2.msra.mxu0 0.0
    %112 = vmatprep.subr.mxu0 0.0
    %113 = vmatpush2.msra.mxu0 0.0
    %114 = vmatprep.subr.mxu0 0.0
    %115 = vmatpush2.msra.mxu0 0.0
    %116 = vmatprep.subr.mxu0 0.0
    %117 = vmatpush2.msra.mxu0 0.0
    %118 = vmatprep.subr.mxu0 0.0
    %119 = vmatpush2.msra.mxu0 0.0
    %120 = vmatprep.subr.mxu0 0.0
    %121 = vmatpush2.msra.mxu0 0.0
    %122 = vmatprep.subr.mxu0 0.0
    %123 = vmatpush2.msra.mxu0 0.0
    %124 = vmatprep.subr.mxu0 0.0
    %125 = vmatpush2.msra.mxu0 0.0
    %126 = vmatprep.subr.mxu0 0.0
    %127 = vmatpush2.msra.mxu0 0.0
    %128 = vmatprep.subr.mxu0 0.0
    %129 = vmatpush2.msra.mxu0 0.0
    %130 = vmatprep.mubr.f32.mxu0 0.0
    %v131 = vand.u32 %v56, 4294901760
    %v132 = vsub.f32 %v56, %v131
    %v133 = vand.u32 %v132, 4294901760
    %v134 = vsub.f32 %v132, %v133
    %v135 = vand.u32 %v134, 4294901760
    %136 = vmatmul.mubr.f32.gmra.mxu0 %v135
    %v137 = vpop.f32.mrf.mxu0
    %v138 = vadd.f32 %v38, %v137
    %v139 = vpop.f32.mrf.mxu0
    %v140 = vadd.f32 %v38, %v139
    %141 = vmatprep.mubr.f32.mxu0 0.0
    %v142 = vand.u32 %v58, 4294901760
    %v143 = vsub.f32 %v58, %v142
    %v144 = vand.u32 %v143, 4294901760
    %v145 = vsub.f32 %v143, %v144
    %v146 = vand.u32 %v145, 4294901760
    %147 = vmatmul.mubr.f32.gmra.mxu0 %v146
    %v148 = vpop.f32.mrf.mxu0
    %v149 = vadd.f32 %v43, %v148
    %v150 = vpop.f32.mrf.mxu0
    %v151 = vadd.f32 %v43, %v150
    %152 = vmatprep.mubr.f32.mxu0 0.0
    %v153 = vand.u32 %v60, 4294901760
    %v154 = vsub.f32 %v60, %v153
    %v155 = vand.u32 %v154, 4294901760
    %v156 = vsub.f32 %v154, %v155
    %v157 = vand.u32 %v156, 4294901760
    %158 = vmatmul.mubr.f32.gmra.mxu0 %v157
    %v159 = vpop.f32.mrf.mxu0
    %v160 = vadd.f32 %v48, %v159
    %v161 = vpop.f32.mrf.mxu0
    %v162 = vadd.f32 %v48, %v161
    %163 = vmatprep.mubr.f32.mxu0 0.0
    %v164 = vand.u32 %v62, 4294901760
    %v165 = vsub.f32 %v62, %v164
    %v166 = vand.u32 %v165, 4294901760
    %v167 = vsub.f32 %v165, %v166
    %v168 = vand.u32 %v167, 4294901760
    %169 = vmatmul.mubr.f32.gmra.mxu0 %v168
    %v170 = vpop.f32.mrf.mxu0
    %v171 = vadd.f32 %v53, %v170
    %v172 = vpop.f32.mrf.mxu0
    %v173 = vadd.f32 %v53, %v172
    %174 = vdwg.mxu0
    %175 = vmatprep.subr.mxu0 0.0
    %176 = vmatpush1.msra.mxu0 0.0
    %177 = vmatprep.subr.mxu0 0.0
    %178 = vmatpush1.msra.mxu0 0.0
    %179 = vmatprep.subr.mxu0 0.0
    %180 = vmatpush1.msra.mxu0 0.0
    %181 = vmatprep.subr.mxu0 0.0
    %182 = vmatpush1.msra.mxu0 0.0
    %183 = vmatprep.subr.mxu0 0.0
    %184 = vmatpush1.msra.mxu0 0.0
    %185 = vmatprep.subr.mxu0 0.0
    %186 = vmatpush1.msra.mxu0 0.0
    %187 = vmatprep.subr.mxu0 0.0
    %188 = vmatpush1.msra.mxu0 0.0
    %189 = vmatprep.subr.mxu0 0.0
    %190 = vmatpush1.msra.mxu0 0.0
    %191 = vmatprep.subr.mxu0 0.0
    %192 = vmatpush1.msra.mxu0 0.0
    %193 = vmatprep.subr.mxu0 0.0
    %194 = vmatpush1.msra.mxu0 0.0
    %195 = vmatprep.subr.mxu0 0.0
    %196 = vmatpush1.msra.mxu0 0.0
    %197 = vmatprep.subr.mxu0 0.0
    %198 = vmatpush1.msra.mxu0 0.0
    %199 = vmatprep.subr.mxu0 0.0
    %200 = vmatpush1.msra.mxu0 0.0
    %201 = vmatprep.subr.mxu0 0.0
    %202 = vmatpush1.msra.mxu0 0.0
    %203 = vmatprep.subr.mxu0 0.0
    %204 = vmatpush1.msra.mxu0 0.0
    %v205 = vand.u32 %v34, 4294901760
    %v206 = vsub.f32 %v34, %v205
    %v207 = vand.u32 %v206, 4294901760
    %v208 = vsub.f32 %v206, %v207
    %v209 = vand.u32 %v208, 4294901760
    %210 = vmatprep.subr.mxu0 %v209
    %v211 = vand.u32 %v33, 4294901760
    %v212 = vsub.f32 %v33, %v211
    %v213 = vand.u32 %v212, 4294901760
    %v214 = vsub.f32 %v212, %v213
    %v215 = vand.u32 %v214, 4294901760
    %216 = vmatpush1.msra.mxu0 %v215
    %217 = vmatprep.subr.mxu0 0.0
    %218 = vmatpush2.msra.mxu0 0.0
    %219 = vmatprep.subr.mxu0 0.0
    %220 = vmatpush2.msra.mxu0 0.0
    %221 = vmatprep.subr.mxu0 0.0
    %222 = vmatpush2.msra.mxu0 0.0
    %223 = vmatprep.subr.mxu0 0.0
    %224 = vmatpush2.msra.mxu0 0.0
    %225 = vmatprep.subr.mxu0 0.0
    %226 = vmatpush2.msra.mxu0 0.0
    %227 = vmatprep.subr.mxu0 0.0
    %228 = vmatpush2.msra.mxu0 0.0
    %229 = vmatprep.subr.mxu0 0.0
    %230 = vmatpush2.msra.mxu0 0.0
    %231 = vmatprep.subr.mxu0 0.0
    %232 = vmatpush2.msra.mxu0 0.0
    %233 = vmatprep.subr.mxu0 0.0
    %234 = vmatpush2.msra.mxu0 0.0
    %235 = vmatprep.subr.mxu0 0.0
    %236 = vmatpush2.msra.mxu0 0.0
    %237 = vmatprep.subr.mxu0 0.0
    %238 = vmatpush2.msra.mxu0 0.0
    %239 = vmatprep.subr.mxu0 0.0
    %240 = vmatpush2.msra.mxu0 0.0
    %241 = vmatprep.subr.mxu0 0.0
    %242 = vmatpush2.msra.mxu0 0.0
    %243 = vmatprep.subr.mxu0 0.0
    %244 = vmatpush2.msra.mxu0 0.0
    %245 = vmatprep.subr.mxu0 0.0
    %246 = vmatpush2.msra.mxu0 0.0
    %247 = vmatprep.subr.mxu0 0.0
    %248 = vmatpush2.msra.mxu0 0.0
    %249 = vmatprep.mubr.f32.mxu0 0.0
    %v250 = vand.u32 %v56, 4294901760
    %251 = vmatmul.mubr.f32.gmra.mxu0 %v250
    %v252 = vpop.f32.mrf.mxu0
    %v253 = vadd.f32 %v138, %v252
    %v254 = vpop.f32.mrf.mxu0
    %v255 = vadd.f32 %v140, %v254
    %256 = vmatprep.mubr.f32.mxu0 0.0
    %v257 = vand.u32 %v58, 4294901760
    %258 = vmatmul.mubr.f32.gmra.mxu0 %v257
    %v259 = vpop.f32.mrf.mxu0
    %v260 = vadd.f32 %v149, %v259
    %v261 = vpop.f32.mrf.mxu0
    %v262 = vadd.f32 %v151, %v261
    %263 = vmatprep.mubr.f32.mxu0 0.0
    %v264 = vand.u32 %v60, 4294901760
    %265 = vmatmul.mubr.f32.gmra.mxu0 %v264
    %v266 = vpop.f32.mrf.mxu0
    %v267 = vadd.f32 %v160, %v266
    %v268 = vpop.f32.mrf.mxu0
    %v269 = vadd.f32 %v162, %v268
    %270 = vmatprep.mubr.f32.mxu0 0.0
    %v271 = vand.u32 %v62, 4294901760
    %272 = vmatmul.mubr.f32.gmra.mxu0 %v271
    %v273 = vpop.f32.mrf.mxu0
    %v274 = vadd.f32 %v171, %v273
    %v275 = vpop.f32.mrf.mxu0
    %v276 = vadd.f32 %v173, %v275
    %277 = vdwg.mxu0
    %278 = vmatprep.subr.mxu0 0.0
    %279 = vmatpush1.msra.mxu0 0.0
    %280 = vmatprep.subr.mxu0 0.0
    %281 = vmatpush1.msra.mxu0 0.0
    %282 = vmatprep.subr.mxu0 0.0
    %283 = vmatpush1.msra.mxu0 0.0
    %284 = vmatprep.subr.mxu0 0.0
    %285 = vmatpush1.msra.mxu0 0.0
    %286 = vmatprep.subr.mxu0 0.0
    %287 = vmatpush1.msra.mxu0 0.0
    %288 = vmatprep.subr.mxu0 0.0
    %289 = vmatpush1.msra.mxu0 0.0
    %290 = vmatprep.subr.mxu0 0.0
    %291 = vmatpush1.msra.mxu0 0.0
    %292 = vmatprep.subr.mxu0 0.0
    %293 = vmatpush1.msra.mxu0 0.0
    %294 = vmatprep.subr.mxu0 0.0
    %295 = vmatpush1.msra.mxu0 0.0
    %296 = vmatprep.subr.mxu0 0.0
    %297 = vmatpush1.msra.mxu0 0.0
    %298 = vmatprep.subr.mxu0 0.0
    %299 = vmatpush1.msra.mxu0 0.0
    %300 = vmatprep.subr.mxu0 0.0
    %301 = vmatpush1.msra.mxu0 0.0
    %302 = vmatprep.subr.mxu0 0.0
    %303 = vmatpush1.msra.mxu0 0.0
    %304 = vmatprep.subr.mxu0 0.0
    %305 = vmatpush1.msra.mxu0 0.0
    %306 = vmatprep.subr.mxu0 0.0
    %307 = vmatpush1.msra.mxu0 0.0
    %v308 = vand.u32 %v34, 4294901760
    %v309 = vsub.f32 %v34, %v308
    %310 = vmatprep.subr.mxu0 %v309
    %v311 = vand.u32 %v33, 4294901760
    %v312 = vsub.f32 %v33, %v311
    %313 = vmatpush1.msra.mxu0 %v312
    %314 = vmatprep.subr.mxu0 0.0
    %315 = vmatpush2.msra.mxu0 0.0
    %316 = vmatprep.subr.mxu0 0.0
    %317 = vmatpush2.msra.mxu0 0.0
    %318 = vmatprep.subr.mxu0 0.0
    %319 = vmatpush2.msra.mxu0 0.0
    %320 = vmatprep.subr.mxu0 0.0
    %321 = vmatpush2.msra.mxu0 0.0
    %322 = vmatprep.subr.mxu0 0.0
    %323 = vmatpush2.msra.mxu0 0.0
    %324 = vmatprep.subr.mxu0 0.0
    %325 = vmatpush2.msra.mxu0 0.0
    %326 = vmatprep.subr.mxu0 0.0
    %327 = vmatpush2.msra.mxu0 0.0
    %328 = vmatprep.subr.mxu0 0.0
    %329 = vmatpush2.msra.mxu0 0.0
    %330 = vmatprep.subr.mxu0 0.0
    %331 = vmatpush2.msra.mxu0 0.0
    %332 = vmatprep.subr.mxu0 0.0
    %333 = vmatpush2.msra.mxu0 0.0
    %334 = vmatprep.subr.mxu0 0.0
    %335 = vmatpush2.msra.mxu0 0.0
    %336 = vmatprep.subr.mxu0 0.0
    %337 = vmatpush2.msra.mxu0 0.0
    %338 = vmatprep.subr.mxu0 0.0
    %339 = vmatpush2.msra.mxu0 0.0
    %340 = vmatprep.subr.mxu0 0.0
    %341 = vmatpush2.msra.mxu0 0.0
    %342 = vmatprep.subr.mxu0 0.0
    %343 = vmatpush2.msra.mxu0 0.0
    %344 = vmatprep.subr.mxu0 0.0
    %345 = vmatpush2.msra.mxu0 0.0
    %346 = vmatprep.mubr.f32.mxu0 0.0
    %v347 = vand.u32 %v56, 4294901760
    %v348 = vsub.f32 %v56, %v347
    %349 = vmatmul.mubr.f32.gmra.mxu0 %v348
    %v350 = vpop.f32.mrf.mxu0
    %v351 = vadd.f32 %v253, %v350
    %v352 = vpop.f32.mrf.mxu0
    %v353 = vadd.f32 %v255, %v352
    %354 = vmatprep.mubr.f32.mxu0 0.0
    %v355 = vand.u32 %v58, 4294901760
    %v356 = vsub.f32 %v58, %v355
    %357 = vmatmul.mubr.f32.gmra.mxu0 %v356
    %v358 = vpop.f32.mrf.mxu0
    %v359 = vadd.f32 %v260, %v358
    %v360 = vpop.f32.mrf.mxu0
    %v361 = vadd.f32 %v262, %v360
    %362 = vmatprep.mubr.f32.mxu0 0.0
    %v363 = vand.u32 %v60, 4294901760
    %v364 = vsub.f32 %v60, %v363
    %365 = vmatmul.mubr.f32.gmra.mxu0 %v364
    %v366 = vpop.f32.mrf.mxu0
    %v367 = vadd.f32 %v267, %v366
    %v368 = vpop.f32.mrf.mxu0
    %v369 = vadd.f32 %v269, %v368
    %370 = vmatprep.mubr.f32.mxu0 0.0
    %v371 = vand.u32 %v62, 4294901760
    %v372 = vsub.f32 %v62, %v371
    %373 = vmatmul.mubr.f32.gmra.mxu0 %v372
    %v374 = vpop.f32.mrf.mxu0
    %v375 = vadd.f32 %v274, %v374
    %v376 = vpop.f32.mrf.mxu0
    %v377 = vadd.f32 %v276, %v376
    %378 = vdwg.mxu0
    %379 = vmatprep.subr.mxu0 0.0
    %380 = vmatpush1.msra.mxu0 0.0
    %381 = vmatprep.subr.mxu0 0.0
    %382 = vmatpush1.msra.mxu0 0.0
    %383 = vmatprep.subr.mxu0 0.0
    %384 = vmatpush1.msra.mxu0 0.0
    %385 = vmatprep.subr.mxu0 0.0
    %386 = vmatpush1.msra.mxu0 0.0
    %387 = vmatprep.subr.mxu0 0.0
    %388 = vmatpush1.msra.mxu0 0.0
    %389 = vmatprep.subr.mxu0 0.0
    %390 = vmatpush1.msra.mxu0 0.0
    %391 = vmatprep.subr.mxu0 0.0
    %392 = vmatpush1.msra.mxu0 0.0
    %393 = vmatprep.subr.mxu0 0.0
    %394 = vmatpush1.msra.mxu0 0.0
    %395 = vmatprep.subr.mxu0 0.0
    %396 = vmatpush1.msra.mxu0 0.0
    %397 = vmatprep.subr.mxu0 0.0
    %398 = vmatpush1.msra.mxu0 0.0
    %399 = vmatprep.subr.mxu0 0.0
    %400 = vmatpush1.msra.mxu0 0.0
    %401 = vmatprep.subr.mxu0 0.0
    %402 = vmatpush1.msra.mxu0 0.0
    %403 = vmatprep.subr.mxu0 0.0
    %404 = vmatpush1.msra.mxu0 0.0
    %405 = vmatprep.subr.mxu0 0.0
    %406 = vmatpush1.msra.mxu0 0.0
    %407 = vmatprep.subr.mxu0 0.0
    %408 = vmatpush1.msra.mxu0 0.0
    %v409 = vand.u32 %v34, 4294901760
    %410 = vmatprep.subr.mxu0 %v409
    %v411 = vand.u32 %v33, 4294901760
    %412 = vmatpush1.msra.mxu0 %v411
    %413 = vmatprep.subr.mxu0 0.0
    %414 = vmatpush2.msra.mxu0 0.0
    %415 = vmatprep.subr.mxu0 0.0
    %416 = vmatpush2.msra.mxu0 0.0
    %417 = vmatprep.subr.mxu0 0.0
    %418 = vmatpush2.msra.mxu0 0.0
    %419 = vmatprep.subr.mxu0 0.0
    %420 = vmatpush2.msra.mxu0 0.0
    %421 = vmatprep.subr.mxu0 0.0
    %422 = vmatpush2.msra.mxu0 0.0
    %423 = vmatprep.subr.mxu0 0.0
    %424 = vmatpush2.msra.mxu0 0.0
    %425 = vmatprep.subr.mxu0 0.0
    %426 = vmatpush2.msra.mxu0 0.0
    %427 = vmatprep.subr.mxu0 0.0
    %428 = vmatpush2.msra.mxu0 0.0
    %429 = vmatprep.subr.mxu0 0.0
    %430 = vmatpush2.msra.mxu0 0.0
    %431 = vmatprep.subr.mxu0 0.0
    %432 = vmatpush2.msra.mxu0 0.0
    %433 = vmatprep.subr.mxu0 0.0
    %434 = vmatpush2.msra.mxu0 0.0
    %435 = vmatprep.subr.mxu0 0.0
    %436 = vmatpush2.msra.mxu0 0.0
    %437 = vmatprep.subr.mxu0 0.0
    %438 = vmatpush2.msra.mxu0 0.0
    %439 = vmatprep.subr.mxu0 0.0
    %440 = vmatpush2.msra.mxu0 0.0
    %441 = vmatprep.subr.mxu0 0.0
    %442 = vmatpush2.msra.mxu0 0.0
    %443 = vmatprep.subr.mxu0 0.0
    %444 = vmatpush2.msra.mxu0 0.0
    %445 = vmatprep.mubr.f32.mxu0 0.0
    %v446 = vand.u32 %v56, 4294901760
    %v447 = vsub.f32 %v56, %v446
    %v448 = vand.u32 %v447, 4294901760
    %449 = vmatmul.mubr.f32.gmra.mxu0 %v448
    %v450 = vpop.f32.mrf.mxu0
    %v451 = vadd.f32 %v351, %v450
    %v452 = vpop.f32.mrf.mxu0
    %v453 = vadd.f32 %v353, %v452
    %454 = vmatprep.mubr.f32.mxu0 0.0
    %v455 = vand.u32 %v58, 4294901760
    %v456 = vsub.f32 %v58, %v455
    %v457 = vand.u32 %v456, 4294901760
    %458 = vmatmul.mubr.f32.gmra.mxu0 %v457
    %v459 = vpop.f32.mrf.mxu0
    %v460 = vadd.f32 %v359, %v459
    %v461 = vpop.f32.mrf.mxu0
    %v462 = vadd.f32 %v361, %v461
    %463 = vmatprep.mubr.f32.mxu0 0.0
    %v464 = vand.u32 %v60, 4294901760
    %v465 = vsub.f32 %v60, %v464
    %v466 = vand.u32 %v465, 4294901760
    %467 = vmatmul.mubr.f32.gmra.mxu0 %v466
    %v468 = vpop.f32.mrf.mxu0
    %v469 = vadd.f32 %v367, %v468
    %v470 = vpop.f32.mrf.mxu0
    %v471 = vadd.f32 %v369, %v470
    %472 = vmatprep.mubr.f32.mxu0 0.0
    %v473 = vand.u32 %v62, 4294901760
    %v474 = vsub.f32 %v62, %v473
    %v475 = vand.u32 %v474, 4294901760
    %476 = vmatmul.mubr.f32.gmra.mxu0 %v475
    %v477 = vpop.f32.mrf.mxu0
    %v478 = vadd.f32 %v375, %v477
    %v479 = vpop.f32.mrf.mxu0
    %v480 = vadd.f32 %v377, %v479
    %481 = vdwg.mxu0
    %482 = vmatprep.subr.mxu0 0.0
    %483 = vmatpush1.msra.mxu0 0.0
    %484 = vmatprep.subr.mxu0 0.0
    %485 = vmatpush1.msra.mxu0 0.0
    %486 = vmatprep.subr.mxu0 0.0
    %487 = vmatpush1.msra.mxu0 0.0
    %488 = vmatprep.subr.mxu0 0.0
    %489 = vmatpush1.msra.mxu0 0.0
    %490 = vmatprep.subr.mxu0 0.0
    %491 = vmatpush1.msra.mxu0 0.0
    %492 = vmatprep.subr.mxu0 0.0
    %493 = vmatpush1.msra.mxu0 0.0
    %494 = vmatprep.subr.mxu0 0.0
    %495 = vmatpush1.msra.mxu0 0.0
    %496 = vmatprep.subr.mxu0 0.0
    %497 = vmatpush1.msra.mxu0 0.0
    %498 = vmatprep.subr.mxu0 0.0
    %499 = vmatpush1.msra.mxu0 0.0
    %500 = vmatprep.subr.mxu0 0.0
    %501 = vmatpush1.msra.mxu0 0.0
    %502 = vmatprep.subr.mxu0 0.0
    %503 = vmatpush1.msra.mxu0 0.0
    %504 = vmatprep.subr.mxu0 0.0
    %505 = vmatpush1.msra.mxu0 0.0
    %506 = vmatprep.subr.mxu0 0.0
    %507 = vmatpush1.msra.mxu0 0.0
    %508 = vmatprep.subr.mxu0 0.0
    %509 = vmatpush1.msra.mxu0 0.0
    %510 = vmatprep.subr.mxu0 0.0
    %511 = vmatpush1.msra.mxu0 0.0
    %v512 = vand.u32 %v34, 4294901760
    %v513 = vsub.f32 %v34, %v512
    %v514 = vand.u32 %v513, 4294901760
    %515 = vmatprep.subr.mxu0 %v514
    %v516 = vand.u32 %v33, 4294901760
    %v517 = vsub.f32 %v33, %v516
    %v518 = vand.u32 %v517, 4294901760
    %519 = vmatpush1.msra.mxu0 %v518
    %520 = vmatprep.subr.mxu0 0.0
    %521 = vmatpush2.msra.mxu0 0.0
    %522 = vmatprep.subr.mxu0 0.0
    %523 = vmatpush2.msra.mxu0 0.0
    %524 = vmatprep.subr.mxu0 0.0
    %525 = vmatpush2.msra.mxu0 0.0
    %526 = vmatprep.subr.mxu0 0.0
    %527 = vmatpush2.msra.mxu0 0.0
    %528 = vmatprep.subr.mxu0 0.0
    %529 = vmatpush2.msra.mxu0 0.0
    %530 = vmatprep.subr.mxu0 0.0
    %531 = vmatpush2.msra.mxu0 0.0
    %532 = vmatprep.subr.mxu0 0.0
    %533 = vmatpush2.msra.mxu0 0.0
    %534 = vmatprep.subr.mxu0 0.0
    %535 = vmatpush2.msra.mxu0 0.0
    %536 = vmatprep.subr.mxu0 0.0
    %537 = vmatpush2.msra.mxu0 0.0
    %538 = vmatprep.subr.mxu0 0.0
    %539 = vmatpush2.msra.mxu0 0.0
    %540 = vmatprep.subr.mxu0 0.0
    %541 = vmatpush2.msra.mxu0 0.0
    %542 = vmatprep.subr.mxu0 0.0
    %543 = vmatpush2.msra.mxu0 0.0
    %544 = vmatprep.subr.mxu0 0.0
    %545 = vmatpush2.msra.mxu0 0.0
    %546 = vmatprep.subr.mxu0 0.0
    %547 = vmatpush2.msra.mxu0 0.0
    %548 = vmatprep.subr.mxu0 0.0
    %549 = vmatpush2.msra.mxu0 0.0
    %550 = vmatprep.subr.mxu0 0.0
    %551 = vmatpush2.msra.mxu0 0.0
    %552 = vmatprep.mubr.f32.mxu0 0.0
    %v553 = vand.u32 %v56, 4294901760
    %554 = vmatmul.mubr.f32.gmra.mxu0 %v553
    %v555 = vpop.f32.mrf.mxu0
    %v556 = vadd.f32 %v451, %v555
    %v557 = vpop.f32.mrf.mxu0
    %v558 = vadd.f32 %v453, %v557
    %559 = vmatprep.mubr.f32.mxu0 0.0
    %v560 = vand.u32 %v58, 4294901760
    %561 = vmatmul.mubr.f32.gmra.mxu0 %v560
    %v562 = vpop.f32.mrf.mxu0
    %v563 = vadd.f32 %v460, %v562
    %v564 = vpop.f32.mrf.mxu0
    %v565 = vadd.f32 %v462, %v564
    %566 = vmatprep.mubr.f32.mxu0 0.0
    %v567 = vand.u32 %v60, 4294901760
    %568 = vmatmul.mubr.f32.gmra.mxu0 %v567
    %v569 = vpop.f32.mrf.mxu0
    %v570 = vadd.f32 %v469, %v569
    %v571 = vpop.f32.mrf.mxu0
    %v572 = vadd.f32 %v471, %v571
    %573 = vmatprep.mubr.f32.mxu0 0.0
    %v574 = vand.u32 %v62, 4294901760
    %575 = vmatmul.mubr.f32.gmra.mxu0 %v574
    %v576 = vpop.f32.mrf.mxu0
    %v577 = vadd.f32 %v478, %v576
    %v578 = vpop.f32.mrf.mxu0
    %v579 = vadd.f32 %v480, %v578
    %580 = vdwg.mxu0
    %581 = vmatprep.subr.mxu0 0.0
    %582 = vmatpush1.msra.mxu0 0.0
    %583 = vmatprep.subr.mxu0 0.0
    %584 = vmatpush1.msra.mxu0 0.0
    %585 = vmatprep.subr.mxu0 0.0
    %586 = vmatpush1.msra.mxu0 0.0
    %587 = vmatprep.subr.mxu0 0.0
    %588 = vmatpush1.msra.mxu0 0.0
    %589 = vmatprep.subr.mxu0 0.0
    %590 = vmatpush1.msra.mxu0 0.0
    %591 = vmatprep.subr.mxu0 0.0
    %592 = vmatpush1.msra.mxu0 0.0
    %593 = vmatprep.subr.mxu0 0.0
    %594 = vmatpush1.msra.mxu0 0.0
    %595 = vmatprep.subr.mxu0 0.0
    %596 = vmatpush1.msra.mxu0 0.0
    %597 = vmatprep.subr.mxu0 0.0
    %598 = vmatpush1.msra.mxu0 0.0
    %599 = vmatprep.subr.mxu0 0.0
    %600 = vmatpush1.msra.mxu0 0.0
    %601 = vmatprep.subr.mxu0 0.0
    %602 = vmatpush1.msra.mxu0 0.0
    %603 = vmatprep.subr.mxu0 0.0
    %604 = vmatpush1.msra.mxu0 0.0
    %605 = vmatprep.subr.mxu0 0.0
    %606 = vmatpush1.msra.mxu0 0.0
    %607 = vmatprep.subr.mxu0 0.0
    %608 = vmatpush1.msra.mxu0 0.0
    %609 = vmatprep.subr.mxu0 0.0
    %610 = vmatpush1.msra.mxu0 0.0
    %v611 = vand.u32 %v34, 4294901760
    %612 = vmatprep.subr.mxu0 %v611
    %v613 = vand.u32 %v33, 4294901760
    %614 = vmatpush1.msra.mxu0 %v613
    %615 = vmatprep.subr.mxu0 0.0
    %616 = vmatpush2.msra.mxu0 0.0
    %617 = vmatprep.subr.mxu0 0.0
    %618 = vmatpush2.msra.mxu0 0.0
    %619 = vmatprep.subr.mxu0 0.0
    %620 = vmatpush2.msra.mxu0 0.0
    %621 = vmatprep.subr.mxu0 0.0
    %622 = vmatpush2.msra.mxu0 0.0
    %623 = vmatprep.subr.mxu0 0.0
    %624 = vmatpush2.msra.mxu0 0.0
    %625 = vmatprep.subr.mxu0 0.0
    %626 = vmatpush2.msra.mxu0 0.0
    %627 = vmatprep.subr.mxu0 0.0
    %628 = vmatpush2.msra.mxu0 0.0
    %629 = vmatprep.subr.mxu0 0.0
    %630 = vmatpush2.msra.mxu0 0.0
    %631 = vmatprep.subr.mxu0 0.0
    %632 = vmatpush2.msra.mxu0 0.0
    %633 = vmatprep.subr.mxu0 0.0
    %634 = vmatpush2.msra.mxu0 0.0
    %635 = vmatprep.subr.mxu0 0.0
    %636 = vmatpush2.msra.mxu0 0.0
    %637 = vmatprep.subr.mxu0 0.0
    %638 = vmatpush2.msra.mxu0 0.0
    %639 = vmatprep.subr.mxu0 0.0
    %640 = vmatpush2.msra.mxu0 0.0
    %641 = vmatprep.subr.mxu0 0.0
    %642 = vmatpush2.msra.mxu0 0.0
    %643 = vmatprep.subr.mxu0 0.0
    %644 = vmatpush2.msra.mxu0 0.0
    %645 = vmatprep.subr.mxu0 0.0
    %646 = vmatpush2.msra.mxu0 0.0
    %647 = vmatprep.mubr.f32.mxu0 0.0
    %v648 = vand.u32 %v56, 4294901760
    %649 = vmatmul.mubr.f32.gmra.mxu0 %v648
    %v650 = vpop.f32.mrf.mxu0
    %v651 = vadd.f32 %v556, %v650
    %v652 = vpop.f32.mrf.mxu0
    %v653 = vadd.f32 %v558, %v652
    %654 = vmatprep.mubr.f32.mxu0 0.0
    %v655 = vand.u32 %v58, 4294901760
    %656 = vmatmul.mubr.f32.gmra.mxu0 %v655
    %v657 = vpop.f32.mrf.mxu0
    %v658 = vadd.f32 %v563, %v657
    %v659 = vpop.f32.mrf.mxu0
    %v660 = vadd.f32 %v565, %v659
    %661 = vmatprep.mubr.f32.mxu0 0.0
    %v662 = vand.u32 %v60, 4294901760
    %663 = vmatmul.mubr.f32.gmra.mxu0 %v662
    %v664 = vpop.f32.mrf.mxu0
    %v665 = vadd.f32 %v570, %v664
    %v666 = vpop.f32.mrf.mxu0
    %v667 = vadd.f32 %v572, %v666
    %668 = vmatprep.mubr.f32.mxu0 0.0
    %v669 = vand.u32 %v62, 4294901760
    %670 = vmatmul.mubr.f32.gmra.mxu0 %v669
    %v671 = vpop.f32.mrf.mxu0
    %v672 = vadd.f32 %v577, %v671
    %v673 = vpop.f32.mrf.mxu0
    %v674 = vadd.f32 %v579, %v673
    %675 = vdwg.mxu0
    %v676 = vmax.f32 %v651, 0.0
    %v677 = vmax.f32 %v653, 0.0
    %v678 = vmax.f32 %v658, 0.0
    %v679 = vmax.f32 %v660, 0.0
    %v680 = vmax.f32 %v665, 0.0
    %v681 = vmax.f32 %v667, 0.0
    %v682 = vmax.f32 %v672, 0.0
    %v683 = vmax.f32 %v674, 0.0
    %684 = vrot.lane.b32.xlu0 %v676, 1
    %v685 = vpop.permute.xlu0 %684
    %686 = vrot.lane.b32.xlu0 %v678, 1
    %v687 = vpop.permute.xlu0 %686
    %688 = vrot.lane.b32.xlu0 %v680, 1
    %v689 = vpop.permute.xlu0 %688
    %690 = vrot.lane.b32.xlu0 %v682, 1
    %v691 = vpop.permute.xlu0 %690
    %692 = vrot.lane.b32.xlu0 %v677, 1
    %v693 = vpop.permute.xlu0 %692
    %694 = vrot.lane.b32.xlu0 %v679, 1
    %v695 = vpop.permute.xlu0 %694
    %696 = vrot.lane.b32.xlu0 %v681, 1
    %v697 = vpop.permute.xlu0 %696
    %698 = vrot.lane.b32.xlu0 %v683, 1
    %v699 = vpop.permute.xlu0 %698
    %vm700 = vcmp.lt.s32.totalorder %v21, 1
    %v701 = vsel %vm700, %v685, %v693
    %v702 = vsel %vm700, %v687, %v695
    %v703 = vsel %vm700, %v689, %v697
    %v704 = vsel %vm700, %v691, %v699
    %v705 = vsel %vm700, %v693, %v685
    %v706 = vsel %vm700, %v695, %v687
    %v707 = vsel %vm700, %v697, %v689
    %v708 = vsel %vm700, %v699, %v691
    %v709 = vsel %vm29, 1, 0
    %v710 = vsel %vm30, 1, 0
    %vm711 = vcmp.eq.s32.totalorder %v709, 1
    %vm712 = vcmp.eq.s32.totalorder %v710, 1
    %v713 = vsel %vm711, %v705, 0.0
    %v714 = vsel %vm712, %v701, 0.0
    %v715 = vsel %vm711, %v706, 0.0
    %v716 = vsel %vm712, %v702, 0.0
    %v717 = vsel %vm711, %v707, 0.0
    %v718 = vsel %vm712, %v703, 0.0
    %v719 = vsel %vm711, %v708, 0.0
    %v720 = vsel %vm712, %v704, 0.0
    %721 = vrot.lane.b32.xlu0 %v676, 127
    %v722 = vpop.permute.xlu0 %721
    %723 = vrot.lane.b32.xlu0 %v678, 127
    %v724 = vpop.permute.xlu0 %723
    %725 = vrot.lane.b32.xlu0 %v680, 127
    %v726 = vpop.permute.xlu0 %725
    %727 = vrot.lane.b32.xlu0 %v682, 127
    %v728 = vpop.permute.xlu0 %727
    %729 = vrot.lane.b32.xlu0 %v677, 127
    %v730 = vpop.permute.xlu0 %729
    %731 = vrot.lane.b32.xlu0 %v679, 127
    %v732 = vpop.permute.xlu0 %731
    %733 = vrot.lane.b32.xlu0 %v681, 127
    %v734 = vpop.permute.xlu0 %733
    %735 = vrot.lane.b32.xlu0 %v683, 127
    %v736 = vpop.permute.xlu0 %735
    %vm737 = vcmp.lt.s32.totalorder %v21, 127
    %v738 = vsel %vm737, %v722, %v730
    %v739 = vsel %vm737, %v724, %v732
    %v740 = vsel %vm737, %v726, %v734
    %v741 = vsel %vm737, %v728, %v736
    %v742 = vsel %vm737, %v730, %v722
    %v743 = vsel %vm737, %v732, %v724
    %v744 = vsel %vm737, %v734, %v726
    %v745 = vsel %vm737, %v736, %v728
    %v746 = vsel %vm31, 1, 0
    %v747 = vsel %vm32, 1, 0
    %vm748 = vcmp.eq.s32.totalorder %v746, 1
    %vm749 = vcmp.eq.s32.totalorder %v747, 1
    %v750 = vsel %vm748, %v738, 0.0
    %v751 = vsel %vm749, %v742, 0.0
    %v752 = vsel %vm748, %v739, 0.0
    %v753 = vsel %vm749, %v743, 0.0
    %v754 = vsel %vm748, %v740, 0.0
    %v755 = vsel %vm749, %v744, 0.0
    %v756 = vsel %vm748, %v741, 0.0
    %v757 = vsel %vm749, %v745, 0.0
    %758 = vset.pattern.permute.xlu0 9
    %759 = vperm.xlu0 %758, %v15
    %v760 = vpop.permute.xlu0 %759
    %762 = vset.pattern.permute.xlu0 9
    %763 = vperm.xlu0 %762, %v16
    %v764 = vpop.permute.xlu0 %763
    %766 = vset.pattern.permute.xlu0 9
    %767 = vperm.xlu0 %766, %v17
    %v768 = vpop.permute.xlu0 %767
    %770 = vset.pattern.permute.xlu0 9
    %771 = vperm.xlu0 %770, %v18
    %v772 = vpop.permute.xlu0 %771
    %v774 = vmul.f32 %v713, %v760
    %v775 = vmul.f32 %v714, %v760
    %v776 = vmul.f32 %v715, %v764
    %v777 = vmul.f32 %v716, %v764
    %v778 = vmul.f32 %v717, %v768
    %v779 = vmul.f32 %v718, %v768
    %v780 = vmul.f32 %v719, %v772
    %v781 = vmul.f32 %v720, %v772
    %782 = vset.pattern.permute.xlu0 10
    %783 = vperm.xlu0 %782, %v15
    %v784 = vpop.permute.xlu0 %783
    %786 = vset.pattern.permute.xlu0 10
    %787 = vperm.xlu0 %786, %v16
    %v788 = vpop.permute.xlu0 %787
    %790 = vset.pattern.permute.xlu0 10
    %791 = vperm.xlu0 %790, %v17
    %v792 = vpop.permute.xlu0 %791
    %794 = vset.pattern.permute.xlu0 10
    %795 = vperm.xlu0 %794, %v18
    %v796 = vpop.permute.xlu0 %795
    %v798 = vmul.f32 %v676, %v784
    %v799 = vmul.f32 %v677, %v784
    %v800 = vmul.f32 %v678, %v788
    %v801 = vmul.f32 %v679, %v788
    %v802 = vmul.f32 %v680, %v792
    %v803 = vmul.f32 %v681, %v792
    %v804 = vmul.f32 %v682, %v796
    %v805 = vmul.f32 %v683, %v796
    %v806 = vadd.f32 %v774, %v798
    %v807 = vadd.f32 %v775, %v799
    %v808 = vadd.f32 %v776, %v800
    %v809 = vadd.f32 %v777, %v801
    %v810 = vadd.f32 %v778, %v802
    %v811 = vadd.f32 %v779, %v803
    %v812 = vadd.f32 %v780, %v804
    %v813 = vadd.f32 %v781, %v805
    %814 = vset.pattern.permute.xlu0 11
    %815 = vperm.xlu0 %814, %v15
    %v816 = vpop.permute.xlu0 %815
    %818 = vset.pattern.permute.xlu0 11
    %819 = vperm.xlu0 %818, %v16
    %v820 = vpop.permute.xlu0 %819
    %822 = vset.pattern.permute.xlu0 11
    %823 = vperm.xlu0 %822, %v17
    %v824 = vpop.permute.xlu0 %823
    %826 = vset.pattern.permute.xlu0 11
    %827 = vperm.xlu0 %826, %v18
    %v828 = vpop.permute.xlu0 %827
    %v830 = vmul.f32 %v750, %v816
    %v831 = vmul.f32 %v751, %v816
    %v832 = vmul.f32 %v752, %v820
    %v833 = vmul.f32 %v753, %v820
    %v834 = vmul.f32 %v754, %v824
    %v835 = vmul.f32 %v755, %v824
    %v836 = vmul.f32 %v756, %v828
    %v837 = vmul.f32 %v757, %v828
    %v838 = vadd.f32 %v806, %v830
    %v839 = vadd.f32 %v807, %v831
    %v840 = vadd.f32 %v808, %v832
    %v841 = vadd.f32 %v809, %v833
    %v842 = vadd.f32 %v810, %v834
    %v843 = vadd.f32 %v811, %v835
    %v844 = vadd.f32 %v812, %v836
    %v845 = vadd.f32 %v813, %v837
    %846 = vset.pattern.permute.xlu0 12
    %847 = vperm.xlu0 %846, %v15
    %v848 = vpop.permute.xlu0 %847
    %850 = vset.pattern.permute.xlu0 12
    %851 = vperm.xlu0 %850, %v16
    %v852 = vpop.permute.xlu0 %851
    %854 = vset.pattern.permute.xlu0 12
    %855 = vperm.xlu0 %854, %v17
    %v856 = vpop.permute.xlu0 %855
    %858 = vset.pattern.permute.xlu0 12
    %859 = vperm.xlu0 %858, %v18
    %v860 = vpop.permute.xlu0 %859
    %v862 = vmul.f32 %v713, %v848
    %v863 = vmul.f32 %v714, %v848
    %v864 = vmul.f32 %v715, %v852
    %v865 = vmul.f32 %v716, %v852
    %v866 = vmul.f32 %v717, %v856
    %v867 = vmul.f32 %v718, %v856
    %v868 = vmul.f32 %v719, %v860
    %v869 = vmul.f32 %v720, %v860
    %870 = vset.pattern.permute.xlu0 13
    %871 = vperm.xlu0 %870, %v15
    %v872 = vpop.permute.xlu0 %871
    %874 = vset.pattern.permute.xlu0 13
    %875 = vperm.xlu0 %874, %v16
    %v876 = vpop.permute.xlu0 %875
    %878 = vset.pattern.permute.xlu0 13
    %879 = vperm.xlu0 %878, %v17
    %v880 = vpop.permute.xlu0 %879
    %882 = vset.pattern.permute.xlu0 13
    %883 = vperm.xlu0 %882, %v18
    %v884 = vpop.permute.xlu0 %883
    %v886 = vmul.f32 %v676, %v872
    %v887 = vmul.f32 %v677, %v872
    %v888 = vmul.f32 %v678, %v876
    %v889 = vmul.f32 %v679, %v876
    %v890 = vmul.f32 %v680, %v880
    %v891 = vmul.f32 %v681, %v880
    %v892 = vmul.f32 %v682, %v884
    %v893 = vmul.f32 %v683, %v884
    %v894 = vadd.f32 %v862, %v886
    %v895 = vadd.f32 %v863, %v887
    %v896 = vadd.f32 %v864, %v888
    %v897 = vadd.f32 %v865, %v889
    %v898 = vadd.f32 %v866, %v890
    %v899 = vadd.f32 %v867, %v891
    %v900 = vadd.f32 %v868, %v892
    %v901 = vadd.f32 %v869, %v893
    %902 = vset.pattern.permute.xlu0 14
    %903 = vperm.xlu0 %902, %v15
    %v904 = vpop.permute.xlu0 %903
    %906 = vset.pattern.permute.xlu0 14
    %907 = vperm.xlu0 %906, %v16
    %v908 = vpop.permute.xlu0 %907
    %910 = vset.pattern.permute.xlu0 14
    %911 = vperm.xlu0 %910, %v17
    %v912 = vpop.permute.xlu0 %911
    %914 = vset.pattern.permute.xlu0 14
    %915 = vperm.xlu0 %914, %v18
    %v916 = vpop.permute.xlu0 %915
    %v918 = vmul.f32 %v750, %v904
    %v919 = vmul.f32 %v751, %v904
    %v920 = vmul.f32 %v752, %v908
    %v921 = vmul.f32 %v753, %v908
    %v922 = vmul.f32 %v754, %v912
    %v923 = vmul.f32 %v755, %v912
    %v924 = vmul.f32 %v756, %v916
    %v925 = vmul.f32 %v757, %v916
    %v926 = vadd.f32 %v894, %v918
    %v927 = vadd.f32 %v895, %v919
    %v928 = vadd.f32 %v896, %v920
    %v929 = vadd.f32 %v897, %v921
    %v930 = vadd.f32 %v898, %v922
    %v931 = vadd.f32 %v899, %v923
    %v932 = vadd.f32 %v900, %v924
    %v933 = vadd.f32 %v901, %v925
    %934 = vset.pattern.permute.xlu0 15
    %935 = vperm.xlu0 %934, %v15
    %v936 = vpop.permute.xlu0 %935
    %938 = vset.pattern.permute.xlu0 15
    %939 = vperm.xlu0 %938, %v16
    %v940 = vpop.permute.xlu0 %939
    %942 = vset.pattern.permute.xlu0 15
    %943 = vperm.xlu0 %942, %v17
    %v944 = vpop.permute.xlu0 %943
    %946 = vset.pattern.permute.xlu0 15
    %947 = vperm.xlu0 %946, %v18
    %v948 = vpop.permute.xlu0 %947
    %v950 = vmul.f32 %v713, %v936
    %v951 = vmul.f32 %v714, %v936
    %v952 = vmul.f32 %v715, %v940
    %v953 = vmul.f32 %v716, %v940
    %v954 = vmul.f32 %v717, %v944
    %v955 = vmul.f32 %v718, %v944
    %v956 = vmul.f32 %v719, %v948
    %v957 = vmul.f32 %v720, %v948
    %958 = vset.pattern.permute.xlu0 16
    %959 = vperm.xlu0 %958, %v15
    %v960 = vpop.permute.xlu0 %959
    %962 = vset.pattern.permute.xlu0 16
    %963 = vperm.xlu0 %962, %v16
    %v964 = vpop.permute.xlu0 %963
    %966 = vset.pattern.permute.xlu0 16
    %967 = vperm.xlu0 %966, %v17
    %v968 = vpop.permute.xlu0 %967
    %970 = vset.pattern.permute.xlu0 16
    %971 = vperm.xlu0 %970, %v18
    %v972 = vpop.permute.xlu0 %971
    %v974 = vmul.f32 %v676, %v960
    %v975 = vmul.f32 %v677, %v960
    %v976 = vmul.f32 %v678, %v964
    %v977 = vmul.f32 %v679, %v964
    %v978 = vmul.f32 %v680, %v968
    %v979 = vmul.f32 %v681, %v968
    %v980 = vmul.f32 %v682, %v972
    %v981 = vmul.f32 %v683, %v972
    %v982 = vadd.f32 %v950, %v974
    %v983 = vadd.f32 %v951, %v975
    %v984 = vadd.f32 %v952, %v976
    %v985 = vadd.f32 %v953, %v977
    %v986 = vadd.f32 %v954, %v978
    %v987 = vadd.f32 %v955, %v979
    %v988 = vadd.f32 %v956, %v980
    %v989 = vadd.f32 %v957, %v981
    %990 = vset.pattern.permute.xlu0 17
    %991 = vperm.xlu0 %990, %v15
    %v992 = vpop.permute.xlu0 %991
    %994 = vset.pattern.permute.xlu0 17
    %995 = vperm.xlu0 %994, %v16
    %v996 = vpop.permute.xlu0 %995
    %998 = vset.pattern.permute.xlu0 17
    %999 = vperm.xlu0 %998, %v17
    %v1000 = vpop.permute.xlu0 %999
    %1002 = vset.pattern.permute.xlu0 17
    %1003 = vperm.xlu0 %1002, %v18
    %v1004 = vpop.permute.xlu0 %1003
    %v1006 = vmul.f32 %v750, %v992
    %v1007 = vmul.f32 %v751, %v992
    %v1008 = vmul.f32 %v752, %v996
    %v1009 = vmul.f32 %v753, %v996
    %v1010 = vmul.f32 %v754, %v1000
    %v1011 = vmul.f32 %v755, %v1000
    %v1012 = vmul.f32 %v756, %v1004
    %v1013 = vmul.f32 %v757, %v1004
    %v1014 = vadd.f32 %v982, %v1006
    %v1015 = vadd.f32 %v983, %v1007
    %v1016 = vadd.f32 %v984, %v1008
    %v1017 = vadd.f32 %v985, %v1009
    %v1018 = vadd.f32 %v986, %v1010
    %v1019 = vadd.f32 %v987, %v1011
    %v1020 = vadd.f32 %v988, %v1012
    %v1021 = vadd.f32 %v989, %v1013
    %1022 = vrot.lane.b32.xlu0 %v838, 16
    %v1023 = vpop.permute.xlu0 %1022
    %1024 = vrot.lane.b32.xlu0 %v840, 16
    %v1025 = vpop.permute.xlu0 %1024
    %1026 = vrot.lane.b32.xlu0 %v842, 16
    %v1027 = vpop.permute.xlu0 %1026
    %1028 = vrot.lane.b32.xlu0 %v844, 16
    %v1029 = vpop.permute.xlu0 %1028
    %1030 = vrot.lane.b32.xlu0 %v839, 16
    %v1031 = vpop.permute.xlu0 %1030
    %1032 = vrot.lane.b32.xlu0 %v841, 16
    %v1033 = vpop.permute.xlu0 %1032
    %1034 = vrot.lane.b32.xlu0 %v843, 16
    %v1035 = vpop.permute.xlu0 %1034
    %1036 = vrot.lane.b32.xlu0 %v845, 16
    %v1037 = vpop.permute.xlu0 %1036
    %vm1038 = vcmp.lt.s32.totalorder %v21, 16
    %v1039 = vsel %vm1038, %v1023, %v1031
    %v1040 = vsel %vm1038, %v1025, %v1033
    %v1041 = vsel %vm1038, %v1027, %v1035
    %v1042 = vsel %vm1038, %v1029, %v1037
    %v1043 = vsel %vm1038, %v1031, %v1023
    %v1044 = vsel %vm1038, %v1033, %v1025
    %v1045 = vsel %vm1038, %v1035, %v1027
    %v1046 = vsel %vm1038, %v1037, %v1029
    %v1047 = vsel %vm25, 1, 0
    %v1048 = vsel %vm26, 1, 0
    %vm1049 = vcmp.eq.s32.totalorder %v1047, 1
    %vm1050 = vcmp.eq.s32.totalorder %v1048, 1
    %v1051 = vsel %vm1049, %v1043, 0.0
    %v1052 = vsel %vm1050, %v1039, 0.0
    %v1053 = vsel %vm1049, %v1044, 0.0
    %v1054 = vsel %vm1050, %v1040, 0.0
    %v1055 = vsel %vm1049, %v1045, 0.0
    %v1056 = vsel %vm1050, %v1041, 0.0
    %v1057 = vsel %vm1049, %v1046, 0.0
    %v1058 = vsel %vm1050, %v1042, 0.0
    %v1059 = vadd.f32 %v926, %v1051
    %v1060 = vadd.f32 %v927, %v1052
    %v1061 = vadd.f32 %v928, %v1053
    %v1062 = vadd.f32 %v929, %v1054
    %v1063 = vadd.f32 %v930, %v1055
    %v1064 = vadd.f32 %v931, %v1056
    %v1065 = vadd.f32 %v932, %v1057
    %v1066 = vadd.f32 %v933, %v1058
    %1067 = vrot.lane.b32.xlu0 %v1014, 112
    %v1068 = vpop.permute.xlu0 %1067
    %1069 = vrot.lane.b32.xlu0 %v1016, 112
    %v1070 = vpop.permute.xlu0 %1069
    %1071 = vrot.lane.b32.xlu0 %v1018, 112
    %v1072 = vpop.permute.xlu0 %1071
    %1073 = vrot.lane.b32.xlu0 %v1020, 112
    %v1074 = vpop.permute.xlu0 %1073
    %1075 = vrot.lane.b32.xlu0 %v1015, 112
    %v1076 = vpop.permute.xlu0 %1075
    %1077 = vrot.lane.b32.xlu0 %v1017, 112
    %v1078 = vpop.permute.xlu0 %1077
    %1079 = vrot.lane.b32.xlu0 %v1019, 112
    %v1080 = vpop.permute.xlu0 %1079
    %1081 = vrot.lane.b32.xlu0 %v1021, 112
    %v1082 = vpop.permute.xlu0 %1081
    %vm1083 = vcmp.lt.s32.totalorder %v21, 112
    %v1084 = vsel %vm1083, %v1068, %v1076
    %v1085 = vsel %vm1083, %v1070, %v1078
    %v1086 = vsel %vm1083, %v1072, %v1080
    %v1087 = vsel %vm1083, %v1074, %v1082
    %v1088 = vsel %vm1083, %v1076, %v1068
    %v1089 = vsel %vm1083, %v1078, %v1070
    %v1090 = vsel %vm1083, %v1080, %v1072
    %v1091 = vsel %vm1083, %v1082, %v1074
    %v1092 = vsel %vm27, 1, 0
    %v1093 = vsel %vm28, 1, 0
    %vm1094 = vcmp.eq.s32.totalorder %v1092, 1
    %vm1095 = vcmp.eq.s32.totalorder %v1093, 1
    %v1096 = vsel %vm1094, %v1084, 0.0
    %v1097 = vsel %vm1095, %v1088, 0.0
    %v1098 = vsel %vm1094, %v1085, 0.0
    %v1099 = vsel %vm1095, %v1089, 0.0
    %v1100 = vsel %vm1094, %v1086, 0.0
    %v1101 = vsel %vm1095, %v1090, 0.0
    %v1102 = vsel %vm1094, %v1087, 0.0
    %v1103 = vsel %vm1095, %v1091, 0.0
    %v1104 = vadd.f32 %v1059, %v1096
    %v1105 = vadd.f32 %v1060, %v1097
    %v1106 = vadd.f32 %v1061, %v1098
    %v1107 = vadd.f32 %v1062, %v1099
    %v1108 = vadd.f32 %v1063, %v1100
    %v1109 = vadd.f32 %v1064, %v1101
    %v1110 = vadd.f32 %v1065, %v1102
    %v1111 = vadd.f32 %v1066, %v1103
    %1112 = vset.pattern.permute.xlu0 18
    %1113 = vperm.xlu0 %1112, %v15
    %v1114 = vpop.permute.xlu0 %1113
    %1116 = vset.pattern.permute.xlu0 18
    %1117 = vperm.xlu0 %1116, %v16
    %v1118 = vpop.permute.xlu0 %1117
    %1120 = vset.pattern.permute.xlu0 18
    %1121 = vperm.xlu0 %1120, %v17
    %v1122 = vpop.permute.xlu0 %1121
    %1124 = vset.pattern.permute.xlu0 18
    %1125 = vperm.xlu0 %1124, %v18
    %v1126 = vpop.permute.xlu0 %1125
    %v1128 = vadd.f32 %v1104, %v1114
    %v1129 = vadd.f32 %v1105, %v1114
    %v1130 = vadd.f32 %v1106, %v1118
    %v1131 = vadd.f32 %v1107, %v1118
    %v1132 = vadd.f32 %v1108, %v1122
    %v1133 = vadd.f32 %v1109, %v1122
    %v1134 = vadd.f32 %v1110, %v1126
    %v1135 = vadd.f32 %v1111, %v1126
    %v1136 = vmax.f32 %v1128, 0.0
    %v1137 = vmax.f32 %v1129, 0.0
    %v1138 = vmax.f32 %v1130, 0.0
    %v1139 = vmax.f32 %v1131, 0.0
    %v1140 = vmax.f32 %v1132, 0.0
    %v1141 = vmax.f32 %v1133, 0.0
    %v1142 = vmax.f32 %v1134, 0.0
    %v1143 = vmax.f32 %v1135, 0.0
    %1145 = vset.pattern.permute.xlu0 32
    %1146 = vperm.xlu0 %1145, %v19
    %v1147 = vpop.permute.xlu0 %1146
    %vm1149 = vcmask 261120
    %v1150 = vsel %vm1149, %v19, 0
    %1152 = vmatprep.subr.mxu0 0.0
    %1153 = vmatpush1.msra.mxu0 0.0
    %1154 = vmatprep.subr.mxu0 0.0
    %1155 = vmatpush1.msra.mxu0 0.0
    %1156 = vmatprep.subr.mxu0 0.0
    %1157 = vmatpush1.msra.mxu0 0.0
    %1158 = vmatprep.subr.mxu0 0.0
    %1159 = vmatpush1.msra.mxu0 0.0
    %1160 = vmatprep.subr.mxu0 0.0
    %1161 = vmatpush1.msra.mxu0 0.0
    %1162 = vmatprep.subr.mxu0 0.0
    %1163 = vmatpush1.msra.mxu0 0.0
    %1164 = vmatprep.subr.mxu0 0.0
    %1165 = vmatpush1.msra.mxu0 0.0
    %1166 = vmatprep.subr.mxu0 0.0
    %1167 = vmatpush1.msra.mxu0 0.0
    %1168 = vmatprep.subr.mxu0 0.0
    %1169 = vmatpush1.msra.mxu0 0.0
    %1170 = vmatprep.subr.mxu0 0.0
    %1171 = vmatpush1.msra.mxu0 0.0
    %1172 = vmatprep.subr.mxu0 0.0
    %1173 = vmatpush1.msra.mxu0 0.0
    %1174 = vmatprep.subr.mxu0 0.0
    %1175 = vmatpush1.msra.mxu0 0.0
    %v1176 = vand.u32 %v1143, 4294901760
    %1177 = vmatprep.subr.mxu0 %v1176
    %v1178 = vand.u32 %v1142, 4294901760
    %1179 = vmatpush1.msra.mxu0 %v1178
    %v1180 = vand.u32 %v1141, 4294901760
    %1181 = vmatprep.subr.mxu0 %v1180
    %v1182 = vand.u32 %v1140, 4294901760
    %1183 = vmatpush1.msra.mxu0 %v1182
    %v1184 = vand.u32 %v1139, 4294901760
    %1185 = vmatprep.subr.mxu0 %v1184
    %v1186 = vand.u32 %v1138, 4294901760
    %1187 = vmatpush1.msra.mxu0 %v1186
    %v1188 = vand.u32 %v1137, 4294901760
    %1189 = vmatprep.subr.mxu0 %v1188
    %v1190 = vand.u32 %v1136, 4294901760
    %1191 = vmatpush1.msra.mxu0 %v1190
    %1192 = vmatprep.subr.mxu0 0.0
    %1193 = vmatpush2.msra.mxu0 0.0
    %1194 = vmatprep.subr.mxu0 0.0
    %1195 = vmatpush2.msra.mxu0 0.0
    %1196 = vmatprep.subr.mxu0 0.0
    %1197 = vmatpush2.msra.mxu0 0.0
    %1198 = vmatprep.subr.mxu0 0.0
    %1199 = vmatpush2.msra.mxu0 0.0
    %1200 = vmatprep.subr.mxu0 0.0
    %1201 = vmatpush2.msra.mxu0 0.0
    %1202 = vmatprep.subr.mxu0 0.0
    %1203 = vmatpush2.msra.mxu0 0.0
    %1204 = vmatprep.subr.mxu0 0.0
    %1205 = vmatpush2.msra.mxu0 0.0
    %1206 = vmatprep.subr.mxu0 0.0
    %1207 = vmatpush2.msra.mxu0 0.0
    %1208 = vmatprep.subr.mxu0 0.0
    %1209 = vmatpush2.msra.mxu0 0.0
    %1210 = vmatprep.subr.mxu0 0.0
    %1211 = vmatpush2.msra.mxu0 0.0
    %1212 = vmatprep.subr.mxu0 0.0
    %1213 = vmatpush2.msra.mxu0 0.0
    %1214 = vmatprep.subr.mxu0 0.0
    %1215 = vmatpush2.msra.mxu0 0.0
    %1216 = vmatprep.subr.mxu0 0.0
    %1217 = vmatpush2.msra.mxu0 0.0
    %1218 = vmatprep.subr.mxu0 0.0
    %1219 = vmatpush2.msra.mxu0 0.0
    %1220 = vmatprep.subr.mxu0 0.0
    %1221 = vmatpush2.msra.mxu0 0.0
    %1222 = vmatprep.subr.mxu0 0.0
    %1223 = vmatpush2.msra.mxu0 0.0
    %1224 = vmatprep.mubr.f32.mxu0 0.0
    %v1225 = vand.u32 %v1150, 4294901760
    %v1226 = vsub.f32 %v1150, %v1225
    %v1227 = vand.u32 %v1226, 4294901760
    %v1228 = vsub.f32 %v1226, %v1227
    %v1229 = vand.u32 %v1228, 4294901760
    %1230 = vmatmul.mubr.f32.gmra.mxu0 %v1229
    %v1231 = vpop.f32.mrf.mxu0
    %v1232 = vadd.f32 %v1147, %v1231
    %v1233 = vpop.f32.mrf.mxu0
    %v1234 = vadd.f32 %v1147, %v1233
    %1235 = vdwg.mxu0
    %1236 = vmatprep.subr.mxu0 0.0
    %1237 = vmatpush1.msra.mxu0 0.0
    %1238 = vmatprep.subr.mxu0 0.0
    %1239 = vmatpush1.msra.mxu0 0.0
    %1240 = vmatprep.subr.mxu0 0.0
    %1241 = vmatpush1.msra.mxu0 0.0
    %1242 = vmatprep.subr.mxu0 0.0
    %1243 = vmatpush1.msra.mxu0 0.0
    %1244 = vmatprep.subr.mxu0 0.0
    %1245 = vmatpush1.msra.mxu0 0.0
    %1246 = vmatprep.subr.mxu0 0.0
    %1247 = vmatpush1.msra.mxu0 0.0
    %1248 = vmatprep.subr.mxu0 0.0
    %1249 = vmatpush1.msra.mxu0 0.0
    %1250 = vmatprep.subr.mxu0 0.0
    %1251 = vmatpush1.msra.mxu0 0.0
    %1252 = vmatprep.subr.mxu0 0.0
    %1253 = vmatpush1.msra.mxu0 0.0
    %1254 = vmatprep.subr.mxu0 0.0
    %1255 = vmatpush1.msra.mxu0 0.0
    %1256 = vmatprep.subr.mxu0 0.0
    %1257 = vmatpush1.msra.mxu0 0.0
    %1258 = vmatprep.subr.mxu0 0.0
    %1259 = vmatpush1.msra.mxu0 0.0
    %v1260 = vand.u32 %v1143, 4294901760
    %v1261 = vsub.f32 %v1143, %v1260
    %v1262 = vand.u32 %v1261, 4294901760
    %v1263 = vsub.f32 %v1261, %v1262
    %v1264 = vand.u32 %v1263, 4294901760
    %1265 = vmatprep.subr.mxu0 %v1264
    %v1266 = vand.u32 %v1142, 4294901760
    %v1267 = vsub.f32 %v1142, %v1266
    %v1268 = vand.u32 %v1267, 4294901760
    %v1269 = vsub.f32 %v1267, %v1268
    %v1270 = vand.u32 %v1269, 4294901760
    %1271 = vmatpush1.msra.mxu0 %v1270
    %v1272 = vand.u32 %v1141, 4294901760
    %v1273 = vsub.f32 %v1141, %v1272
    %v1274 = vand.u32 %v1273, 4294901760
    %v1275 = vsub.f32 %v1273, %v1274
    %v1276 = vand.u32 %v1275, 4294901760
    %1277 = vmatprep.subr.mxu0 %v1276
    %v1278 = vand.u32 %v1140, 4294901760
    %v1279 = vsub.f32 %v1140, %v1278
    %v1280 = vand.u32 %v1279, 4294901760
    %v1281 = vsub.f32 %v1279, %v1280
    %v1282 = vand.u32 %v1281, 4294901760
    %1283 = vmatpush1.msra.mxu0 %v1282
    %v1284 = vand.u32 %v1139, 4294901760
    %v1285 = vsub.f32 %v1139, %v1284
    %v1286 = vand.u32 %v1285, 4294901760
    %v1287 = vsub.f32 %v1285, %v1286
    %v1288 = vand.u32 %v1287, 4294901760
    %1289 = vmatprep.subr.mxu0 %v1288
    %v1290 = vand.u32 %v1138, 4294901760
    %v1291 = vsub.f32 %v1138, %v1290
    %v1292 = vand.u32 %v1291, 4294901760
    %v1293 = vsub.f32 %v1291, %v1292
    %v1294 = vand.u32 %v1293, 4294901760
    %1295 = vmatpush1.msra.mxu0 %v1294
    %v1296 = vand.u32 %v1137, 4294901760
    %v1297 = vsub.f32 %v1137, %v1296
    %v1298 = vand.u32 %v1297, 4294901760
    %v1299 = vsub.f32 %v1297, %v1298
    %v1300 = vand.u32 %v1299, 4294901760
    %1301 = vmatprep.subr.mxu0 %v1300
    %v1302 = vand.u32 %v1136, 4294901760
    %v1303 = vsub.f32 %v1136, %v1302
    %v1304 = vand.u32 %v1303, 4294901760
    %v1305 = vsub.f32 %v1303, %v1304
    %v1306 = vand.u32 %v1305, 4294901760
    %1307 = vmatpush1.msra.mxu0 %v1306
    %1308 = vmatprep.subr.mxu0 0.0
    %1309 = vmatpush2.msra.mxu0 0.0
    %1310 = vmatprep.subr.mxu0 0.0
    %1311 = vmatpush2.msra.mxu0 0.0
    %1312 = vmatprep.subr.mxu0 0.0
    %1313 = vmatpush2.msra.mxu0 0.0
    %1314 = vmatprep.subr.mxu0 0.0
    %1315 = vmatpush2.msra.mxu0 0.0
    %1316 = vmatprep.subr.mxu0 0.0
    %1317 = vmatpush2.msra.mxu0 0.0
    %1318 = vmatprep.subr.mxu0 0.0
    %1319 = vmatpush2.msra.mxu0 0.0
    %1320 = vmatprep.subr.mxu0 0.0
    %1321 = vmatpush2.msra.mxu0 0.0
    %1322 = vmatprep.subr.mxu0 0.0
    %1323 = vmatpush2.msra.mxu0 0.0
    %1324 = vmatprep.subr.mxu0 0.0
    %1325 = vmatpush2.msra.mxu0 0.0
    %1326 = vmatprep.subr.mxu0 0.0
    %1327 = vmatpush2.msra.mxu0 0.0
    %1328 = vmatprep.subr.mxu0 0.0
    %1329 = vmatpush2.msra.mxu0 0.0
    %1330 = vmatprep.subr.mxu0 0.0
    %1331 = vmatpush2.msra.mxu0 0.0
    %1332 = vmatprep.subr.mxu0 0.0
    %1333 = vmatpush2.msra.mxu0 0.0
    %1334 = vmatprep.subr.mxu0 0.0
    %1335 = vmatpush2.msra.mxu0 0.0
    %1336 = vmatprep.subr.mxu0 0.0
    %1337 = vmatpush2.msra.mxu0 0.0
    %1338 = vmatprep.subr.mxu0 0.0
    %1339 = vmatpush2.msra.mxu0 0.0
    %1340 = vmatprep.mubr.f32.mxu0 0.0
    %v1341 = vand.u32 %v1150, 4294901760
    %1342 = vmatmul.mubr.f32.gmra.mxu0 %v1341
    %v1343 = vpop.f32.mrf.mxu0
    %v1344 = vadd.f32 %v1232, %v1343
    %v1345 = vpop.f32.mrf.mxu0
    %v1346 = vadd.f32 %v1234, %v1345
    %1347 = vdwg.mxu0
    %1348 = vmatprep.subr.mxu0 0.0
    %1349 = vmatpush1.msra.mxu0 0.0
    %1350 = vmatprep.subr.mxu0 0.0
    %1351 = vmatpush1.msra.mxu0 0.0
    %1352 = vmatprep.subr.mxu0 0.0
    %1353 = vmatpush1.msra.mxu0 0.0
    %1354 = vmatprep.subr.mxu0 0.0
    %1355 = vmatpush1.msra.mxu0 0.0
    %1356 = vmatprep.subr.mxu0 0.0
    %1357 = vmatpush1.msra.mxu0 0.0
    %1358 = vmatprep.subr.mxu0 0.0
    %1359 = vmatpush1.msra.mxu0 0.0
    %1360 = vmatprep.subr.mxu0 0.0
    %1361 = vmatpush1.msra.mxu0 0.0
    %1362 = vmatprep.subr.mxu0 0.0
    %1363 = vmatpush1.msra.mxu0 0.0
    %1364 = vmatprep.subr.mxu0 0.0
    %1365 = vmatpush1.msra.mxu0 0.0
    %1366 = vmatprep.subr.mxu0 0.0
    %1367 = vmatpush1.msra.mxu0 0.0
    %1368 = vmatprep.subr.mxu0 0.0
    %1369 = vmatpush1.msra.mxu0 0.0
    %1370 = vmatprep.subr.mxu0 0.0
    %1371 = vmatpush1.msra.mxu0 0.0
    %v1372 = vand.u32 %v1143, 4294901760
    %v1373 = vsub.f32 %v1143, %v1372
    %1374 = vmatprep.subr.mxu0 %v1373
    %v1375 = vand.u32 %v1142, 4294901760
    %v1376 = vsub.f32 %v1142, %v1375
    %1377 = vmatpush1.msra.mxu0 %v1376
    %v1378 = vand.u32 %v1141, 4294901760
    %v1379 = vsub.f32 %v1141, %v1378
    %1380 = vmatprep.subr.mxu0 %v1379
    %v1381 = vand.u32 %v1140, 4294901760
    %v1382 = vsub.f32 %v1140, %v1381
    %1383 = vmatpush1.msra.mxu0 %v1382
    %v1384 = vand.u32 %v1139, 4294901760
    %v1385 = vsub.f32 %v1139, %v1384
    %1386 = vmatprep.subr.mxu0 %v1385
    %v1387 = vand.u32 %v1138, 4294901760
    %v1388 = vsub.f32 %v1138, %v1387
    %1389 = vmatpush1.msra.mxu0 %v1388
    %v1390 = vand.u32 %v1137, 4294901760
    %v1391 = vsub.f32 %v1137, %v1390
    %1392 = vmatprep.subr.mxu0 %v1391
    %v1393 = vand.u32 %v1136, 4294901760
    %v1394 = vsub.f32 %v1136, %v1393
    %1395 = vmatpush1.msra.mxu0 %v1394
    %1396 = vmatprep.subr.mxu0 0.0
    %1397 = vmatpush2.msra.mxu0 0.0
    %1398 = vmatprep.subr.mxu0 0.0
    %1399 = vmatpush2.msra.mxu0 0.0
    %1400 = vmatprep.subr.mxu0 0.0
    %1401 = vmatpush2.msra.mxu0 0.0
    %1402 = vmatprep.subr.mxu0 0.0
    %1403 = vmatpush2.msra.mxu0 0.0
    %1404 = vmatprep.subr.mxu0 0.0
    %1405 = vmatpush2.msra.mxu0 0.0
    %1406 = vmatprep.subr.mxu0 0.0
    %1407 = vmatpush2.msra.mxu0 0.0
    %1408 = vmatprep.subr.mxu0 0.0
    %1409 = vmatpush2.msra.mxu0 0.0
    %1410 = vmatprep.subr.mxu0 0.0
    %1411 = vmatpush2.msra.mxu0 0.0
    %1412 = vmatprep.subr.mxu0 0.0
    %1413 = vmatpush2.msra.mxu0 0.0
    %1414 = vmatprep.subr.mxu0 0.0
    %1415 = vmatpush2.msra.mxu0 0.0
    %1416 = vmatprep.subr.mxu0 0.0
    %1417 = vmatpush2.msra.mxu0 0.0
    %1418 = vmatprep.subr.mxu0 0.0
    %1419 = vmatpush2.msra.mxu0 0.0
    %1420 = vmatprep.subr.mxu0 0.0
    %1421 = vmatpush2.msra.mxu0 0.0
    %1422 = vmatprep.subr.mxu0 0.0
    %1423 = vmatpush2.msra.mxu0 0.0
    %1424 = vmatprep.subr.mxu0 0.0
    %1425 = vmatpush2.msra.mxu0 0.0
    %1426 = vmatprep.subr.mxu0 0.0
    %1427 = vmatpush2.msra.mxu0 0.0
    %1428 = vmatprep.mubr.f32.mxu0 0.0
    %v1429 = vand.u32 %v1150, 4294901760
    %v1430 = vsub.f32 %v1150, %v1429
    %1431 = vmatmul.mubr.f32.gmra.mxu0 %v1430
    %v1432 = vpop.f32.mrf.mxu0
    %v1433 = vadd.f32 %v1344, %v1432
    %v1434 = vpop.f32.mrf.mxu0
    %v1435 = vadd.f32 %v1346, %v1434
    %1436 = vdwg.mxu0
    %1437 = vmatprep.subr.mxu0 0.0
    %1438 = vmatpush1.msra.mxu0 0.0
    %1439 = vmatprep.subr.mxu0 0.0
    %1440 = vmatpush1.msra.mxu0 0.0
    %1441 = vmatprep.subr.mxu0 0.0
    %1442 = vmatpush1.msra.mxu0 0.0
    %1443 = vmatprep.subr.mxu0 0.0
    %1444 = vmatpush1.msra.mxu0 0.0
    %1445 = vmatprep.subr.mxu0 0.0
    %1446 = vmatpush1.msra.mxu0 0.0
    %1447 = vmatprep.subr.mxu0 0.0
    %1448 = vmatpush1.msra.mxu0 0.0
    %1449 = vmatprep.subr.mxu0 0.0
    %1450 = vmatpush1.msra.mxu0 0.0
    %1451 = vmatprep.subr.mxu0 0.0
    %1452 = vmatpush1.msra.mxu0 0.0
    %1453 = vmatprep.subr.mxu0 0.0
    %1454 = vmatpush1.msra.mxu0 0.0
    %1455 = vmatprep.subr.mxu0 0.0
    %1456 = vmatpush1.msra.mxu0 0.0
    %1457 = vmatprep.subr.mxu0 0.0
    %1458 = vmatpush1.msra.mxu0 0.0
    %1459 = vmatprep.subr.mxu0 0.0
    %1460 = vmatpush1.msra.mxu0 0.0
    %v1461 = vand.u32 %v1143, 4294901760
    %1462 = vmatprep.subr.mxu0 %v1461
    %v1463 = vand.u32 %v1142, 4294901760
    %1464 = vmatpush1.msra.mxu0 %v1463
    %v1465 = vand.u32 %v1141, 4294901760
    %1466 = vmatprep.subr.mxu0 %v1465
    %v1467 = vand.u32 %v1140, 4294901760
    %1468 = vmatpush1.msra.mxu0 %v1467
    %v1469 = vand.u32 %v1139, 4294901760
    %1470 = vmatprep.subr.mxu0 %v1469
    %v1471 = vand.u32 %v1138, 4294901760
    %1472 = vmatpush1.msra.mxu0 %v1471
    %v1473 = vand.u32 %v1137, 4294901760
    %1474 = vmatprep.subr.mxu0 %v1473
    %v1475 = vand.u32 %v1136, 4294901760
    %1476 = vmatpush1.msra.mxu0 %v1475
    %1477 = vmatprep.subr.mxu0 0.0
    %1478 = vmatpush2.msra.mxu0 0.0
    %1479 = vmatprep.subr.mxu0 0.0
    %1480 = vmatpush2.msra.mxu0 0.0
    %1481 = vmatprep.subr.mxu0 0.0
    %1482 = vmatpush2.msra.mxu0 0.0
    %1483 = vmatprep.subr.mxu0 0.0
    %1484 = vmatpush2.msra.mxu0 0.0
    %1485 = vmatprep.subr.mxu0 0.0
    %1486 = vmatpush2.msra.mxu0 0.0
    %1487 = vmatprep.subr.mxu0 0.0
    %1488 = vmatpush2.msra.mxu0 0.0
    %1489 = vmatprep.subr.mxu0 0.0
    %1490 = vmatpush2.msra.mxu0 0.0
    %1491 = vmatprep.subr.mxu0 0.0
    %1492 = vmatpush2.msra.mxu0 0.0
    %1493 = vmatprep.subr.mxu0 0.0
    %1494 = vmatpush2.msra.mxu0 0.0
    %1495 = vmatprep.subr.mxu0 0.0
    %1496 = vmatpush2.msra.mxu0 0.0
    %1497 = vmatprep.subr.mxu0 0.0
    %1498 = vmatpush2.msra.mxu0 0.0
    %1499 = vmatprep.subr.mxu0 0.0
    %1500 = vmatpush2.msra.mxu0 0.0
    %1501 = vmatprep.subr.mxu0 0.0
    %1502 = vmatpush2.msra.mxu0 0.0
    %1503 = vmatprep.subr.mxu0 0.0
    %1504 = vmatpush2.msra.mxu0 0.0
    %1505 = vmatprep.subr.mxu0 0.0
    %1506 = vmatpush2.msra.mxu0 0.0
    %1507 = vmatprep.subr.mxu0 0.0
    %1508 = vmatpush2.msra.mxu0 0.0
    %1509 = vmatprep.mubr.f32.mxu0 0.0
    %v1510 = vand.u32 %v1150, 4294901760
    %v1511 = vsub.f32 %v1150, %v1510
    %v1512 = vand.u32 %v1511, 4294901760
    %1513 = vmatmul.mubr.f32.gmra.mxu0 %v1512
    %v1514 = vpop.f32.mrf.mxu0
    %v1515 = vadd.f32 %v1433, %v1514
    %v1516 = vpop.f32.mrf.mxu0
    %v1517 = vadd.f32 %v1435, %v1516
    %1518 = vdwg.mxu0
    %1519 = vmatprep.subr.mxu0 0.0
    %1520 = vmatpush1.msra.mxu0 0.0
    %1521 = vmatprep.subr.mxu0 0.0
    %1522 = vmatpush1.msra.mxu0 0.0
    %1523 = vmatprep.subr.mxu0 0.0
    %1524 = vmatpush1.msra.mxu0 0.0
    %1525 = vmatprep.subr.mxu0 0.0
    %1526 = vmatpush1.msra.mxu0 0.0
    %1527 = vmatprep.subr.mxu0 0.0
    %1528 = vmatpush1.msra.mxu0 0.0
    %1529 = vmatprep.subr.mxu0 0.0
    %1530 = vmatpush1.msra.mxu0 0.0
    %1531 = vmatprep.subr.mxu0 0.0
    %1532 = vmatpush1.msra.mxu0 0.0
    %1533 = vmatprep.subr.mxu0 0.0
    %1534 = vmatpush1.msra.mxu0 0.0
    %1535 = vmatprep.subr.mxu0 0.0
    %1536 = vmatpush1.msra.mxu0 0.0
    %1537 = vmatprep.subr.mxu0 0.0
    %1538 = vmatpush1.msra.mxu0 0.0
    %1539 = vmatprep.subr.mxu0 0.0
    %1540 = vmatpush1.msra.mxu0 0.0
    %1541 = vmatprep.subr.mxu0 0.0
    %1542 = vmatpush1.msra.mxu0 0.0
    %v1543 = vand.u32 %v1143, 4294901760
    %v1544 = vsub.f32 %v1143, %v1543
    %v1545 = vand.u32 %v1544, 4294901760
    %1546 = vmatprep.subr.mxu0 %v1545
    %v1547 = vand.u32 %v1142, 4294901760
    %v1548 = vsub.f32 %v1142, %v1547
    %v1549 = vand.u32 %v1548, 4294901760
    %1550 = vmatpush1.msra.mxu0 %v1549
    %v1551 = vand.u32 %v1141, 4294901760
    %v1552 = vsub.f32 %v1141, %v1551
    %v1553 = vand.u32 %v1552, 4294901760
    %1554 = vmatprep.subr.mxu0 %v1553
    %v1555 = vand.u32 %v1140, 4294901760
    %v1556 = vsub.f32 %v1140, %v1555
    %v1557 = vand.u32 %v1556, 4294901760
    %1558 = vmatpush1.msra.mxu0 %v1557
    %v1559 = vand.u32 %v1139, 4294901760
    %v1560 = vsub.f32 %v1139, %v1559
    %v1561 = vand.u32 %v1560, 4294901760
    %1562 = vmatprep.subr.mxu0 %v1561
    %v1563 = vand.u32 %v1138, 4294901760
    %v1564 = vsub.f32 %v1138, %v1563
    %v1565 = vand.u32 %v1564, 4294901760
    %1566 = vmatpush1.msra.mxu0 %v1565
    %v1567 = vand.u32 %v1137, 4294901760
    %v1568 = vsub.f32 %v1137, %v1567
    %v1569 = vand.u32 %v1568, 4294901760
    %1570 = vmatprep.subr.mxu0 %v1569
    %v1571 = vand.u32 %v1136, 4294901760
    %v1572 = vsub.f32 %v1136, %v1571
    %v1573 = vand.u32 %v1572, 4294901760
    %1574 = vmatpush1.msra.mxu0 %v1573
    %1575 = vmatprep.subr.mxu0 0.0
    %1576 = vmatpush2.msra.mxu0 0.0
    %1577 = vmatprep.subr.mxu0 0.0
    %1578 = vmatpush2.msra.mxu0 0.0
    %1579 = vmatprep.subr.mxu0 0.0
    %1580 = vmatpush2.msra.mxu0 0.0
    %1581 = vmatprep.subr.mxu0 0.0
    %1582 = vmatpush2.msra.mxu0 0.0
    %1583 = vmatprep.subr.mxu0 0.0
    %1584 = vmatpush2.msra.mxu0 0.0
    %1585 = vmatprep.subr.mxu0 0.0
    %1586 = vmatpush2.msra.mxu0 0.0
    %1587 = vmatprep.subr.mxu0 0.0
    %1588 = vmatpush2.msra.mxu0 0.0
    %1589 = vmatprep.subr.mxu0 0.0
    %1590 = vmatpush2.msra.mxu0 0.0
    %1591 = vmatprep.subr.mxu0 0.0
    %1592 = vmatpush2.msra.mxu0 0.0
    %1593 = vmatprep.subr.mxu0 0.0
    %1594 = vmatpush2.msra.mxu0 0.0
    %1595 = vmatprep.subr.mxu0 0.0
    %1596 = vmatpush2.msra.mxu0 0.0
    %1597 = vmatprep.subr.mxu0 0.0
    %1598 = vmatpush2.msra.mxu0 0.0
    %1599 = vmatprep.subr.mxu0 0.0
    %1600 = vmatpush2.msra.mxu0 0.0
    %1601 = vmatprep.subr.mxu0 0.0
    %1602 = vmatpush2.msra.mxu0 0.0
    %1603 = vmatprep.subr.mxu0 0.0
    %1604 = vmatpush2.msra.mxu0 0.0
    %1605 = vmatprep.subr.mxu0 0.0
    %1606 = vmatpush2.msra.mxu0 0.0
    %1607 = vmatprep.mubr.f32.mxu0 0.0
    %v1608 = vand.u32 %v1150, 4294901760
    %1609 = vmatmul.mubr.f32.gmra.mxu0 %v1608
    %v1610 = vpop.f32.mrf.mxu0
    %v1611 = vadd.f32 %v1515, %v1610
    %v1612 = vpop.f32.mrf.mxu0
    %v1613 = vadd.f32 %v1517, %v1612
    %1614 = vdwg.mxu0
    %1615 = vmatprep.subr.mxu0 0.0
    %1616 = vmatpush1.msra.mxu0 0.0
    %1617 = vmatprep.subr.mxu0 0.0
    %1618 = vmatpush1.msra.mxu0 0.0
    %1619 = vmatprep.subr.mxu0 0.0
    %1620 = vmatpush1.msra.mxu0 0.0
    %1621 = vmatprep.subr.mxu0 0.0
    %1622 = vmatpush1.msra.mxu0 0.0
    %1623 = vmatprep.subr.mxu0 0.0
    %1624 = vmatpush1.msra.mxu0 0.0
    %1625 = vmatprep.subr.mxu0 0.0
    %1626 = vmatpush1.msra.mxu0 0.0
    %1627 = vmatprep.subr.mxu0 0.0
    %1628 = vmatpush1.msra.mxu0 0.0
    %1629 = vmatprep.subr.mxu0 0.0
    %1630 = vmatpush1.msra.mxu0 0.0
    %1631 = vmatprep.subr.mxu0 0.0
    %1632 = vmatpush1.msra.mxu0 0.0
    %1633 = vmatprep.subr.mxu0 0.0
    %1634 = vmatpush1.msra.mxu0 0.0
    %1635 = vmatprep.subr.mxu0 0.0
    %1636 = vmatpush1.msra.mxu0 0.0
    %1637 = vmatprep.subr.mxu0 0.0
    %1638 = vmatpush1.msra.mxu0 0.0
    %v1639 = vand.u32 %v1143, 4294901760
    %1640 = vmatprep.subr.mxu0 %v1639
    %v1641 = vand.u32 %v1142, 4294901760
    %1642 = vmatpush1.msra.mxu0 %v1641
    %v1643 = vand.u32 %v1141, 4294901760
    %1644 = vmatprep.subr.mxu0 %v1643
    %v1645 = vand.u32 %v1140, 4294901760
    %1646 = vmatpush1.msra.mxu0 %v1645
    %v1647 = vand.u32 %v1139, 4294901760
    %1648 = vmatprep.subr.mxu0 %v1647
    %v1649 = vand.u32 %v1138, 4294901760
    %1650 = vmatpush1.msra.mxu0 %v1649
    %v1651 = vand.u32 %v1137, 4294901760
    %1652 = vmatprep.subr.mxu0 %v1651
    %v1653 = vand.u32 %v1136, 4294901760
    %1654 = vmatpush1.msra.mxu0 %v1653
    %1655 = vmatprep.subr.mxu0 0.0
    %1656 = vmatpush2.msra.mxu0 0.0
    %1657 = vmatprep.subr.mxu0 0.0
    %1658 = vmatpush2.msra.mxu0 0.0
    %1659 = vmatprep.subr.mxu0 0.0
    %1660 = vmatpush2.msra.mxu0 0.0
    %1661 = vmatprep.subr.mxu0 0.0
    %1662 = vmatpush2.msra.mxu0 0.0
    %1663 = vmatprep.subr.mxu0 0.0
    %1664 = vmatpush2.msra.mxu0 0.0
    %1665 = vmatprep.subr.mxu0 0.0
    %1666 = vmatpush2.msra.mxu0 0.0
    %1667 = vmatprep.subr.mxu0 0.0
    %1668 = vmatpush2.msra.mxu0 0.0
    %1669 = vmatprep.subr.mxu0 0.0
    %1670 = vmatpush2.msra.mxu0 0.0
    %1671 = vmatprep.subr.mxu0 0.0
    %1672 = vmatpush2.msra.mxu0 0.0
    %1673 = vmatprep.subr.mxu0 0.0
    %1674 = vmatpush2.msra.mxu0 0.0
    %1675 = vmatprep.subr.mxu0 0.0
    %1676 = vmatpush2.msra.mxu0 0.0
    %1677 = vmatprep.subr.mxu0 0.0
    %1678 = vmatpush2.msra.mxu0 0.0
    %1679 = vmatprep.subr.mxu0 0.0
    %1680 = vmatpush2.msra.mxu0 0.0
    %1681 = vmatprep.subr.mxu0 0.0
    %1682 = vmatpush2.msra.mxu0 0.0
    %1683 = vmatprep.subr.mxu0 0.0
    %1684 = vmatpush2.msra.mxu0 0.0
    %1685 = vmatprep.subr.mxu0 0.0
    %1686 = vmatpush2.msra.mxu0 0.0
    %1687 = vmatprep.mubr.f32.mxu0 0.0
    %v1688 = vand.u32 %v1150, 4294901760
    %1689 = vmatmul.mubr.f32.gmra.mxu0 %v1688
    %v1690 = vpop.f32.mrf.mxu0
    %v1691 = vadd.f32 %v1611, %v1690
    %v1692 = vpop.f32.mrf.mxu0
    %v1693 = vadd.f32 %v1613, %v1692
    %1694 = vdwg.mxu0
    %v1695 = vadd.f32 %v1691, %v33
    %v1696 = vadd.f32 %v1693, %v34
    %1697 = vst [vmem:[#allocation2] sm:$0xff] %v1695
    %1698 = vst [vmem:[#allocation2 + $0x8] sm:$0xff] %v1696
    %s1699 = scalar_lea.vmem %s0, 16
    %v1700 = vld [vmem:[%s1699] sm:$0xff]
    %v1701 = vld [vmem:[%s1699 + $0x8] sm:$0xff]
    %1702 = vmatprep.subr.mxu0 0.0
    %1703 = vmatpush1.msra.mxu0 0.0
    %1704 = vmatprep.subr.mxu0 0.0
    %1705 = vmatpush1.msra.mxu0 0.0
    %1706 = vmatprep.subr.mxu0 0.0
    %1707 = vmatpush1.msra.mxu0 0.0
    %1708 = vmatprep.subr.mxu0 0.0
    %1709 = vmatpush1.msra.mxu0 0.0
    %1710 = vmatprep.subr.mxu0 0.0
    %1711 = vmatpush1.msra.mxu0 0.0
    %1712 = vmatprep.subr.mxu0 0.0
    %1713 = vmatpush1.msra.mxu0 0.0
    %1714 = vmatprep.subr.mxu0 0.0
    %1715 = vmatpush1.msra.mxu0 0.0
    %1716 = vmatprep.subr.mxu0 0.0
    %1717 = vmatpush1.msra.mxu0 0.0
    %1718 = vmatprep.subr.mxu0 0.0
    %1719 = vmatpush1.msra.mxu0 0.0
    %1720 = vmatprep.subr.mxu0 0.0
    %1721 = vmatpush1.msra.mxu0 0.0
    %1722 = vmatprep.subr.mxu0 0.0
    %1723 = vmatpush1.msra.mxu0 0.0
    %1724 = vmatprep.subr.mxu0 0.0
    %1725 = vmatpush1.msra.mxu0 0.0
    %1726 = vmatprep.subr.mxu0 0.0
    %1727 = vmatpush1.msra.mxu0 0.0
    %1728 = vmatprep.subr.mxu0 0.0
    %1729 = vmatpush1.msra.mxu0 0.0
    %1730 = vmatprep.subr.mxu0 0.0
    %1731 = vmatpush1.msra.mxu0 0.0
    %v1732 = vand.u32 %v1701, 4294901760
    %1733 = vmatprep.subr.mxu0 %v1732
    %v1734 = vand.u32 %v1700, 4294901760
    %1735 = vmatpush1.msra.mxu0 %v1734
    %1736 = vmatprep.subr.mxu0 0.0
    %1737 = vmatpush2.msra.mxu0 0.0
    %1738 = vmatprep.subr.mxu0 0.0
    %1739 = vmatpush2.msra.mxu0 0.0
    %1740 = vmatprep.subr.mxu0 0.0
    %1741 = vmatpush2.msra.mxu0 0.0
    %1742 = vmatprep.subr.mxu0 0.0
    %1743 = vmatpush2.msra.mxu0 0.0
    %1744 = vmatprep.subr.mxu0 0.0
    %1745 = vmatpush2.msra.mxu0 0.0
    %1746 = vmatprep.subr.mxu0 0.0
    %1747 = vmatpush2.msra.mxu0 0.0
    %1748 = vmatprep.subr.mxu0 0.0
    %1749 = vmatpush2.msra.mxu0 0.0
    %1750 = vmatprep.subr.mxu0 0.0
    %1751 = vmatpush2.msra.mxu0 0.0
    %1752 = vmatprep.subr.mxu0 0.0
    %1753 = vmatpush2.msra.mxu0 0.0
    %1754 = vmatprep.subr.mxu0 0.0
    %1755 = vmatpush2.msra.mxu0 0.0
    %1756 = vmatprep.subr.mxu0 0.0
    %1757 = vmatpush2.msra.mxu0 0.0
    %1758 = vmatprep.subr.mxu0 0.0
    %1759 = vmatpush2.msra.mxu0 0.0
    %1760 = vmatprep.subr.mxu0 0.0
    %1761 = vmatpush2.msra.mxu0 0.0
    %1762 = vmatprep.subr.mxu0 0.0
    %1763 = vmatpush2.msra.mxu0 0.0
    %1764 = vmatprep.subr.mxu0 0.0
    %1765 = vmatpush2.msra.mxu0 0.0
    %1766 = vmatprep.subr.mxu0 0.0
    %1767 = vmatpush2.msra.mxu0 0.0
    %1768 = vmatprep.mubr.f32.mxu0 0.0
    %v1769 = vand.u32 %v56, 4294901760
    %v1770 = vsub.f32 %v56, %v1769
    %v1771 = vand.u32 %v1770, 4294901760
    %v1772 = vsub.f32 %v1770, %v1771
    %v1773 = vand.u32 %v1772, 4294901760
    %1774 = vmatmul.mubr.f32.gmra.mxu0 %v1773
    %v1775 = vpop.f32.mrf.mxu0
    %v1776 = vadd.f32 %v38, %v1775
    %v1777 = vpop.f32.mrf.mxu0
    %v1778 = vadd.f32 %v38, %v1777
    %1779 = vmatprep.mubr.f32.mxu0 0.0
    %v1780 = vand.u32 %v58, 4294901760
    %v1781 = vsub.f32 %v58, %v1780
    %v1782 = vand.u32 %v1781, 4294901760
    %v1783 = vsub.f32 %v1781, %v1782
    %v1784 = vand.u32 %v1783, 4294901760
    %1785 = vmatmul.mubr.f32.gmra.mxu0 %v1784
    %v1786 = vpop.f32.mrf.mxu0
    %v1787 = vadd.f32 %v43, %v1786
    %v1788 = vpop.f32.mrf.mxu0
    %v1789 = vadd.f32 %v43, %v1788
    %1790 = vmatprep.mubr.f32.mxu0 0.0
    %v1791 = vand.u32 %v60, 4294901760
    %v1792 = vsub.f32 %v60, %v1791
    %v1793 = vand.u32 %v1792, 4294901760
    %v1794 = vsub.f32 %v1792, %v1793
    %v1795 = vand.u32 %v1794, 4294901760
    %1796 = vmatmul.mubr.f32.gmra.mxu0 %v1795
    %v1797 = vpop.f32.mrf.mxu0
    %v1798 = vadd.f32 %v48, %v1797
    %v1799 = vpop.f32.mrf.mxu0
    %v1800 = vadd.f32 %v48, %v1799
    %1801 = vmatprep.mubr.f32.mxu0 0.0
    %v1802 = vand.u32 %v62, 4294901760
    %v1803 = vsub.f32 %v62, %v1802
    %v1804 = vand.u32 %v1803, 4294901760
    %v1805 = vsub.f32 %v1803, %v1804
    %v1806 = vand.u32 %v1805, 4294901760
    %1807 = vmatmul.mubr.f32.gmra.mxu0 %v1806
    %v1808 = vpop.f32.mrf.mxu0
    %v1809 = vadd.f32 %v53, %v1808
    %v1810 = vpop.f32.mrf.mxu0
    %v1811 = vadd.f32 %v53, %v1810
    %1812 = vdwg.mxu0
    %1813 = vmatprep.subr.mxu0 0.0
    %1814 = vmatpush1.msra.mxu0 0.0
    %1815 = vmatprep.subr.mxu0 0.0
    %1816 = vmatpush1.msra.mxu0 0.0
    %1817 = vmatprep.subr.mxu0 0.0
    %1818 = vmatpush1.msra.mxu0 0.0
    %1819 = vmatprep.subr.mxu0 0.0
    %1820 = vmatpush1.msra.mxu0 0.0
    %1821 = vmatprep.subr.mxu0 0.0
    %1822 = vmatpush1.msra.mxu0 0.0
    %1823 = vmatprep.subr.mxu0 0.0
    %1824 = vmatpush1.msra.mxu0 0.0
    %1825 = vmatprep.subr.mxu0 0.0
    %1826 = vmatpush1.msra.mxu0 0.0
    %1827 = vmatprep.subr.mxu0 0.0
    %1828 = vmatpush1.msra.mxu0 0.0
    %1829 = vmatprep.subr.mxu0 0.0
    %1830 = vmatpush1.msra.mxu0 0.0
    %1831 = vmatprep.subr.mxu0 0.0
    %1832 = vmatpush1.msra.mxu0 0.0
    %1833 = vmatprep.subr.mxu0 0.0
    %1834 = vmatpush1.msra.mxu0 0.0
    %1835 = vmatprep.subr.mxu0 0.0
    %1836 = vmatpush1.msra.mxu0 0.0
    %1837 = vmatprep.subr.mxu0 0.0
    %1838 = vmatpush1.msra.mxu0 0.0
    %1839 = vmatprep.subr.mxu0 0.0
    %1840 = vmatpush1.msra.mxu0 0.0
    %1841 = vmatprep.subr.mxu0 0.0
    %1842 = vmatpush1.msra.mxu0 0.0
    %v1843 = vand.u32 %v1701, 4294901760
    %v1844 = vsub.f32 %v1701, %v1843
    %v1845 = vand.u32 %v1844, 4294901760
    %v1846 = vsub.f32 %v1844, %v1845
    %v1847 = vand.u32 %v1846, 4294901760
    %1848 = vmatprep.subr.mxu0 %v1847
    %v1849 = vand.u32 %v1700, 4294901760
    %v1850 = vsub.f32 %v1700, %v1849
    %v1851 = vand.u32 %v1850, 4294901760
    %v1852 = vsub.f32 %v1850, %v1851
    %v1853 = vand.u32 %v1852, 4294901760
    %1854 = vmatpush1.msra.mxu0 %v1853
    %1855 = vmatprep.subr.mxu0 0.0
    %1856 = vmatpush2.msra.mxu0 0.0
    %1857 = vmatprep.subr.mxu0 0.0
    %1858 = vmatpush2.msra.mxu0 0.0
    %1859 = vmatprep.subr.mxu0 0.0
    %1860 = vmatpush2.msra.mxu0 0.0
    %1861 = vmatprep.subr.mxu0 0.0
    %1862 = vmatpush2.msra.mxu0 0.0
    %1863 = vmatprep.subr.mxu0 0.0
    %1864 = vmatpush2.msra.mxu0 0.0
    %1865 = vmatprep.subr.mxu0 0.0
    %1866 = vmatpush2.msra.mxu0 0.0
    %1867 = vmatprep.subr.mxu0 0.0
    %1868 = vmatpush2.msra.mxu0 0.0
    %1869 = vmatprep.subr.mxu0 0.0
    %1870 = vmatpush2.msra.mxu0 0.0
    %1871 = vmatprep.subr.mxu0 0.0
    %1872 = vmatpush2.msra.mxu0 0.0
    %1873 = vmatprep.subr.mxu0 0.0
    %1874 = vmatpush2.msra.mxu0 0.0
    %1875 = vmatprep.subr.mxu0 0.0
    %1876 = vmatpush2.msra.mxu0 0.0
    %1877 = vmatprep.subr.mxu0 0.0
    %1878 = vmatpush2.msra.mxu0 0.0
    %1879 = vmatprep.subr.mxu0 0.0
    %1880 = vmatpush2.msra.mxu0 0.0
    %1881 = vmatprep.subr.mxu0 0.0
    %1882 = vmatpush2.msra.mxu0 0.0
    %1883 = vmatprep.subr.mxu0 0.0
    %1884 = vmatpush2.msra.mxu0 0.0
    %1885 = vmatprep.subr.mxu0 0.0
    %1886 = vmatpush2.msra.mxu0 0.0
    %1887 = vmatprep.mubr.f32.mxu0 0.0
    %v1888 = vand.u32 %v56, 4294901760
    %1889 = vmatmul.mubr.f32.gmra.mxu0 %v1888
    %v1890 = vpop.f32.mrf.mxu0
    %v1891 = vadd.f32 %v1776, %v1890
    %v1892 = vpop.f32.mrf.mxu0
    %v1893 = vadd.f32 %v1778, %v1892
    %1894 = vmatprep.mubr.f32.mxu0 0.0
    %v1895 = vand.u32 %v58, 4294901760
    %1896 = vmatmul.mubr.f32.gmra.mxu0 %v1895
    %v1897 = vpop.f32.mrf.mxu0
    %v1898 = vadd.f32 %v1787, %v1897
    %v1899 = vpop.f32.mrf.mxu0
    %v1900 = vadd.f32 %v1789, %v1899
    %1901 = vmatprep.mubr.f32.mxu0 0.0
    %v1902 = vand.u32 %v60, 4294901760
    %1903 = vmatmul.mubr.f32.gmra.mxu0 %v1902
    %v1904 = vpop.f32.mrf.mxu0
    %v1905 = vadd.f32 %v1798, %v1904
    %v1906 = vpop.f32.mrf.mxu0
    %v1907 = vadd.f32 %v1800, %v1906
    %1908 = vmatprep.mubr.f32.mxu0 0.0
    %v1909 = vand.u32 %v62, 4294901760
    %1910 = vmatmul.mubr.f32.gmra.mxu0 %v1909
    %v1911 = vpop.f32.mrf.mxu0
    %v1912 = vadd.f32 %v1809, %v1911
    %v1913 = vpop.f32.mrf.mxu0
    %v1914 = vadd.f32 %v1811, %v1913
    %1915 = vdwg.mxu0
    %1916 = vmatprep.subr.mxu0 0.0
    %1917 = vmatpush1.msra.mxu0 0.0
    %1918 = vmatprep.subr.mxu0 0.0
    %1919 = vmatpush1.msra.mxu0 0.0
    %1920 = vmatprep.subr.mxu0 0.0
    %1921 = vmatpush1.msra.mxu0 0.0
    %1922 = vmatprep.subr.mxu0 0.0
    %1923 = vmatpush1.msra.mxu0 0.0
    %1924 = vmatprep.subr.mxu0 0.0
    %1925 = vmatpush1.msra.mxu0 0.0
    %1926 = vmatprep.subr.mxu0 0.0
    %1927 = vmatpush1.msra.mxu0 0.0
    %1928 = vmatprep.subr.mxu0 0.0
    %1929 = vmatpush1.msra.mxu0 0.0
    %1930 = vmatprep.subr.mxu0 0.0
    %1931 = vmatpush1.msra.mxu0 0.0
    %1932 = vmatprep.subr.mxu0 0.0
    %1933 = vmatpush1.msra.mxu0 0.0
    %1934 = vmatprep.subr.mxu0 0.0
    %1935 = vmatpush1.msra.mxu0 0.0
    %1936 = vmatprep.subr.mxu0 0.0
    %1937 = vmatpush1.msra.mxu0 0.0
    %1938 = vmatprep.subr.mxu0 0.0
    %1939 = vmatpush1.msra.mxu0 0.0
    %1940 = vmatprep.subr.mxu0 0.0
    %1941 = vmatpush1.msra.mxu0 0.0
    %1942 = vmatprep.subr.mxu0 0.0
    %1943 = vmatpush1.msra.mxu0 0.0
    %1944 = vmatprep.subr.mxu0 0.0
    %1945 = vmatpush1.msra.mxu0 0.0
    %v1946 = vand.u32 %v1701, 4294901760
    %v1947 = vsub.f32 %v1701, %v1946
    %1948 = vmatprep.subr.mxu0 %v1947
    %v1949 = vand.u32 %v1700, 4294901760
    %v1950 = vsub.f32 %v1700, %v1949
    %1951 = vmatpush1.msra.mxu0 %v1950
    %1952 = vmatprep.subr.mxu0 0.0
    %1953 = vmatpush2.msra.mxu0 0.0
    %1954 = vmatprep.subr.mxu0 0.0
    %1955 = vmatpush2.msra.mxu0 0.0
    %1956 = vmatprep.subr.mxu0 0.0
    %1957 = vmatpush2.msra.mxu0 0.0
    %1958 = vmatprep.subr.mxu0 0.0
    %1959 = vmatpush2.msra.mxu0 0.0
    %1960 = vmatprep.subr.mxu0 0.0
    %1961 = vmatpush2.msra.mxu0 0.0
    %1962 = vmatprep.subr.mxu0 0.0
    %1963 = vmatpush2.msra.mxu0 0.0
    %1964 = vmatprep.subr.mxu0 0.0
    %1965 = vmatpush2.msra.mxu0 0.0
    %1966 = vmatprep.subr.mxu0 0.0
    %1967 = vmatpush2.msra.mxu0 0.0
    %1968 = vmatprep.subr.mxu0 0.0
    %1969 = vmatpush2.msra.mxu0 0.0
    %1970 = vmatprep.subr.mxu0 0.0
    %1971 = vmatpush2.msra.mxu0 0.0
    %1972 = vmatprep.subr.mxu0 0.0
    %1973 = vmatpush2.msra.mxu0 0.0
    %1974 = vmatprep.subr.mxu0 0.0
    %1975 = vmatpush2.msra.mxu0 0.0
    %1976 = vmatprep.subr.mxu0 0.0
    %1977 = vmatpush2.msra.mxu0 0.0
    %1978 = vmatprep.subr.mxu0 0.0
    %1979 = vmatpush2.msra.mxu0 0.0
    %1980 = vmatprep.subr.mxu0 0.0
    %1981 = vmatpush2.msra.mxu0 0.0
    %1982 = vmatprep.subr.mxu0 0.0
    %1983 = vmatpush2.msra.mxu0 0.0
    %1984 = vmatprep.mubr.f32.mxu0 0.0
    %v1985 = vand.u32 %v56, 4294901760
    %v1986 = vsub.f32 %v56, %v1985
    %1987 = vmatmul.mubr.f32.gmra.mxu0 %v1986
    %v1988 = vpop.f32.mrf.mxu0
    %v1989 = vadd.f32 %v1891, %v1988
    %v1990 = vpop.f32.mrf.mxu0
    %v1991 = vadd.f32 %v1893, %v1990
    %1992 = vmatprep.mubr.f32.mxu0 0.0
    %v1993 = vand.u32 %v58, 4294901760
    %v1994 = vsub.f32 %v58, %v1993
    %1995 = vmatmul.mubr.f32.gmra.mxu0 %v1994
    %v1996 = vpop.f32.mrf.mxu0
    %v1997 = vadd.f32 %v1898, %v1996
    %v1998 = vpop.f32.mrf.mxu0
    %v1999 = vadd.f32 %v1900, %v1998
    %2000 = vmatprep.mubr.f32.mxu0 0.0
    %v2001 = vand.u32 %v60, 4294901760
    %v2002 = vsub.f32 %v60, %v2001
    %2003 = vmatmul.mubr.f32.gmra.mxu0 %v2002
    %v2004 = vpop.f32.mrf.mxu0
    %v2005 = vadd.f32 %v1905, %v2004
    %v2006 = vpop.f32.mrf.mxu0
    %v2007 = vadd.f32 %v1907, %v2006
    %2008 = vmatprep.mubr.f32.mxu0 0.0
    %v2009 = vand.u32 %v62, 4294901760
    %v2010 = vsub.f32 %v62, %v2009
    %2011 = vmatmul.mubr.f32.gmra.mxu0 %v2010
    %v2012 = vpop.f32.mrf.mxu0
    %v2013 = vadd.f32 %v1912, %v2012
    %v2014 = vpop.f32.mrf.mxu0
    %v2015 = vadd.f32 %v1914, %v2014
    %2016 = vdwg.mxu0
    %2017 = vmatprep.subr.mxu0 0.0
    %2018 = vmatpush1.msra.mxu0 0.0
    %2019 = vmatprep.subr.mxu0 0.0
    %2020 = vmatpush1.msra.mxu0 0.0
    %2021 = vmatprep.subr.mxu0 0.0
    %2022 = vmatpush1.msra.mxu0 0.0
    %2023 = vmatprep.subr.mxu0 0.0
    %2024 = vmatpush1.msra.mxu0 0.0
    %2025 = vmatprep.subr.mxu0 0.0
    %2026 = vmatpush1.msra.mxu0 0.0
    %2027 = vmatprep.subr.mxu0 0.0
    %2028 = vmatpush1.msra.mxu0 0.0
    %2029 = vmatprep.subr.mxu0 0.0
    %2030 = vmatpush1.msra.mxu0 0.0
    %2031 = vmatprep.subr.mxu0 0.0
    %2032 = vmatpush1.msra.mxu0 0.0
    %2033 = vmatprep.subr.mxu0 0.0
    %2034 = vmatpush1.msra.mxu0 0.0
    %2035 = vmatprep.subr.mxu0 0.0
    %2036 = vmatpush1.msra.mxu0 0.0
    %2037 = vmatprep.subr.mxu0 0.0
    %2038 = vmatpush1.msra.mxu0 0.0
    %2039 = vmatprep.subr.mxu0 0.0
    %2040 = vmatpush1.msra.mxu0 0.0
    %2041 = vmatprep.subr.mxu0 0.0
    %2042 = vmatpush1.msra.mxu0 0.0
    %2043 = vmatprep.subr.mxu0 0.0
    %2044 = vmatpush1.msra.mxu0 0.0
    %2045 = vmatprep.subr.mxu0 0.0
    %2046 = vmatpush1.msra.mxu0 0.0
    %v2047 = vand.u32 %v1701, 4294901760
    %2048 = vmatprep.subr.mxu0 %v2047
    %v2049 = vand.u32 %v1700, 4294901760
    %2050 = vmatpush1.msra.mxu0 %v2049
    %2051 = vmatprep.subr.mxu0 0.0
    %2052 = vmatpush2.msra.mxu0 0.0
    %2053 = vmatprep.subr.mxu0 0.0
    %2054 = vmatpush2.msra.mxu0 0.0
    %2055 = vmatprep.subr.mxu0 0.0
    %2056 = vmatpush2.msra.mxu0 0.0
    %2057 = vmatprep.subr.mxu0 0.0
    %2058 = vmatpush2.msra.mxu0 0.0
    %2059 = vmatprep.subr.mxu0 0.0
    %2060 = vmatpush2.msra.mxu0 0.0
    %2061 = vmatprep.subr.mxu0 0.0
    %2062 = vmatpush2.msra.mxu0 0.0
    %2063 = vmatprep.subr.mxu0 0.0
    %2064 = vmatpush2.msra.mxu0 0.0
    %2065 = vmatprep.subr.mxu0 0.0
    %2066 = vmatpush2.msra.mxu0 0.0
    %2067 = vmatprep.subr.mxu0 0.0
    %2068 = vmatpush2.msra.mxu0 0.0
    %2069 = vmatprep.subr.mxu0 0.0
    %2070 = vmatpush2.msra.mxu0 0.0
    %2071 = vmatprep.subr.mxu0 0.0
    %2072 = vmatpush2.msra.mxu0 0.0
    %2073 = vmatprep.subr.mxu0 0.0
    %2074 = vmatpush2.msra.mxu0 0.0
    %2075 = vmatprep.subr.mxu0 0.0
    %2076 = vmatpush2.msra.mxu0 0.0
    %2077 = vmatprep.subr.mxu0 0.0
    %2078 = vmatpush2.msra.mxu0 0.0
    %2079 = vmatprep.subr.mxu0 0.0
    %2080 = vmatpush2.msra.mxu0 0.0
    %2081 = vmatprep.subr.mxu0 0.0
    %2082 = vmatpush2.msra.mxu0 0.0
    %2083 = vmatprep.mubr.f32.mxu0 0.0
    %v2084 = vand.u32 %v56, 4294901760
    %v2085 = vsub.f32 %v56, %v2084
    %v2086 = vand.u32 %v2085, 4294901760
    %2087 = vmatmul.mubr.f32.gmra.mxu0 %v2086
    %v2088 = vpop.f32.mrf.mxu0
    %v2089 = vadd.f32 %v1989, %v2088
    %v2090 = vpop.f32.mrf.mxu0
    %v2091 = vadd.f32 %v1991, %v2090
    %2092 = vmatprep.mubr.f32.mxu0 0.0
    %v2093 = vand.u32 %v58, 4294901760
    %v2094 = vsub.f32 %v58, %v2093
    %v2095 = vand.u32 %v2094, 4294901760
    %2096 = vmatmul.mubr.f32.gmra.mxu0 %v2095
    %v2097 = vpop.f32.mrf.mxu0
    %v2098 = vadd.f32 %v1997, %v2097
    %v2099 = vpop.f32.mrf.mxu0
    %v2100 = vadd.f32 %v1999, %v2099
    %2101 = vmatprep.mubr.f32.mxu0 0.0
    %v2102 = vand.u32 %v60, 4294901760
    %v2103 = vsub.f32 %v60, %v2102
    %v2104 = vand.u32 %v2103, 4294901760
    %2105 = vmatmul.mubr.f32.gmra.mxu0 %v2104
    %v2106 = vpop.f32.mrf.mxu0
    %v2107 = vadd.f32 %v2005, %v2106
    %v2108 = vpop.f32.mrf.mxu0
    %v2109 = vadd.f32 %v2007, %v2108
    %2110 = vmatprep.mubr.f32.mxu0 0.0
    %v2111 = vand.u32 %v62, 4294901760
    %v2112 = vsub.f32 %v62, %v2111
    %v2113 = vand.u32 %v2112, 4294901760
    %2114 = vmatmul.mubr.f32.gmra.mxu0 %v2113
    %v2115 = vpop.f32.mrf.mxu0
    %v2116 = vadd.f32 %v2013, %v2115
    %v2117 = vpop.f32.mrf.mxu0
    %v2118 = vadd.f32 %v2015, %v2117
    %2119 = vdwg.mxu0
    %2120 = vmatprep.subr.mxu0 0.0
    %2121 = vmatpush1.msra.mxu0 0.0
    %2122 = vmatprep.subr.mxu0 0.0
    %2123 = vmatpush1.msra.mxu0 0.0
    %2124 = vmatprep.subr.mxu0 0.0
    %2125 = vmatpush1.msra.mxu0 0.0
    %2126 = vmatprep.subr.mxu0 0.0
    %2127 = vmatpush1.msra.mxu0 0.0
    %2128 = vmatprep.subr.mxu0 0.0
    %2129 = vmatpush1.msra.mxu0 0.0
    %2130 = vmatprep.subr.mxu0 0.0
    %2131 = vmatpush1.msra.mxu0 0.0
    %2132 = vmatprep.subr.mxu0 0.0
    %2133 = vmatpush1.msra.mxu0 0.0
    %2134 = vmatprep.subr.mxu0 0.0
    %2135 = vmatpush1.msra.mxu0 0.0
    %2136 = vmatprep.subr.mxu0 0.0
    %2137 = vmatpush1.msra.mxu0 0.0
    %2138 = vmatprep.subr.mxu0 0.0
    %2139 = vmatpush1.msra.mxu0 0.0
    %2140 = vmatprep.subr.mxu0 0.0
    %2141 = vmatpush1.msra.mxu0 0.0
    %2142 = vmatprep.subr.mxu0 0.0
    %2143 = vmatpush1.msra.mxu0 0.0
    %2144 = vmatprep.subr.mxu0 0.0
    %2145 = vmatpush1.msra.mxu0 0.0
    %2146 = vmatprep.subr.mxu0 0.0
    %2147 = vmatpush1.msra.mxu0 0.0
    %2148 = vmatprep.subr.mxu0 0.0
    %2149 = vmatpush1.msra.mxu0 0.0
    %v2150 = vand.u32 %v1701, 4294901760
    %v2151 = vsub.f32 %v1701, %v2150
    %v2152 = vand.u32 %v2151, 4294901760
    %2153 = vmatprep.subr.mxu0 %v2152
    %v2154 = vand.u32 %v1700, 4294901760
    %v2155 = vsub.f32 %v1700, %v2154
    %v2156 = vand.u32 %v2155, 4294901760
    %2157 = vmatpush1.msra.mxu0 %v2156
    %2158 = vmatprep.subr.mxu0 0.0
    %2159 = vmatpush2.msra.mxu0 0.0
    %2160 = vmatprep.subr.mxu0 0.0
    %2161 = vmatpush2.msra.mxu0 0.0
    %2162 = vmatprep.subr.mxu0 0.0
    %2163 = vmatpush2.msra.mxu0 0.0
    %2164 = vmatprep.subr.mxu0 0.0
    %2165 = vmatpush2.msra.mxu0 0.0
    %2166 = vmatprep.subr.mxu0 0.0
    %2167 = vmatpush2.msra.mxu0 0.0
    %2168 = vmatprep.subr.mxu0 0.0
    %2169 = vmatpush2.msra.mxu0 0.0
    %2170 = vmatprep.subr.mxu0 0.0
    %2171 = vmatpush2.msra.mxu0 0.0
    %2172 = vmatprep.subr.mxu0 0.0
    %2173 = vmatpush2.msra.mxu0 0.0
    %2174 = vmatprep.subr.mxu0 0.0
    %2175 = vmatpush2.msra.mxu0 0.0
    %2176 = vmatprep.subr.mxu0 0.0
    %2177 = vmatpush2.msra.mxu0 0.0
    %2178 = vmatprep.subr.mxu0 0.0
    %2179 = vmatpush2.msra.mxu0 0.0
    %2180 = vmatprep.subr.mxu0 0.0
    %2181 = vmatpush2.msra.mxu0 0.0
    %2182 = vmatprep.subr.mxu0 0.0
    %2183 = vmatpush2.msra.mxu0 0.0
    %2184 = vmatprep.subr.mxu0 0.0
    %2185 = vmatpush2.msra.mxu0 0.0
    %2186 = vmatprep.subr.mxu0 0.0
    %2187 = vmatpush2.msra.mxu0 0.0
    %2188 = vmatprep.subr.mxu0 0.0
    %2189 = vmatpush2.msra.mxu0 0.0
    %2190 = vmatprep.mubr.f32.mxu0 0.0
    %v2191 = vand.u32 %v56, 4294901760
    %2192 = vmatmul.mubr.f32.gmra.mxu0 %v2191
    %v2193 = vpop.f32.mrf.mxu0
    %v2194 = vadd.f32 %v2089, %v2193
    %v2195 = vpop.f32.mrf.mxu0
    %v2196 = vadd.f32 %v2091, %v2195
    %2197 = vmatprep.mubr.f32.mxu0 0.0
    %v2198 = vand.u32 %v58, 4294901760
    %2199 = vmatmul.mubr.f32.gmra.mxu0 %v2198
    %v2200 = vpop.f32.mrf.mxu0
    %v2201 = vadd.f32 %v2098, %v2200
    %v2202 = vpop.f32.mrf.mxu0
    %v2203 = vadd.f32 %v2100, %v2202
    %2204 = vmatprep.mubr.f32.mxu0 0.0
    %v2205 = vand.u32 %v60, 4294901760
    %2206 = vmatmul.mubr.f32.gmra.mxu0 %v2205
    %v2207 = vpop.f32.mrf.mxu0
    %v2208 = vadd.f32 %v2107, %v2207
    %v2209 = vpop.f32.mrf.mxu0
    %v2210 = vadd.f32 %v2109, %v2209
    %2211 = vmatprep.mubr.f32.mxu0 0.0
    %v2212 = vand.u32 %v62, 4294901760
    %2213 = vmatmul.mubr.f32.gmra.mxu0 %v2212
    %v2214 = vpop.f32.mrf.mxu0
    %v2215 = vadd.f32 %v2116, %v2214
    %v2216 = vpop.f32.mrf.mxu0
    %v2217 = vadd.f32 %v2118, %v2216
    %2218 = vdwg.mxu0
    %2219 = vmatprep.subr.mxu0 0.0
    %2220 = vmatpush1.msra.mxu0 0.0
    %2221 = vmatprep.subr.mxu0 0.0
    %2222 = vmatpush1.msra.mxu0 0.0
    %2223 = vmatprep.subr.mxu0 0.0
    %2224 = vmatpush1.msra.mxu0 0.0
    %2225 = vmatprep.subr.mxu0 0.0
    %2226 = vmatpush1.msra.mxu0 0.0
    %2227 = vmatprep.subr.mxu0 0.0
    %2228 = vmatpush1.msra.mxu0 0.0
    %2229 = vmatprep.subr.mxu0 0.0
    %2230 = vmatpush1.msra.mxu0 0.0
    %2231 = vmatprep.subr.mxu0 0.0
    %2232 = vmatpush1.msra.mxu0 0.0
    %2233 = vmatprep.subr.mxu0 0.0
    %2234 = vmatpush1.msra.mxu0 0.0
    %2235 = vmatprep.subr.mxu0 0.0
    %2236 = vmatpush1.msra.mxu0 0.0
    %2237 = vmatprep.subr.mxu0 0.0
    %2238 = vmatpush1.msra.mxu0 0.0
    %2239 = vmatprep.subr.mxu0 0.0
    %2240 = vmatpush1.msra.mxu0 0.0
    %2241 = vmatprep.subr.mxu0 0.0
    %2242 = vmatpush1.msra.mxu0 0.0
    %2243 = vmatprep.subr.mxu0 0.0
    %2244 = vmatpush1.msra.mxu0 0.0
    %2245 = vmatprep.subr.mxu0 0.0
    %2246 = vmatpush1.msra.mxu0 0.0
    %2247 = vmatprep.subr.mxu0 0.0
    %2248 = vmatpush1.msra.mxu0 0.0
    %v2249 = vand.u32 %v1701, 4294901760
    %2250 = vmatprep.subr.mxu0 %v2249
    %v2251 = vand.u32 %v1700, 4294901760
    %2252 = vmatpush1.msra.mxu0 %v2251
    %2253 = vmatprep.subr.mxu0 0.0
    %2254 = vmatpush2.msra.mxu0 0.0
    %2255 = vmatprep.subr.mxu0 0.0
    %2256 = vmatpush2.msra.mxu0 0.0
    %2257 = vmatprep.subr.mxu0 0.0
    %2258 = vmatpush2.msra.mxu0 0.0
    %2259 = vmatprep.subr.mxu0 0.0
    %2260 = vmatpush2.msra.mxu0 0.0
    %2261 = vmatprep.subr.mxu0 0.0
    %2262 = vmatpush2.msra.mxu0 0.0
    %2263 = vmatprep.subr.mxu0 0.0
    %2264 = vmatpush2.msra.mxu0 0.0
    %2265 = vmatprep.subr.mxu0 0.0
    %2266 = vmatpush2.msra.mxu0 0.0
    %2267 = vmatprep.subr.mxu0 0.0
    %2268 = vmatpush2.msra.mxu0 0.0
    %2269 = vmatprep.subr.mxu0 0.0
    %2270 = vmatpush2.msra.mxu0 0.0
    %2271 = vmatprep.subr.mxu0 0.0
    %2272 = vmatpush2.msra.mxu0 0.0
    %2273 = vmatprep.subr.mxu0 0.0
    %2274 = vmatpush2.msra.mxu0 0.0
    %2275 = vmatprep.subr.mxu0 0.0
    %2276 = vmatpush2.msra.mxu0 0.0
    %2277 = vmatprep.subr.mxu0 0.0
    %2278 = vmatpush2.msra.mxu0 0.0
    %2279 = vmatprep.subr.mxu0 0.0
    %2280 = vmatpush2.msra.mxu0 0.0
    %2281 = vmatprep.subr.mxu0 0.0
    %2282 = vmatpush2.msra.mxu0 0.0
    %2283 = vmatprep.subr.mxu0 0.0
    %2284 = vmatpush2.msra.mxu0 0.0
    %2285 = vmatprep.mubr.f32.mxu0 0.0
    %v2286 = vand.u32 %v56, 4294901760
    %2287 = vmatmul.mubr.f32.gmra.mxu0 %v2286
    %v2288 = vpop.f32.mrf.mxu0
    %v2289 = vadd.f32 %v2194, %v2288
    %v2290 = vpop.f32.mrf.mxu0
    %v2291 = vadd.f32 %v2196, %v2290
    %2292 = vmatprep.mubr.f32.mxu0 0.0
    %v2293 = vand.u32 %v58, 4294901760
    %2294 = vmatmul.mubr.f32.gmra.mxu0 %v2293
    %v2295 = vpop.f32.mrf.mxu0
    %v2296 = vadd.f32 %v2201, %v2295
    %v2297 = vpop.f32.mrf.mxu0
    %v2298 = vadd.f32 %v2203, %v2297
    %2299 = vmatprep.mubr.f32.mxu0 0.0
    %v2300 = vand.u32 %v60, 4294901760
    %2301 = vmatmul.mubr.f32.gmra.mxu0 %v2300
    %v2302 = vpop.f32.mrf.mxu0
    %v2303 = vadd.f32 %v2208, %v2302
    %v2304 = vpop.f32.mrf.mxu0
    %v2305 = vadd.f32 %v2210, %v2304
    %2306 = vmatprep.mubr.f32.mxu0 0.0
    %v2307 = vand.u32 %v62, 4294901760
    %2308 = vmatmul.mubr.f32.gmra.mxu0 %v2307
    %v2309 = vpop.f32.mrf.mxu0
    %v2310 = vadd.f32 %v2215, %v2309
    %v2311 = vpop.f32.mrf.mxu0
    %v2312 = vadd.f32 %v2217, %v2311
    %2313 = vdwg.mxu0
    %v2314 = vmax.f32 %v2289, 0.0
    %v2315 = vmax.f32 %v2291, 0.0
    %v2316 = vmax.f32 %v2296, 0.0
    %v2317 = vmax.f32 %v2298, 0.0
    %v2318 = vmax.f32 %v2303, 0.0
    %v2319 = vmax.f32 %v2305, 0.0
    %v2320 = vmax.f32 %v2310, 0.0
    %v2321 = vmax.f32 %v2312, 0.0
    %2322 = vrot.lane.b32.xlu0 %v2314, 1
    %v2323 = vpop.permute.xlu0 %2322
    %2324 = vrot.lane.b32.xlu0 %v2316, 1
    %v2325 = vpop.permute.xlu0 %2324
    %2326 = vrot.lane.b32.xlu0 %v2318, 1
    %v2327 = vpop.permute.xlu0 %2326
    %2328 = vrot.lane.b32.xlu0 %v2320, 1
    %v2329 = vpop.permute.xlu0 %2328
    %2330 = vrot.lane.b32.xlu0 %v2315, 1
    %v2331 = vpop.permute.xlu0 %2330
    %2332 = vrot.lane.b32.xlu0 %v2317, 1
    %v2333 = vpop.permute.xlu0 %2332
    %2334 = vrot.lane.b32.xlu0 %v2319, 1
    %v2335 = vpop.permute.xlu0 %2334
    %2336 = vrot.lane.b32.xlu0 %v2321, 1
    %v2337 = vpop.permute.xlu0 %2336
    %v2338 = vsel %vm700, %v2323, %v2331
    %v2339 = vsel %vm700, %v2325, %v2333
    %v2340 = vsel %vm700, %v2327, %v2335
    %v2341 = vsel %vm700, %v2329, %v2337
    %v2342 = vsel %vm700, %v2331, %v2323
    %v2343 = vsel %vm700, %v2333, %v2325
    %v2344 = vsel %vm700, %v2335, %v2327
    %v2345 = vsel %vm700, %v2337, %v2329
    %v2346 = vsel %vm711, %v2342, 0.0
    %v2347 = vsel %vm712, %v2338, 0.0
    %v2348 = vsel %vm711, %v2343, 0.0
    %v2349 = vsel %vm712, %v2339, 0.0
    %v2350 = vsel %vm711, %v2344, 0.0
    %v2351 = vsel %vm712, %v2340, 0.0
    %v2352 = vsel %vm711, %v2345, 0.0
    %v2353 = vsel %vm712, %v2341, 0.0
    %2354 = vrot.lane.b32.xlu0 %v2314, 127
    %v2355 = vpop.permute.xlu0 %2354
    %2356 = vrot.lane.b32.xlu0 %v2316, 127
    %v2357 = vpop.permute.xlu0 %2356
    %2358 = vrot.lane.b32.xlu0 %v2318, 127
    %v2359 = vpop.permute.xlu0 %2358
    %2360 = vrot.lane.b32.xlu0 %v2320, 127
    %v2361 = vpop.permute.xlu0 %2360
    %2362 = vrot.lane.b32.xlu0 %v2315, 127
    %v2363 = vpop.permute.xlu0 %2362
    %2364 = vrot.lane.b32.xlu0 %v2317, 127
    %v2365 = vpop.permute.xlu0 %2364
    %2366 = vrot.lane.b32.xlu0 %v2319, 127
    %v2367 = vpop.permute.xlu0 %2366
    %2368 = vrot.lane.b32.xlu0 %v2321, 127
    %v2369 = vpop.permute.xlu0 %2368
    %v2370 = vsel %vm737, %v2355, %v2363
    %v2371 = vsel %vm737, %v2357, %v2365
    %v2372 = vsel %vm737, %v2359, %v2367
    %v2373 = vsel %vm737, %v2361, %v2369
    %v2374 = vsel %vm737, %v2363, %v2355
    %v2375 = vsel %vm737, %v2365, %v2357
    %v2376 = vsel %vm737, %v2367, %v2359
    %v2377 = vsel %vm737, %v2369, %v2361
    %v2378 = vsel %vm748, %v2370, 0.0
    %v2379 = vsel %vm749, %v2374, 0.0
    %v2380 = vsel %vm748, %v2371, 0.0
    %v2381 = vsel %vm749, %v2375, 0.0
    %v2382 = vsel %vm748, %v2372, 0.0
    %v2383 = vsel %vm749, %v2376, 0.0
    %v2384 = vsel %vm748, %v2373, 0.0
    %v2385 = vsel %vm749, %v2377, 0.0
    %v2386 = vmul.f32 %v2346, %v760
    %v2387 = vmul.f32 %v2347, %v760
    %v2388 = vmul.f32 %v2348, %v764
    %v2389 = vmul.f32 %v2349, %v764
    %v2390 = vmul.f32 %v2350, %v768
    %v2391 = vmul.f32 %v2351, %v768
    %v2392 = vmul.f32 %v2352, %v772
    %v2393 = vmul.f32 %v2353, %v772
    %v2394 = vmul.f32 %v2314, %v784
    %v2395 = vmul.f32 %v2315, %v784
    %v2396 = vmul.f32 %v2316, %v788
    %v2397 = vmul.f32 %v2317, %v788
    %v2398 = vmul.f32 %v2318, %v792
    %v2399 = vmul.f32 %v2319, %v792
    %v2400 = vmul.f32 %v2320, %v796
    %v2401 = vmul.f32 %v2321, %v796
    %v2402 = vadd.f32 %v2386, %v2394
    %v2403 = vadd.f32 %v2387, %v2395
    %v2404 = vadd.f32 %v2388, %v2396
    %v2405 = vadd.f32 %v2389, %v2397
    %v2406 = vadd.f32 %v2390, %v2398
    %v2407 = vadd.f32 %v2391, %v2399
    %v2408 = vadd.f32 %v2392, %v2400
    %v2409 = vadd.f32 %v2393, %v2401
    %v2410 = vmul.f32 %v2378, %v816
    %v2411 = vmul.f32 %v2379, %v816
    %v2412 = vmul.f32 %v2380, %v820
    %v2413 = vmul.f32 %v2381, %v820
    %v2414 = vmul.f32 %v2382, %v824
    %v2415 = vmul.f32 %v2383, %v824
    %v2416 = vmul.f32 %v2384, %v828
    %v2417 = vmul.f32 %v2385, %v828
    %v2418 = vadd.f32 %v2402, %v2410
    %v2419 = vadd.f32 %v2403, %v2411
    %v2420 = vadd.f32 %v2404, %v2412
    %v2421 = vadd.f32 %v2405, %v2413
    %v2422 = vadd.f32 %v2406, %v2414
    %v2423 = vadd.f32 %v2407, %v2415
    %v2424 = vadd.f32 %v2408, %v2416
    %v2425 = vadd.f32 %v2409, %v2417
    %v2426 = vmul.f32 %v2346, %v848
    %v2427 = vmul.f32 %v2347, %v848
    %v2428 = vmul.f32 %v2348, %v852
    %v2429 = vmul.f32 %v2349, %v852
    %v2430 = vmul.f32 %v2350, %v856
    %v2431 = vmul.f32 %v2351, %v856
    %v2432 = vmul.f32 %v2352, %v860
    %v2433 = vmul.f32 %v2353, %v860
    %v2434 = vmul.f32 %v2314, %v872
    %v2435 = vmul.f32 %v2315, %v872
    %v2436 = vmul.f32 %v2316, %v876
    %v2437 = vmul.f32 %v2317, %v876
    %v2438 = vmul.f32 %v2318, %v880
    %v2439 = vmul.f32 %v2319, %v880
    %v2440 = vmul.f32 %v2320, %v884
    %v2441 = vmul.f32 %v2321, %v884
    %v2442 = vadd.f32 %v2426, %v2434
    %v2443 = vadd.f32 %v2427, %v2435
    %v2444 = vadd.f32 %v2428, %v2436
    %v2445 = vadd.f32 %v2429, %v2437
    %v2446 = vadd.f32 %v2430, %v2438
    %v2447 = vadd.f32 %v2431, %v2439
    %v2448 = vadd.f32 %v2432, %v2440
    %v2449 = vadd.f32 %v2433, %v2441
    %v2450 = vmul.f32 %v2378, %v904
    %v2451 = vmul.f32 %v2379, %v904
    %v2452 = vmul.f32 %v2380, %v908
    %v2453 = vmul.f32 %v2381, %v908
    %v2454 = vmul.f32 %v2382, %v912
    %v2455 = vmul.f32 %v2383, %v912
    %v2456 = vmul.f32 %v2384, %v916
    %v2457 = vmul.f32 %v2385, %v916
    %v2458 = vadd.f32 %v2442, %v2450
    %v2459 = vadd.f32 %v2443, %v2451
    %v2460 = vadd.f32 %v2444, %v2452
    %v2461 = vadd.f32 %v2445, %v2453
    %v2462 = vadd.f32 %v2446, %v2454
    %v2463 = vadd.f32 %v2447, %v2455
    %v2464 = vadd.f32 %v2448, %v2456
    %v2465 = vadd.f32 %v2449, %v2457
    %v2466 = vmul.f32 %v2346, %v936
    %v2467 = vmul.f32 %v2347, %v936
    %v2468 = vmul.f32 %v2348, %v940
    %v2469 = vmul.f32 %v2349, %v940
    %v2470 = vmul.f32 %v2350, %v944
    %v2471 = vmul.f32 %v2351, %v944
    %v2472 = vmul.f32 %v2352, %v948
    %v2473 = vmul.f32 %v2353, %v948
    %v2474 = vmul.f32 %v2314, %v960
    %v2475 = vmul.f32 %v2315, %v960
    %v2476 = vmul.f32 %v2316, %v964
    %v2477 = vmul.f32 %v2317, %v964
    %v2478 = vmul.f32 %v2318, %v968
    %v2479 = vmul.f32 %v2319, %v968
    %v2480 = vmul.f32 %v2320, %v972
    %v2481 = vmul.f32 %v2321, %v972
    %v2482 = vadd.f32 %v2466, %v2474
    %v2483 = vadd.f32 %v2467, %v2475
    %v2484 = vadd.f32 %v2468, %v2476
    %v2485 = vadd.f32 %v2469, %v2477
    %v2486 = vadd.f32 %v2470, %v2478
    %v2487 = vadd.f32 %v2471, %v2479
    %v2488 = vadd.f32 %v2472, %v2480
    %v2489 = vadd.f32 %v2473, %v2481
    %v2490 = vmul.f32 %v2378, %v992
    %v2491 = vmul.f32 %v2379, %v992
    %v2492 = vmul.f32 %v2380, %v996
    %v2493 = vmul.f32 %v2381, %v996
    %v2494 = vmul.f32 %v2382, %v1000
    %v2495 = vmul.f32 %v2383, %v1000
    %v2496 = vmul.f32 %v2384, %v1004
    %v2497 = vmul.f32 %v2385, %v1004
    %v2498 = vadd.f32 %v2482, %v2490
    %v2499 = vadd.f32 %v2483, %v2491
    %v2500 = vadd.f32 %v2484, %v2492
    %v2501 = vadd.f32 %v2485, %v2493
    %v2502 = vadd.f32 %v2486, %v2494
    %v2503 = vadd.f32 %v2487, %v2495
    %v2504 = vadd.f32 %v2488, %v2496
    %v2505 = vadd.f32 %v2489, %v2497
    %2506 = vrot.lane.b32.xlu0 %v2418, 16
    %v2507 = vpop.permute.xlu0 %2506
    %2508 = vrot.lane.b32.xlu0 %v2420, 16
    %v2509 = vpop.permute.xlu0 %2508
    %2510 = vrot.lane.b32.xlu0 %v2422, 16
    %v2511 = vpop.permute.xlu0 %2510
    %2512 = vrot.lane.b32.xlu0 %v2424, 16
    %v2513 = vpop.permute.xlu0 %2512
    %2514 = vrot.lane.b32.xlu0 %v2419, 16
    %v2515 = vpop.permute.xlu0 %2514
    %2516 = vrot.lane.b32.xlu0 %v2421, 16
    %v2517 = vpop.permute.xlu0 %2516
    %2518 = vrot.lane.b32.xlu0 %v2423, 16
    %v2519 = vpop.permute.xlu0 %2518
    %2520 = vrot.lane.b32.xlu0 %v2425, 16
    %v2521 = vpop.permute.xlu0 %2520
    %v2522 = vsel %vm1038, %v2507, %v2515
    %v2523 = vsel %vm1038, %v2509, %v2517
    %v2524 = vsel %vm1038, %v2511, %v2519
    %v2525 = vsel %vm1038, %v2513, %v2521
    %v2526 = vsel %vm1038, %v2515, %v2507
    %v2527 = vsel %vm1038, %v2517, %v2509
    %v2528 = vsel %vm1038, %v2519, %v2511
    %v2529 = vsel %vm1038, %v2521, %v2513
    %v2530 = vsel %vm1049, %v2526, 0.0
    %v2531 = vsel %vm1050, %v2522, 0.0
    %v2532 = vsel %vm1049, %v2527, 0.0
    %v2533 = vsel %vm1050, %v2523, 0.0
    %v2534 = vsel %vm1049, %v2528, 0.0
    %v2535 = vsel %vm1050, %v2524, 0.0
    %v2536 = vsel %vm1049, %v2529, 0.0
    %v2537 = vsel %vm1050, %v2525, 0.0
    %v2538 = vadd.f32 %v2458, %v2530
    %v2539 = vadd.f32 %v2459, %v2531
    %v2540 = vadd.f32 %v2460, %v2532
    %v2541 = vadd.f32 %v2461, %v2533
    %v2542 = vadd.f32 %v2462, %v2534
    %v2543 = vadd.f32 %v2463, %v2535
    %v2544 = vadd.f32 %v2464, %v2536
    %v2545 = vadd.f32 %v2465, %v2537
    %2546 = vrot.lane.b32.xlu0 %v2498, 112
    %v2547 = vpop.permute.xlu0 %2546
    %2548 = vrot.lane.b32.xlu0 %v2500, 112
    %v2549 = vpop.permute.xlu0 %2548
    %2550 = vrot.lane.b32.xlu0 %v2502, 112
    %v2551 = vpop.permute.xlu0 %2550
    %2552 = vrot.lane.b32.xlu0 %v2504, 112
    %v2553 = vpop.permute.xlu0 %2552
    %2554 = vrot.lane.b32.xlu0 %v2499, 112
    %v2555 = vpop.permute.xlu0 %2554
    %2556 = vrot.lane.b32.xlu0 %v2501, 112
    %v2557 = vpop.permute.xlu0 %2556
    %2558 = vrot.lane.b32.xlu0 %v2503, 112
    %v2559 = vpop.permute.xlu0 %2558
    %2560 = vrot.lane.b32.xlu0 %v2505, 112
    %v2561 = vpop.permute.xlu0 %2560
    %v2562 = vsel %vm1083, %v2547, %v2555
    %v2563 = vsel %vm1083, %v2549, %v2557
    %v2564 = vsel %vm1083, %v2551, %v2559
    %v2565 = vsel %vm1083, %v2553, %v2561
    %v2566 = vsel %vm1083, %v2555, %v2547
    %v2567 = vsel %vm1083, %v2557, %v2549
    %v2568 = vsel %vm1083, %v2559, %v2551
    %v2569 = vsel %vm1083, %v2561, %v2553
    %v2570 = vsel %vm1094, %v2562, 0.0
    %v2571 = vsel %vm1095, %v2566, 0.0
    %v2572 = vsel %vm1094, %v2563, 0.0
    %v2573 = vsel %vm1095, %v2567, 0.0
    %v2574 = vsel %vm1094, %v2564, 0.0
    %v2575 = vsel %vm1095, %v2568, 0.0
    %v2576 = vsel %vm1094, %v2565, 0.0
    %v2577 = vsel %vm1095, %v2569, 0.0
    %v2578 = vadd.f32 %v2538, %v2570
    %v2579 = vadd.f32 %v2539, %v2571
    %v2580 = vadd.f32 %v2540, %v2572
    %v2581 = vadd.f32 %v2541, %v2573
    %v2582 = vadd.f32 %v2542, %v2574
    %v2583 = vadd.f32 %v2543, %v2575
    %v2584 = vadd.f32 %v2544, %v2576
    %v2585 = vadd.f32 %v2545, %v2577
    %v2586 = vadd.f32 %v2578, %v1114
    %v2587 = vadd.f32 %v2579, %v1114
    %v2588 = vadd.f32 %v2580, %v1118
    %v2589 = vadd.f32 %v2581, %v1118
    %v2590 = vadd.f32 %v2582, %v1122
    %v2591 = vadd.f32 %v2583, %v1122
    %v2592 = vadd.f32 %v2584, %v1126
    %v2593 = vadd.f32 %v2585, %v1126
    %v2594 = vmax.f32 %v2586, 0.0
    %v2595 = vmax.f32 %v2587, 0.0
    %v2596 = vmax.f32 %v2588, 0.0
    %v2597 = vmax.f32 %v2589, 0.0
    %v2598 = vmax.f32 %v2590, 0.0
    %v2599 = vmax.f32 %v2591, 0.0
    %v2600 = vmax.f32 %v2592, 0.0
    %v2601 = vmax.f32 %v2593, 0.0
    %2602 = vmatprep.subr.mxu0 0.0
    %2603 = vmatpush1.msra.mxu0 0.0
    %2604 = vmatprep.subr.mxu0 0.0
    %2605 = vmatpush1.msra.mxu0 0.0
    %2606 = vmatprep.subr.mxu0 0.0
    %2607 = vmatpush1.msra.mxu0 0.0
    %2608 = vmatprep.subr.mxu0 0.0
    %2609 = vmatpush1.msra.mxu0 0.0
    %2610 = vmatprep.subr.mxu0 0.0
    %2611 = vmatpush1.msra.mxu0 0.0
    %2612 = vmatprep.subr.mxu0 0.0
    %2613 = vmatpush1.msra.mxu0 0.0
    %2614 = vmatprep.subr.mxu0 0.0
    %2615 = vmatpush1.msra.mxu0 0.0
    %2616 = vmatprep.subr.mxu0 0.0
    %2617 = vmatpush1.msra.mxu0 0.0
    %2618 = vmatprep.subr.mxu0 0.0
    %2619 = vmatpush1.msra.mxu0 0.0
    %2620 = vmatprep.subr.mxu0 0.0
    %2621 = vmatpush1.msra.mxu0 0.0
    %2622 = vmatprep.subr.mxu0 0.0
    %2623 = vmatpush1.msra.mxu0 0.0
    %2624 = vmatprep.subr.mxu0 0.0
    %2625 = vmatpush1.msra.mxu0 0.0
    %v2626 = vand.u32 %v2601, 4294901760
    %2627 = vmatprep.subr.mxu0 %v2626
    %v2628 = vand.u32 %v2600, 4294901760
    %2629 = vmatpush1.msra.mxu0 %v2628
    %v2630 = vand.u32 %v2599, 4294901760
    %2631 = vmatprep.subr.mxu0 %v2630
    %v2632 = vand.u32 %v2598, 4294901760
    %2633 = vmatpush1.msra.mxu0 %v2632
    %v2634 = vand.u32 %v2597, 4294901760
    %2635 = vmatprep.subr.mxu0 %v2634
    %v2636 = vand.u32 %v2596, 4294901760
    %2637 = vmatpush1.msra.mxu0 %v2636
    %v2638 = vand.u32 %v2595, 4294901760
    %2639 = vmatprep.subr.mxu0 %v2638
    %v2640 = vand.u32 %v2594, 4294901760
    %2641 = vmatpush1.msra.mxu0 %v2640
    %2642 = vmatprep.subr.mxu0 0.0
    %2643 = vmatpush2.msra.mxu0 0.0
    %2644 = vmatprep.subr.mxu0 0.0
    %2645 = vmatpush2.msra.mxu0 0.0
    %2646 = vmatprep.subr.mxu0 0.0
    %2647 = vmatpush2.msra.mxu0 0.0
    %2648 = vmatprep.subr.mxu0 0.0
    %2649 = vmatpush2.msra.mxu0 0.0
    %2650 = vmatprep.subr.mxu0 0.0
    %2651 = vmatpush2.msra.mxu0 0.0
    %2652 = vmatprep.subr.mxu0 0.0
    %2653 = vmatpush2.msra.mxu0 0.0
    %2654 = vmatprep.subr.mxu0 0.0
    %2655 = vmatpush2.msra.mxu0 0.0
    %2656 = vmatprep.subr.mxu0 0.0
    %2657 = vmatpush2.msra.mxu0 0.0
    %2658 = vmatprep.subr.mxu0 0.0
    %2659 = vmatpush2.msra.mxu0 0.0
    %2660 = vmatprep.subr.mxu0 0.0
    %2661 = vmatpush2.msra.mxu0 0.0
    %2662 = vmatprep.subr.mxu0 0.0
    %2663 = vmatpush2.msra.mxu0 0.0
    %2664 = vmatprep.subr.mxu0 0.0
    %2665 = vmatpush2.msra.mxu0 0.0
    %2666 = vmatprep.subr.mxu0 0.0
    %2667 = vmatpush2.msra.mxu0 0.0
    %2668 = vmatprep.subr.mxu0 0.0
    %2669 = vmatpush2.msra.mxu0 0.0
    %2670 = vmatprep.subr.mxu0 0.0
    %2671 = vmatpush2.msra.mxu0 0.0
    %2672 = vmatprep.subr.mxu0 0.0
    %2673 = vmatpush2.msra.mxu0 0.0
    %2674 = vmatprep.mubr.f32.mxu0 0.0
    %v2675 = vand.u32 %v1150, 4294901760
    %v2676 = vsub.f32 %v1150, %v2675
    %v2677 = vand.u32 %v2676, 4294901760
    %v2678 = vsub.f32 %v2676, %v2677
    %v2679 = vand.u32 %v2678, 4294901760
    %2680 = vmatmul.mubr.f32.gmra.mxu0 %v2679
    %v2681 = vpop.f32.mrf.mxu0
    %v2682 = vadd.f32 %v1147, %v2681
    %v2683 = vpop.f32.mrf.mxu0
    %v2684 = vadd.f32 %v1147, %v2683
    %2685 = vdwg.mxu0
    %2686 = vmatprep.subr.mxu0 0.0
    %2687 = vmatpush1.msra.mxu0 0.0
    %2688 = vmatprep.subr.mxu0 0.0
    %2689 = vmatpush1.msra.mxu0 0.0
    %2690 = vmatprep.subr.mxu0 0.0
    %2691 = vmatpush1.msra.mxu0 0.0
    %2692 = vmatprep.subr.mxu0 0.0
    %2693 = vmatpush1.msra.mxu0 0.0
    %2694 = vmatprep.subr.mxu0 0.0
    %2695 = vmatpush1.msra.mxu0 0.0
    %2696 = vmatprep.subr.mxu0 0.0
    %2697 = vmatpush1.msra.mxu0 0.0
    %2698 = vmatprep.subr.mxu0 0.0
    %2699 = vmatpush1.msra.mxu0 0.0
    %2700 = vmatprep.subr.mxu0 0.0
    %2701 = vmatpush1.msra.mxu0 0.0
    %2702 = vmatprep.subr.mxu0 0.0
    %2703 = vmatpush1.msra.mxu0 0.0
    %2704 = vmatprep.subr.mxu0 0.0
    %2705 = vmatpush1.msra.mxu0 0.0
    %2706 = vmatprep.subr.mxu0 0.0
    %2707 = vmatpush1.msra.mxu0 0.0
    %2708 = vmatprep.subr.mxu0 0.0
    %2709 = vmatpush1.msra.mxu0 0.0
    %v2710 = vand.u32 %v2601, 4294901760
    %v2711 = vsub.f32 %v2601, %v2710
    %v2712 = vand.u32 %v2711, 4294901760
    %v2713 = vsub.f32 %v2711, %v2712
    %v2714 = vand.u32 %v2713, 4294901760
    %2715 = vmatprep.subr.mxu0 %v2714
    %v2716 = vand.u32 %v2600, 4294901760
    %v2717 = vsub.f32 %v2600, %v2716
    %v2718 = vand.u32 %v2717, 4294901760
    %v2719 = vsub.f32 %v2717, %v2718
    %v2720 = vand.u32 %v2719, 4294901760
    %2721 = vmatpush1.msra.mxu0 %v2720
    %v2722 = vand.u32 %v2599, 4294901760
    %v2723 = vsub.f32 %v2599, %v2722
    %v2724 = vand.u32 %v2723, 4294901760
    %v2725 = vsub.f32 %v2723, %v2724
    %v2726 = vand.u32 %v2725, 4294901760
    %2727 = vmatprep.subr.mxu0 %v2726
    %v2728 = vand.u32 %v2598, 4294901760
    %v2729 = vsub.f32 %v2598, %v2728
    %v2730 = vand.u32 %v2729, 4294901760
    %v2731 = vsub.f32 %v2729, %v2730
    %v2732 = vand.u32 %v2731, 4294901760
    %2733 = vmatpush1.msra.mxu0 %v2732
    %v2734 = vand.u32 %v2597, 4294901760
    %v2735 = vsub.f32 %v2597, %v2734
    %v2736 = vand.u32 %v2735, 4294901760
    %v2737 = vsub.f32 %v2735, %v2736
    %v2738 = vand.u32 %v2737, 4294901760
    %2739 = vmatprep.subr.mxu0 %v2738
    %v2740 = vand.u32 %v2596, 4294901760
    %v2741 = vsub.f32 %v2596, %v2740
    %v2742 = vand.u32 %v2741, 4294901760
    %v2743 = vsub.f32 %v2741, %v2742
    %v2744 = vand.u32 %v2743, 4294901760
    %2745 = vmatpush1.msra.mxu0 %v2744
    %v2746 = vand.u32 %v2595, 4294901760
    %v2747 = vsub.f32 %v2595, %v2746
    %v2748 = vand.u32 %v2747, 4294901760
    %v2749 = vsub.f32 %v2747, %v2748
    %v2750 = vand.u32 %v2749, 4294901760
    %2751 = vmatprep.subr.mxu0 %v2750
    %v2752 = vand.u32 %v2594, 4294901760
    %v2753 = vsub.f32 %v2594, %v2752
    %v2754 = vand.u32 %v2753, 4294901760
    %v2755 = vsub.f32 %v2753, %v2754
    %v2756 = vand.u32 %v2755, 4294901760
    %2757 = vmatpush1.msra.mxu0 %v2756
    %2758 = vmatprep.subr.mxu0 0.0
    %2759 = vmatpush2.msra.mxu0 0.0
    %2760 = vmatprep.subr.mxu0 0.0
    %2761 = vmatpush2.msra.mxu0 0.0
    %2762 = vmatprep.subr.mxu0 0.0
    %2763 = vmatpush2.msra.mxu0 0.0
    %2764 = vmatprep.subr.mxu0 0.0
    %2765 = vmatpush2.msra.mxu0 0.0
    %2766 = vmatprep.subr.mxu0 0.0
    %2767 = vmatpush2.msra.mxu0 0.0
    %2768 = vmatprep.subr.mxu0 0.0
    %2769 = vmatpush2.msra.mxu0 0.0
    %2770 = vmatprep.subr.mxu0 0.0
    %2771 = vmatpush2.msra.mxu0 0.0
    %2772 = vmatprep.subr.mxu0 0.0
    %2773 = vmatpush2.msra.mxu0 0.0
    %2774 = vmatprep.subr.mxu0 0.0
    %2775 = vmatpush2.msra.mxu0 0.0
    %2776 = vmatprep.subr.mxu0 0.0
    %2777 = vmatpush2.msra.mxu0 0.0
    %2778 = vmatprep.subr.mxu0 0.0
    %2779 = vmatpush2.msra.mxu0 0.0
    %2780 = vmatprep.subr.mxu0 0.0
    %2781 = vmatpush2.msra.mxu0 0.0
    %2782 = vmatprep.subr.mxu0 0.0
    %2783 = vmatpush2.msra.mxu0 0.0
    %2784 = vmatprep.subr.mxu0 0.0
    %2785 = vmatpush2.msra.mxu0 0.0
    %2786 = vmatprep.subr.mxu0 0.0
    %2787 = vmatpush2.msra.mxu0 0.0
    %2788 = vmatprep.subr.mxu0 0.0
    %2789 = vmatpush2.msra.mxu0 0.0
    %2790 = vmatprep.mubr.f32.mxu0 0.0
    %v2791 = vand.u32 %v1150, 4294901760
    %2792 = vmatmul.mubr.f32.gmra.mxu0 %v2791
    %v2793 = vpop.f32.mrf.mxu0
    %v2794 = vadd.f32 %v2682, %v2793
    %v2795 = vpop.f32.mrf.mxu0
    %v2796 = vadd.f32 %v2684, %v2795
    %2797 = vdwg.mxu0
    %2798 = vmatprep.subr.mxu0 0.0
    %2799 = vmatpush1.msra.mxu0 0.0
    %2800 = vmatprep.subr.mxu0 0.0
    %2801 = vmatpush1.msra.mxu0 0.0
    %2802 = vmatprep.subr.mxu0 0.0
    %2803 = vmatpush1.msra.mxu0 0.0
    %2804 = vmatprep.subr.mxu0 0.0
    %2805 = vmatpush1.msra.mxu0 0.0
    %2806 = vmatprep.subr.mxu0 0.0
    %2807 = vmatpush1.msra.mxu0 0.0
    %2808 = vmatprep.subr.mxu0 0.0
    %2809 = vmatpush1.msra.mxu0 0.0
    %2810 = vmatprep.subr.mxu0 0.0
    %2811 = vmatpush1.msra.mxu0 0.0
    %2812 = vmatprep.subr.mxu0 0.0
    %2813 = vmatpush1.msra.mxu0 0.0
    %2814 = vmatprep.subr.mxu0 0.0
    %2815 = vmatpush1.msra.mxu0 0.0
    %2816 = vmatprep.subr.mxu0 0.0
    %2817 = vmatpush1.msra.mxu0 0.0
    %2818 = vmatprep.subr.mxu0 0.0
    %2819 = vmatpush1.msra.mxu0 0.0
    %2820 = vmatprep.subr.mxu0 0.0
    %2821 = vmatpush1.msra.mxu0 0.0
    %v2822 = vand.u32 %v2601, 4294901760
    %v2823 = vsub.f32 %v2601, %v2822
    %2824 = vmatprep.subr.mxu0 %v2823
    %v2825 = vand.u32 %v2600, 4294901760
    %v2826 = vsub.f32 %v2600, %v2825
    %2827 = vmatpush1.msra.mxu0 %v2826
    %v2828 = vand.u32 %v2599, 4294901760
    %v2829 = vsub.f32 %v2599, %v2828
    %2830 = vmatprep.subr.mxu0 %v2829
    %v2831 = vand.u32 %v2598, 4294901760
    %v2832 = vsub.f32 %v2598, %v2831
    %2833 = vmatpush1.msra.mxu0 %v2832
    %v2834 = vand.u32 %v2597, 4294901760
    %v2835 = vsub.f32 %v2597, %v2834
    %2836 = vmatprep.subr.mxu0 %v2835
    %v2837 = vand.u32 %v2596, 4294901760
    %v2838 = vsub.f32 %v2596, %v2837
    %2839 = vmatpush1.msra.mxu0 %v2838
    %v2840 = vand.u32 %v2595, 4294901760
    %v2841 = vsub.f32 %v2595, %v2840
    %2842 = vmatprep.subr.mxu0 %v2841
    %v2843 = vand.u32 %v2594, 4294901760
    %v2844 = vsub.f32 %v2594, %v2843
    %2845 = vmatpush1.msra.mxu0 %v2844
    %2846 = vmatprep.subr.mxu0 0.0
    %2847 = vmatpush2.msra.mxu0 0.0
    %2848 = vmatprep.subr.mxu0 0.0
    %2849 = vmatpush2.msra.mxu0 0.0
    %2850 = vmatprep.subr.mxu0 0.0
    %2851 = vmatpush2.msra.mxu0 0.0
    %2852 = vmatprep.subr.mxu0 0.0
    %2853 = vmatpush2.msra.mxu0 0.0
    %2854 = vmatprep.subr.mxu0 0.0
    %2855 = vmatpush2.msra.mxu0 0.0
    %2856 = vmatprep.subr.mxu0 0.0
    %2857 = vmatpush2.msra.mxu0 0.0
    %2858 = vmatprep.subr.mxu0 0.0
    %2859 = vmatpush2.msra.mxu0 0.0
    %2860 = vmatprep.subr.mxu0 0.0
    %2861 = vmatpush2.msra.mxu0 0.0
    %2862 = vmatprep.subr.mxu0 0.0
    %2863 = vmatpush2.msra.mxu0 0.0
    %2864 = vmatprep.subr.mxu0 0.0
    %2865 = vmatpush2.msra.mxu0 0.0
    %2866 = vmatprep.subr.mxu0 0.0
    %2867 = vmatpush2.msra.mxu0 0.0
    %2868 = vmatprep.subr.mxu0 0.0
    %2869 = vmatpush2.msra.mxu0 0.0
    %2870 = vmatprep.subr.mxu0 0.0
    %2871 = vmatpush2.msra.mxu0 0.0
    %2872 = vmatprep.subr.mxu0 0.0
    %2873 = vmatpush2.msra.mxu0 0.0
    %2874 = vmatprep.subr.mxu0 0.0
    %2875 = vmatpush2.msra.mxu0 0.0
    %2876 = vmatprep.subr.mxu0 0.0
    %2877 = vmatpush2.msra.mxu0 0.0
    %2878 = vmatprep.mubr.f32.mxu0 0.0
    %v2879 = vand.u32 %v1150, 4294901760
    %v2880 = vsub.f32 %v1150, %v2879
    %2881 = vmatmul.mubr.f32.gmra.mxu0 %v2880
    %v2882 = vpop.f32.mrf.mxu0
    %v2883 = vadd.f32 %v2794, %v2882
    %v2884 = vpop.f32.mrf.mxu0
    %v2885 = vadd.f32 %v2796, %v2884
    %2886 = vdwg.mxu0
    %2887 = vmatprep.subr.mxu0 0.0
    %2888 = vmatpush1.msra.mxu0 0.0
    %2889 = vmatprep.subr.mxu0 0.0
    %2890 = vmatpush1.msra.mxu0 0.0
    %2891 = vmatprep.subr.mxu0 0.0
    %2892 = vmatpush1.msra.mxu0 0.0
    %2893 = vmatprep.subr.mxu0 0.0
    %2894 = vmatpush1.msra.mxu0 0.0
    %2895 = vmatprep.subr.mxu0 0.0
    %2896 = vmatpush1.msra.mxu0 0.0
    %2897 = vmatprep.subr.mxu0 0.0
    %2898 = vmatpush1.msra.mxu0 0.0
    %2899 = vmatprep.subr.mxu0 0.0
    %2900 = vmatpush1.msra.mxu0 0.0
    %2901 = vmatprep.subr.mxu0 0.0
    %2902 = vmatpush1.msra.mxu0 0.0
    %2903 = vmatprep.subr.mxu0 0.0
    %2904 = vmatpush1.msra.mxu0 0.0
    %2905 = vmatprep.subr.mxu0 0.0
    %2906 = vmatpush1.msra.mxu0 0.0
    %2907 = vmatprep.subr.mxu0 0.0
    %2908 = vmatpush1.msra.mxu0 0.0
    %2909 = vmatprep.subr.mxu0 0.0
    %2910 = vmatpush1.msra.mxu0 0.0
    %v2911 = vand.u32 %v2601, 4294901760
    %2912 = vmatprep.subr.mxu0 %v2911
    %v2913 = vand.u32 %v2600, 4294901760
    %2914 = vmatpush1.msra.mxu0 %v2913
    %v2915 = vand.u32 %v2599, 4294901760
    %2916 = vmatprep.subr.mxu0 %v2915
    %v2917 = vand.u32 %v2598, 4294901760
    %2918 = vmatpush1.msra.mxu0 %v2917
    %v2919 = vand.u32 %v2597, 4294901760
    %2920 = vmatprep.subr.mxu0 %v2919
    %v2921 = vand.u32 %v2596, 4294901760
    %2922 = vmatpush1.msra.mxu0 %v2921
    %v2923 = vand.u32 %v2595, 4294901760
    %2924 = vmatprep.subr.mxu0 %v2923
    %v2925 = vand.u32 %v2594, 4294901760
    %2926 = vmatpush1.msra.mxu0 %v2925
    %2927 = vmatprep.subr.mxu0 0.0
    %2928 = vmatpush2.msra.mxu0 0.0
    %2929 = vmatprep.subr.mxu0 0.0
    %2930 = vmatpush2.msra.mxu0 0.0
    %2931 = vmatprep.subr.mxu0 0.0
    %2932 = vmatpush2.msra.mxu0 0.0
    %2933 = vmatprep.subr.mxu0 0.0
    %2934 = vmatpush2.msra.mxu0 0.0
    %2935 = vmatprep.subr.mxu0 0.0
    %2936 = vmatpush2.msra.mxu0 0.0
    %2937 = vmatprep.subr.mxu0 0.0
    %2938 = vmatpush2.msra.mxu0 0.0
    %2939 = vmatprep.subr.mxu0 0.0
    %2940 = vmatpush2.msra.mxu0 0.0
    %2941 = vmatprep.subr.mxu0 0.0
    %2942 = vmatpush2.msra.mxu0 0.0
    %2943 = vmatprep.subr.mxu0 0.0
    %2944 = vmatpush2.msra.mxu0 0.0
    %2945 = vmatprep.subr.mxu0 0.0
    %2946 = vmatpush2.msra.mxu0 0.0
    %2947 = vmatprep.subr.mxu0 0.0
    %2948 = vmatpush2.msra.mxu0 0.0
    %2949 = vmatprep.subr.mxu0 0.0
    %2950 = vmatpush2.msra.mxu0 0.0
    %2951 = vmatprep.subr.mxu0 0.0
    %2952 = vmatpush2.msra.mxu0 0.0
    %2953 = vmatprep.subr.mxu0 0.0
    %2954 = vmatpush2.msra.mxu0 0.0
    %2955 = vmatprep.subr.mxu0 0.0
    %2956 = vmatpush2.msra.mxu0 0.0
    %2957 = vmatprep.subr.mxu0 0.0
    %2958 = vmatpush2.msra.mxu0 0.0
    %2959 = vmatprep.mubr.f32.mxu0 0.0
    %v2960 = vand.u32 %v1150, 4294901760
    %v2961 = vsub.f32 %v1150, %v2960
    %v2962 = vand.u32 %v2961, 4294901760
    %2963 = vmatmul.mubr.f32.gmra.mxu0 %v2962
    %v2964 = vpop.f32.mrf.mxu0
    %v2965 = vadd.f32 %v2883, %v2964
    %v2966 = vpop.f32.mrf.mxu0
    %v2967 = vadd.f32 %v2885, %v2966
    %2968 = vdwg.mxu0
    %2969 = vmatprep.subr.mxu0 0.0
    %2970 = vmatpush1.msra.mxu0 0.0
    %2971 = vmatprep.subr.mxu0 0.0
    %2972 = vmatpush1.msra.mxu0 0.0
    %2973 = vmatprep.subr.mxu0 0.0
    %2974 = vmatpush1.msra.mxu0 0.0
    %2975 = vmatprep.subr.mxu0 0.0
    %2976 = vmatpush1.msra.mxu0 0.0
    %2977 = vmatprep.subr.mxu0 0.0
    %2978 = vmatpush1.msra.mxu0 0.0
    %2979 = vmatprep.subr.mxu0 0.0
    %2980 = vmatpush1.msra.mxu0 0.0
    %2981 = vmatprep.subr.mxu0 0.0
    %2982 = vmatpush1.msra.mxu0 0.0
    %2983 = vmatprep.subr.mxu0 0.0
    %2984 = vmatpush1.msra.mxu0 0.0
    %2985 = vmatprep.subr.mxu0 0.0
    %2986 = vmatpush1.msra.mxu0 0.0
    %2987 = vmatprep.subr.mxu0 0.0
    %2988 = vmatpush1.msra.mxu0 0.0
    %2989 = vmatprep.subr.mxu0 0.0
    %2990 = vmatpush1.msra.mxu0 0.0
    %2991 = vmatprep.subr.mxu0 0.0
    %2992 = vmatpush1.msra.mxu0 0.0
    %v2993 = vand.u32 %v2601, 4294901760
    %v2994 = vsub.f32 %v2601, %v2993
    %v2995 = vand.u32 %v2994, 4294901760
    %2996 = vmatprep.subr.mxu0 %v2995
    %v2997 = vand.u32 %v2600, 4294901760
    %v2998 = vsub.f32 %v2600, %v2997
    %v2999 = vand.u32 %v2998, 4294901760
    %3000 = vmatpush1.msra.mxu0 %v2999
    %v3001 = vand.u32 %v2599, 4294901760
    %v3002 = vsub.f32 %v2599, %v3001
    %v3003 = vand.u32 %v3002, 4294901760
    %3004 = vmatprep.subr.mxu0 %v3003
    %v3005 = vand.u32 %v2598, 4294901760
    %v3006 = vsub.f32 %v2598, %v3005
    %v3007 = vand.u32 %v3006, 4294901760
    %3008 = vmatpush1.msra.mxu0 %v3007
    %v3009 = vand.u32 %v2597, 4294901760
    %v3010 = vsub.f32 %v2597, %v3009
    %v3011 = vand.u32 %v3010, 4294901760
    %3012 = vmatprep.subr.mxu0 %v3011
    %v3013 = vand.u32 %v2596, 4294901760
    %v3014 = vsub.f32 %v2596, %v3013
    %v3015 = vand.u32 %v3014, 4294901760
    %3016 = vmatpush1.msra.mxu0 %v3015
    %v3017 = vand.u32 %v2595, 4294901760
    %v3018 = vsub.f32 %v2595, %v3017
    %v3019 = vand.u32 %v3018, 4294901760
    %3020 = vmatprep.subr.mxu0 %v3019
    %v3021 = vand.u32 %v2594, 4294901760
    %v3022 = vsub.f32 %v2594, %v3021
    %v3023 = vand.u32 %v3022, 4294901760
    %3024 = vmatpush1.msra.mxu0 %v3023
    %3025 = vmatprep.subr.mxu0 0.0
    %3026 = vmatpush2.msra.mxu0 0.0
    %3027 = vmatprep.subr.mxu0 0.0
    %3028 = vmatpush2.msra.mxu0 0.0
    %3029 = vmatprep.subr.mxu0 0.0
    %3030 = vmatpush2.msra.mxu0 0.0
    %3031 = vmatprep.subr.mxu0 0.0
    %3032 = vmatpush2.msra.mxu0 0.0
    %3033 = vmatprep.subr.mxu0 0.0
    %3034 = vmatpush2.msra.mxu0 0.0
    %3035 = vmatprep.subr.mxu0 0.0
    %3036 = vmatpush2.msra.mxu0 0.0
    %3037 = vmatprep.subr.mxu0 0.0
    %3038 = vmatpush2.msra.mxu0 0.0
    %3039 = vmatprep.subr.mxu0 0.0
    %3040 = vmatpush2.msra.mxu0 0.0
    %3041 = vmatprep.subr.mxu0 0.0
    %3042 = vmatpush2.msra.mxu0 0.0
    %3043 = vmatprep.subr.mxu0 0.0
    %3044 = vmatpush2.msra.mxu0 0.0
    %3045 = vmatprep.subr.mxu0 0.0
    %3046 = vmatpush2.msra.mxu0 0.0
    %3047 = vmatprep.subr.mxu0 0.0
    %3048 = vmatpush2.msra.mxu0 0.0
    %3049 = vmatprep.subr.mxu0 0.0
    %3050 = vmatpush2.msra.mxu0 0.0
    %3051 = vmatprep.subr.mxu0 0.0
    %3052 = vmatpush2.msra.mxu0 0.0
    %3053 = vmatprep.subr.mxu0 0.0
    %3054 = vmatpush2.msra.mxu0 0.0
    %3055 = vmatprep.subr.mxu0 0.0
    %3056 = vmatpush2.msra.mxu0 0.0
    %3057 = vmatprep.mubr.f32.mxu0 0.0
    %v3058 = vand.u32 %v1150, 4294901760
    %3059 = vmatmul.mubr.f32.gmra.mxu0 %v3058
    %v3060 = vpop.f32.mrf.mxu0
    %v3061 = vadd.f32 %v2965, %v3060
    %v3062 = vpop.f32.mrf.mxu0
    %v3063 = vadd.f32 %v2967, %v3062
    %3064 = vdwg.mxu0
    %3065 = vmatprep.subr.mxu0 0.0
    %3066 = vmatpush1.msra.mxu0 0.0
    %3067 = vmatprep.subr.mxu0 0.0
    %3068 = vmatpush1.msra.mxu0 0.0
    %3069 = vmatprep.subr.mxu0 0.0
    %3070 = vmatpush1.msra.mxu0 0.0
    %3071 = vmatprep.subr.mxu0 0.0
    %3072 = vmatpush1.msra.mxu0 0.0
    %3073 = vmatprep.subr.mxu0 0.0
    %3074 = vmatpush1.msra.mxu0 0.0
    %3075 = vmatprep.subr.mxu0 0.0
    %3076 = vmatpush1.msra.mxu0 0.0
    %3077 = vmatprep.subr.mxu0 0.0
    %3078 = vmatpush1.msra.mxu0 0.0
    %3079 = vmatprep.subr.mxu0 0.0
    %3080 = vmatpush1.msra.mxu0 0.0
    %3081 = vmatprep.subr.mxu0 0.0
    %3082 = vmatpush1.msra.mxu0 0.0
    %3083 = vmatprep.subr.mxu0 0.0
    %3084 = vmatpush1.msra.mxu0 0.0
    %3085 = vmatprep.subr.mxu0 0.0
    %3086 = vmatpush1.msra.mxu0 0.0
    %3087 = vmatprep.subr.mxu0 0.0
    %3088 = vmatpush1.msra.mxu0 0.0
    %v3089 = vand.u32 %v2601, 4294901760
    %3090 = vmatprep.subr.mxu0 %v3089
    %v3091 = vand.u32 %v2600, 4294901760
    %3092 = vmatpush1.msra.mxu0 %v3091
    %v3093 = vand.u32 %v2599, 4294901760
    %3094 = vmatprep.subr.mxu0 %v3093
    %v3095 = vand.u32 %v2598, 4294901760
    %3096 = vmatpush1.msra.mxu0 %v3095
    %v3097 = vand.u32 %v2597, 4294901760
    %3098 = vmatprep.subr.mxu0 %v3097
    %v3099 = vand.u32 %v2596, 4294901760
    %3100 = vmatpush1.msra.mxu0 %v3099
    %v3101 = vand.u32 %v2595, 4294901760
    %3102 = vmatprep.subr.mxu0 %v3101
    %v3103 = vand.u32 %v2594, 4294901760
    %3104 = vmatpush1.msra.mxu0 %v3103
    %3105 = vmatprep.subr.mxu0 0.0
    %3106 = vmatpush2.msra.mxu0 0.0
    %3107 = vmatprep.subr.mxu0 0.0
    %3108 = vmatpush2.msra.mxu0 0.0
    %3109 = vmatprep.subr.mxu0 0.0
    %3110 = vmatpush2.msra.mxu0 0.0
    %3111 = vmatprep.subr.mxu0 0.0
    %3112 = vmatpush2.msra.mxu0 0.0
    %3113 = vmatprep.subr.mxu0 0.0
    %3114 = vmatpush2.msra.mxu0 0.0
    %3115 = vmatprep.subr.mxu0 0.0
    %3116 = vmatpush2.msra.mxu0 0.0
    %3117 = vmatprep.subr.mxu0 0.0
    %3118 = vmatpush2.msra.mxu0 0.0
    %3119 = vmatprep.subr.mxu0 0.0
    %3120 = vmatpush2.msra.mxu0 0.0
    %3121 = vmatprep.subr.mxu0 0.0
    %3122 = vmatpush2.msra.mxu0 0.0
    %3123 = vmatprep.subr.mxu0 0.0
    %3124 = vmatpush2.msra.mxu0 0.0
    %3125 = vmatprep.subr.mxu0 0.0
    %3126 = vmatpush2.msra.mxu0 0.0
    %3127 = vmatprep.subr.mxu0 0.0
    %3128 = vmatpush2.msra.mxu0 0.0
    %3129 = vmatprep.subr.mxu0 0.0
    %3130 = vmatpush2.msra.mxu0 0.0
    %3131 = vmatprep.subr.mxu0 0.0
    %3132 = vmatpush2.msra.mxu0 0.0
    %3133 = vmatprep.subr.mxu0 0.0
    %3134 = vmatpush2.msra.mxu0 0.0
    %3135 = vmatprep.subr.mxu0 0.0
    %3136 = vmatpush2.msra.mxu0 0.0
    %3137 = vmatprep.mubr.f32.mxu0 0.0
    %v3138 = vand.u32 %v1150, 4294901760
    %3139 = vmatmul.mubr.f32.gmra.mxu0 %v3138
    %v3140 = vpop.f32.mrf.mxu0
    %v3141 = vadd.f32 %v3061, %v3140
    %v3142 = vpop.f32.mrf.mxu0
    %v3143 = vadd.f32 %v3063, %v3142
    %3144 = vdwg.mxu0
    %v3145 = vadd.f32 %v3141, %v1700
    %v3146 = vadd.f32 %v3143, %v1701
    %s3147 = scalar_lea.vmem [#allocation2], 16
    %3148 = vst [vmem:[%s3147] sm:$0xff] %v3145
    %3149 = vst [vmem:[%s3147 + $0x8] sm:$0xff] %v3146
    // Predicated region
    $region14: #{tpu_custom_call.1} parent=1 // pred_check
      _
    $region15: #{tpu_custom_call.1} parent=1 // pred_check_branch
      %3151 = sbr.rel (0) target = $region17
    $region16: #{tpu_custom_call.1} parent=1 // pred_region
      %s3153 = ssub.s32 512, 512
      %3154 = vsyncadd [#allocation3], %s3153
      %s3155 = sshll.u32 [#allocation2], 4
      %s3156 = int_to_ptr.vmem [resolvable:$true] %s3155
      %3161 = dma.vmem_to_hbm [thread:$0]  %s3156, 512, %s3, [#allocation3], 256, 256, 16
    $region17: #{tpu_custom_call.1} parent=1 // pred_fallthru
      _
    // Predicated region
    $region18: #{tpu_custom_call.1} parent=1 // pred_check
      _
    $region19: #{tpu_custom_call.1} parent=1 // pred_check_branch
      %3163 = sbr.rel (0) target = $region21
    $region20: #{tpu_custom_call.1} parent=1 // pred_region
      %3164 = dma.done [#allocation3], 512
    $region21: #{tpu_custom_call.1} parent=1 // pred_fallthru
      _
    %3165 = vsyncpa [#allocation3], 1

</llo_original>
